<compile_context>
chip_gen: v7x
topology: tpu7x:2x2x1
jax: 0.10.0
libtpu: 0.0.40
codegen_flags: <defaults>
</compile_context>

<pallas_src>
import jax
import jax.numpy as jnp
from jax.experimental import pallas as pl
from jax.experimental.pallas import tpu as pltpu

# Logical (PyTorch) dims.
IN_DIM = 28 * 28   # 784 (already a multiple of 8; used unpadded as the K dim)
H1 = 1000
H2 = 300
OUT_DIM = 10

# Lane-padded dims (multiples of 128).
H1_P = 1024
H2_P = 384
OUT_P = 128


def _round_up(n, m):
    return ((n + m - 1) // m) * m


def _pad2(a, rows, cols):
    r, c = a.shape
    return jnp.pad(a, ((0, rows - r), (0, cols - c)))


def _mlp_kernel(x_ref, w1_ref, b1_ref, w2_ref, b2_ref, w3_ref, b3_ref, o_ref):
    # Cast activations to bf16 in-kernel (native MXU dtype), accumulate in f32.
    x = x_ref[...].astype(jnp.bfloat16)
    # Lin1 + ReLU
    h1 = jnp.dot(x, w1_ref[...], preferred_element_type=jnp.float32)
    h1 = jnp.maximum(h1 + b1_ref[...], 0.0).astype(jnp.bfloat16)
    # Lin2 + ReLU
    h2 = jnp.dot(h1, w2_ref[...], preferred_element_type=jnp.float32)
    h2 = jnp.maximum(h2 + b2_ref[...], 0.0).astype(jnp.bfloat16)
    # Lin3 (logits, no activation)
    out = jnp.dot(h2, w3_ref[...], preferred_element_type=jnp.float32)
    o_ref[...] = (out + b3_ref[...]).astype(o_ref.dtype)


def _choose_tile(B, batch_tile):
    """Pick a batch tile (multiple of 16) and the padded batch size."""
    batch_tile = max(16, _round_up(batch_tile, 16))
    b16 = _round_up(B, 16)
    if b16 <= 256:
        # Tiny batch: one grid step, never pad up to the big tile.
        tile = b16
    else:
        # Big batch: amortize per-step overhead with a large tile, but keep
        # >= 2 grid steps so the "parallel" batch axis can shard across v7x TCs.
        half = _round_up(b16 // 2, 16)
        tile = min(batch_tile, half)
    b_pad = _round_up(B, tile)
    return tile, b_pad


def prepare_params(w1, b1, w2, b2, w3, b3):
    """One-time padding + bf16 cast of the weights (hoisted out of the forward)."""
    bf = jnp.bfloat16
    w1p = _pad2(w1, IN_DIM, H1_P).astype(bf)   # (784, 1024)
    w2p = _pad2(w2, H1_P, H2_P).astype(bf)     # (1024, 384)
    w3p = _pad2(w3, H2_P, OUT_P).astype(bf)    # (384, 128)
    b1p = _pad2(b1, 1, H1_P).astype(jnp.float32)
    b2p = _pad2(b2, 1, H2_P).astype(jnp.float32)
    b3p = _pad2(b3, 1, OUT_P).astype(jnp.float32)
    return w1p, b1p, w2p, b2p, w3p, b3p


def mnist_mlp_forward(x, prepared, *, batch_tile=512):
    """x: (B, 784) f32. prepared: output of prepare_params. Returns (B, 10) f32."""
    w1p, b1p, w2p, b2p, w3p, b3p = prepared
    B = x.shape[0]
    tile, b_pad = _choose_tile(B, batch_tile)
    if b_pad != B:
        # Only the (small) batch remainder is padded; feature dim stays at 784.
        x = jnp.pad(x, ((0, b_pad - B), (0, 0)))

    out = pl.pallas_call(
        _mlp_kernel,
        out_shape=jax.ShapeDtypeStruct((b_pad, OUT_P), jnp.float32),
        grid_spec=pltpu.PrefetchScalarGridSpec(
            num_scalar_prefetch=0,
            grid=(b_pad // tile,),
            in_specs=[
                pl.BlockSpec((tile, IN_DIM), lambda i: (i, 0)),   # x tile (f32, cast in-kernel)
                pl.BlockSpec((IN_DIM, H1_P), lambda i: (0, 0)),   # W1^T (bf16)
                pl.BlockSpec((1, H1_P), lambda i: (0, 0)),        # b1   (f32)
                pl.BlockSpec((H1_P, H2_P), lambda i: (0, 0)),     # W2^T (bf16)
                pl.BlockSpec((1, H2_P), lambda i: (0, 0)),        # b2   (f32)
                pl.BlockSpec((H2_P, OUT_P), lambda i: (0, 0)),    # W3^T (bf16)
                pl.BlockSpec((1, OUT_P), lambda i: (0, 0)),       # b3   (f32)
            ],
            out_specs=pl.BlockSpec((tile, OUT_P), lambda i: (i, 0)),
        ),
        compiler_params=pltpu.CompilerParams(
            dimension_semantics=("parallel",),   # batch axis -> both TCs on v7x
            vmem_limit_bytes=40 << 20,           # plenty on v5e/v6e/v7x at tile<=1024
        ),
    )(x, w1p, b1p, w2p, b2p, w3p, b3p)

    return out[:B, :OUT_DIM]


def init_params(key):
    """Deterministic init mimicking PyTorch Linear default (U[-1/sqrt(fan_in), +])."""
    ks = jax.random.split(key, 6)

    def linear(kw, kb, fan_in, fan_out):
        bound = 1.0 / jnp.sqrt(jnp.float32(fan_in))
        # Stored pre-transposed: (fan_in, fan_out) so the kernel does x @ W.
        w = jax.random.uniform(kw, (fan_in, fan_out), jnp.float32, -bound, bound)
        b = jax.random.uniform(kb, (1, fan_out), jnp.float32, -bound, bound)
        return w, b

    w1, b1 = linear(ks[0], ks[1], IN_DIM, H1)
    w2, b2 = linear(ks[2], ks[3], H1, H2)
    w3, b3 = linear(ks[4], ks[5], H2, OUT_DIM)
    return w1, b1, w2, b2, w3, b3


def reference_forward(x, w1, b1, w2, b2, w3, b3):
    """Reference with the same bf16 operand quantization / f32 accumulation as the kernel."""
    bf = jnp.bfloat16
    h = jnp.dot(x.astype(bf), w1.astype(bf), preferred_element_type=jnp.float32) + b1
    h = jnp.maximum(h, 0.0)
    h = jnp.dot(h.astype(bf), w2.astype(bf), preferred_element_type=jnp.float32) + b2
    h = jnp.maximum(h, 0.0)
    return jnp.dot(h.astype(bf), w3.astype(bf), preferred_element_type=jnp.float32) + b3


if __name__ == "__main__":
    key = jax.random.PRNGKey(0)
    k_x, k_p = jax.random.split(key)
    params = init_params(k_p)
    prepared = prepare_params(*params)   # pad + bf16-cast weights exactly once

    # Small batch of flattened 28x28 "MNIST" images (single-tile path).
    B = 4
    x = jax.random.normal(k_x, (B, IN_DIM), jnp.float32)
    out = jax.block_until_ready(mnist_mlp_forward(x, prepared))
    ref = reference_forward(x, *params)
    assert out.shape == (B, OUT_DIM)
    assert jnp.allclose(out, ref, atol=2e-2, rtol=2e-2), "mismatch vs reference (small batch)"

    # Larger, ragged batch: exercises the 2-step (megacore-parallel) grid path
    # with batch padding (B=600 -> tile=304, b_pad=608, grid=2).
    B2 = 600
    x2 = jax.random.normal(k_x, (B2, IN_DIM), jnp.float32)
    out2 = jax.block_until_ready(mnist_mlp_forward(x2, prepared, batch_tile=512))
    ref2 = reference_forward(x2, *params)
    assert out2.shape == (B2, OUT_DIM)
    assert jnp.allclose(out2, ref2, atol=2e-2, rtol=2e-2), "mismatch vs reference (tiled batch)"

    print("KERNEL_OK")
</pallas_src>

<mosaic_0001>
module attributes {stable_mosaic.version = 11 : i64} {
  func.func @_mlp_kernel(%arg0: i32, %arg1: memref<16x784xf32, #tpu.memory_space<vmem>>, %arg2: memref<784x1024xbf16, #tpu.memory_space<vmem>>, %arg3: memref<1x1024xf32, #tpu.memory_space<vmem>>, %arg4: memref<1024x384xbf16, #tpu.memory_space<vmem>>, %arg5: memref<1x384xf32, #tpu.memory_space<vmem>>, %arg6: memref<384x128xbf16, #tpu.memory_space<vmem>>, %arg7: memref<1x128xf32, #tpu.memory_space<vmem>>, %arg8: memref<16x128xf32, #tpu.memory_space<vmem>>) attributes {dimension_semantics = [#tpu.dimension_semantics<parallel>], iteration_bounds = array<i64: 1>, scalar_prefetch = 0 : i64, scratch_operands = 0 : i64, tpu.core_type = #tpu.core_type<tc>, window_params = [{transform_indices = @transform_0, window_bounds = array<i64: 16, 784>}, {pipeline_mode = #tpu.pipeline_mode<synchronous>, transform_indices = @transform_1, window_bounds = array<i64: 784, 1024>}, {pipeline_mode = #tpu.pipeline_mode<synchronous>, transform_indices = @transform_2, window_bounds = array<i64: 1, 1024>}, {pipeline_mode = #tpu.pipeline_mode<synchronous>, transform_indices = @transform_3, window_bounds = array<i64: 1024, 384>}, {pipeline_mode = #tpu.pipeline_mode<synchronous>, transform_indices = @transform_4, window_bounds = array<i64: 1, 384>}, {pipeline_mode = #tpu.pipeline_mode<synchronous>, transform_indices = @transform_5, window_bounds = array<i64: 384, 128>}, {pipeline_mode = #tpu.pipeline_mode<synchronous>, transform_indices = @transform_6, window_bounds = array<i64: 1, 128>}, {transform_indices = @transform_7, window_bounds = array<i64: 16, 128>}]} {
    %c0 = arith.constant 0 : index
    %c0_0 = arith.constant 0 : index
    %0 = vector.load %arg1[%c0, %c0_0] : memref<16x784xf32, #tpu.memory_space<vmem>>, vector<16x784xf32>
    %1 = arith.truncf %0 : vector<16x784xf32> to vector<16x784xbf16>
    %c0_1 = arith.constant 0 : index
    %c0_2 = arith.constant 0 : index
    %2 = vector.load %arg2[%c0_1, %c0_2] : memref<784x1024xbf16, #tpu.memory_space<vmem>>, vector<784x1024xbf16>
    %cst = arith.constant dense<0.000000e+00> : vector<16x1024xf32>
    %3 = tpu.matmul %1, %2, %cst {dimension_numbers = #tpu.dot_dimension_numbers<[1], [0], [0], [1], [0, 0, 1, 1], [], []>} : vector<16x784xbf16>, vector<784x1024xbf16>, vector<16x1024xf32> -> vector<16x1024xf32>
    %c0_3 = arith.constant 0 : index
    %c0_4 = arith.constant 0 : index
    %4 = vector.load %arg3[%c0_3, %c0_4] : memref<1x1024xf32, #tpu.memory_space<vmem>>, vector<1x1024xf32>
    %5 = vector.broadcast %4 : vector<1x1024xf32> to vector<16x1024xf32>
    %6 = arith.addf %3, %5 : vector<16x1024xf32>
    %cst_5 = arith.constant 0.000000e+00 : f32
    %7 = vector.broadcast %cst_5 : f32 to vector<16x1024xf32>
    %8 = arith.maximumf %6, %7 : vector<16x1024xf32>
    %9 = arith.truncf %8 : vector<16x1024xf32> to vector<16x1024xbf16>
    %c0_6 = arith.constant 0 : index
    %c0_7 = arith.constant 0 : index
    %10 = vector.load %arg4[%c0_6, %c0_7] : memref<1024x384xbf16, #tpu.memory_space<vmem>>, vector<1024x384xbf16>
    %cst_8 = arith.constant dense<0.000000e+00> : vector<16x384xf32>
    %11 = tpu.matmul %9, %10, %cst_8 {dimension_numbers = #tpu.dot_dimension_numbers<[1], [0], [0], [1], [0, 0, 1, 1], [], []>} : vector<16x1024xbf16>, vector<1024x384xbf16>, vector<16x384xf32> -> vector<16x384xf32>
    %c0_9 = arith.constant 0 : index
    %c0_10 = arith.constant 0 : index
    %12 = vector.load %arg5[%c0_9, %c0_10] : memref<1x384xf32, #tpu.memory_space<vmem>>, vector<1x384xf32>
    %13 = vector.broadcast %12 : vector<1x384xf32> to vector<16x384xf32>
    %14 = arith.addf %11, %13 : vector<16x384xf32>
    %cst_11 = arith.constant 0.000000e+00 : f32
    %15 = vector.broadcast %cst_11 : f32 to vector<16x384xf32>
    %16 = arith.maximumf %14, %15 : vector<16x384xf32>
    %17 = arith.truncf %16 : vector<16x384xf32> to vector<16x384xbf16>
    %c0_12 = arith.constant 0 : index
    %c0_13 = arith.constant 0 : index
    %18 = vector.load %arg6[%c0_12, %c0_13] : memref<384x128xbf16, #tpu.memory_space<vmem>>, vector<384x128xbf16>
    %cst_14 = arith.constant dense<0.000000e+00> : vector<16x128xf32>
    %19 = tpu.matmul %17, %18, %cst_14 {dimension_numbers = #tpu.dot_dimension_numbers<[1], [0], [0], [1], [0, 0, 1, 1], [], []>} : vector<16x384xbf16>, vector<384x128xbf16>, vector<16x128xf32> -> vector<16x128xf32>
    %c0_15 = arith.constant 0 : index
    %c0_16 = arith.constant 0 : index
    %20 = vector.load %arg7[%c0_15, %c0_16] : memref<1x128xf32, #tpu.memory_space<vmem>>, vector<1x128xf32>
    %21 = vector.broadcast %20 : vector<1x128xf32> to vector<16x128xf32>
    %22 = arith.addf %19, %21 : vector<16x128xf32>
    %c0_17 = arith.constant 0 : index
    %c0_18 = arith.constant 0 : index
    %23 = vector.load %arg8[%c0_17, %c0_18] : memref<16x128xf32, #tpu.memory_space<vmem>>, vector<16x128xf32>
    tpu.vector_store %arg8[%c0_17, %c0_18], %22 {strides = array<i32>} : memref<16x128xf32, #tpu.memory_space<vmem>>, vector<16x128xf32>,
    return
  }
  func.func @transform_0(%arg0: i32) -> (i32, i32) {
    %c0_i32 = arith.constant 0 : i32
    %c0_i32_0 = arith.constant 0 : i32
    return %arg0, %c0_i32 : i32, i32
  }
  func.func @transform_1(%arg0: i32) -> (i32, i32) {
    %c0_i32 = arith.constant 0 : i32
    %c0_i32_0 = arith.constant 0 : i32
    %c0_i32_1 = arith.constant 0 : i32
    return %c0_i32, %c0_i32_0 : i32, i32
  }
  func.func @transform_2(%arg0: i32) -> (i32, i32) {
    %c0_i32 = arith.constant 0 : i32
    %c0_i32_0 = arith.constant 0 : i32
    %c0_i32_1 = arith.constant 0 : i32
    return %c0_i32, %c0_i32_0 : i32, i32
  }
  func.func @transform_3(%arg0: i32) -> (i32, i32) {
    %c0_i32 = arith.constant 0 : i32
    %c0_i32_0 = arith.constant 0 : i32
    %c0_i32_1 = arith.constant 0 : i32
    return %c0_i32, %c0_i32_0 : i32, i32
  }
  func.func @transform_4(%arg0: i32) -> (i32, i32) {
    %c0_i32 = arith.constant 0 : i32
    %c0_i32_0 = arith.constant 0 : i32
    %c0_i32_1 = arith.constant 0 : i32
    return %c0_i32, %c0_i32_0 : i32, i32
  }
  func.func @transform_5(%arg0: i32) -> (i32, i32) {
    %c0_i32 = arith.constant 0 : i32
    %c0_i32_0 = arith.constant 0 : i32
    %c0_i32_1 = arith.constant 0 : i32
    return %c0_i32, %c0_i32_0 : i32, i32
  }
  func.func @transform_6(%arg0: i32) -> (i32, i32) {
    %c0_i32 = arith.constant 0 : i32
    %c0_i32_0 = arith.constant 0 : i32
    %c0_i32_1 = arith.constant 0 : i32
    return %c0_i32, %c0_i32_0 : i32, i32
  }
  func.func @transform_7(%arg0: i32) -> (i32, i32) {
    %c0_i32 = arith.constant 0 : i32
    %c0_i32_0 = arith.constant 0 : i32
    return %arg0, %c0_i32 : i32, i32
  }
}

</mosaic_0001>

<llo_original>
// kernel: tpu_custom_call.1
$region0: #{tpu_custom_call.1}
  #allocation0 [shape = 'u32[]', space=smem, size = 0x4, offset = 0x4, fixed_abs, tag = 'smem constant byte address 0x4 - core index']
  #allocation1 [shape = 'u32[144,128]{1,0:T(1,128)}', space=vmem, size = 0x12000, scoped, tag = 'internal scratch']
  %s0 = inlined_call_operand.hbm [shape: f32[16,784], index: 0, kind: input, shape index: {}]
  %s1 = inlined_call_operand.hbm [shape: bf16[784,1024], index: 1, kind: input, shape index: {}]
  %s2 = inlined_call_operand.hbm [shape: f32[1,1024], index: 2, kind: input, shape index: {}]
  %s3 = inlined_call_operand.hbm [shape: bf16[1024,384], index: 3, kind: input, shape index: {}]
  %s4 = inlined_call_operand.hbm [shape: f32[1,384], index: 4, kind: input, shape index: {}]
  %s5 = inlined_call_operand.hbm [shape: bf16[384,128], index: 5, kind: input, shape index: {}]
  %s6 = inlined_call_operand.hbm [shape: f32[1,128], index: 6, kind: input, shape index: {}]
  %s7 = inlined_call_operand.hbm [shape: f32[16,128], index: 7, kind: output, shape index: {}]
  %s8 = sld [smem:[#allocation0]]
  $region66: #{tpu_custom_call.1} parent=0
    _
  %s10 = ssub.s32 1, %s8
  %s11 = scalar_select 0, %s10, %s8
  $region1: #{tpu_custom_call.1} parent=0
    #allocation2 [shape = 'u8[57344]{0}', space=vmem, size = 0xe000, scoped, tag = 'input window, operand 0, single buffered']
    #allocation3 [shape = 's32[1]{0}', space=sflag, size = 0x4, scoped, tag = 'scoped memory for tpu_custom_call.1']
    #allocation4 [shape = 's32[1]{0}', space=sflag, size = 0x4, scoped, tag = 'scoped memory for tpu_custom_call.1']
    #allocation5 [shape = 'u8[1605632]{0}', space=vmem, size = 0x188000, scoped, tag = 'input window, operand 1, single buffered']
    #allocation6 [shape = 's32[1]{0}', space=sflag, size = 0x4, scoped, tag = 'scoped memory for tpu_custom_call.1']
    #allocation7 [shape = 'u8[4096]{0}', space=vmem, size = 0x1000, scoped, tag = 'input window, operand 2, single buffered']
    #allocation8 [shape = 'u8[786432]{0}', space=vmem, size = 0xc0000, scoped, tag = 'input window, operand 3, single buffered']
    #allocation9 [shape = 's32[1]{0}', space=sflag, size = 0x4, scoped, tag = 'scoped memory for tpu_custom_call.1']
    #allocation10 [shape = 'u8[1536]{0}', space=vmem, size = 0x800, scoped, tag = 'input window, operand 4, single buffered']
    #allocation11 [shape = 'u8[98304]{0}', space=vmem, size = 0x18000, scoped, tag = 'input window, operand 5, single buffered']
    #allocation12 [shape = 's32[1]{0}', space=sflag, size = 0x4, scoped, tag = 'scoped memory for tpu_custom_call.1']
    #allocation13 [shape = 'u8[512]{0}', space=vmem, size = 0x400, scoped, tag = 'input window, operand 6, single buffered']
    #allocation14 [shape = 'u8[8192]{0}', space=vmem, size = 0x2000, scoped, tag = 'output window, operand 0, single buffered']
    %12 = vsyncpa [#allocation3], 0
    %13 = vsyncpa [#allocation6], 0
    %14 = vsyncpa [#allocation9], 0
    %15 = vsyncpa [#allocation12], 0
    %16 = vsyncpa [#allocation4], 0
    // Predicated region
    $region2: #{tpu_custom_call.1} parent=1 // pred_check
      _
    $region3: #{tpu_custom_call.1} parent=1 // pred_check_branch
      %18 = sbr.rel (0) target = $region5
    $region4: #{tpu_custom_call.1} parent=1 // pred_region
      %s20 = ssub.s32 1792, 1792
      %21 = vsyncadd [#allocation3], %s20
      %s22 = sshll.u32 [#allocation2], 4
      %s23 = int_to_ptr.vmem [resolvable:$true] %s22
      %28 = dma.hbm_to_vmem [thread:$0]  %s0, 1792, %s23, [#allocation3], 896, 896, 56
    $region5: #{tpu_custom_call.1} parent=1 // pred_fallthru
      _
    // Predicated region
    $region6: #{tpu_custom_call.1} parent=1 // pred_check
      _
    $region7: #{tpu_custom_call.1} parent=1 // pred_check_branch
      %30 = sbr.rel (0) target = $region9
    $region8: #{tpu_custom_call.1} parent=1 // pred_region
      %s32 = ssub.s32 50176, 50176
      %33 = vsyncadd [#allocation6], %s32
      %s34 = sshll.u32 [#allocation5], 4
      %s35 = int_to_ptr.vmem [resolvable:$true] %s34
      %40 = dma.hbm_to_vmem [thread:$0]  %s1, 50176, %s35, [#allocation6], 512, 512, 32
    $region9: #{tpu_custom_call.1} parent=1 // pred_fallthru
      _
    // Predicated region
    $region10: #{tpu_custom_call.1} parent=1 // pred_check
      _
    $region11: #{tpu_custom_call.1} parent=1 // pred_check_branch
      %42 = sbr.rel (0) target = $region13
    $region12: #{tpu_custom_call.1} parent=1 // pred_region
      %s44 = ssub.s32 128, 128
      %45 = vsyncadd [#allocation6], %s44
      %s47 = sshll.u32 [#allocation7], 4
      %s48 = int_to_ptr.vmem [resolvable:$true] %s47
      %50 = dma.hbm_to_vmem [thread:$0]  %s2, 128, %s48, [#allocation6]
    $region13: #{tpu_custom_call.1} parent=1 // pred_fallthru
      _
    // Predicated region
    $region14: #{tpu_custom_call.1} parent=1 // pred_check
      _
    $region15: #{tpu_custom_call.1} parent=1 // pred_check_branch
      %52 = sbr.rel (0) target = $region17
    $region16: #{tpu_custom_call.1} parent=1 // pred_region
      %s54 = ssub.s32 24576, 24576
      %55 = vsyncadd [#allocation9], %s54
      %s56 = sshll.u32 [#allocation8], 4
      %s57 = int_to_ptr.vmem [resolvable:$true] %s56
      %62 = dma.hbm_to_vmem [thread:$0]  %s3, 24576, %s57, [#allocation9], 192, 192, 12
    $region17: #{tpu_custom_call.1} parent=1 // pred_fallthru
      _
    // Predicated region
    $region18: #{tpu_custom_call.1} parent=1 // pred_check
      _
    $region19: #{tpu_custom_call.1} parent=1 // pred_check_branch
      %64 = sbr.rel (0) target = $region21
    $region20: #{tpu_custom_call.1} parent=1 // pred_region
      %s66 = ssub.s32 48, 48
      %67 = vsyncadd [#allocation9], %s66
      %s69 = sshll.u32 [#allocation10], 4
      %s70 = int_to_ptr.vmem [resolvable:$true] %s69
      %72 = dma.hbm_to_vmem [thread:$0]  %s4, 48, %s70, [#allocation9]
    $region21: #{tpu_custom_call.1} parent=1 // pred_fallthru
      _
    // Predicated region
    $region22: #{tpu_custom_call.1} parent=1 // pred_check
      _
    $region23: #{tpu_custom_call.1} parent=1 // pred_check_branch
      %74 = sbr.rel (0) target = $region25
    $region24: #{tpu_custom_call.1} parent=1 // pred_region
      %s76 = ssub.s32 3072, 3072
      %77 = vsyncadd [#allocation12], %s76
      %s78 = sshll.u32 [#allocation11], 4
      %s79 = int_to_ptr.vmem [resolvable:$true] %s78
      %84 = dma.hbm_to_vmem [thread:$0]  %s5, 3072, %s79, [#allocation12], 64, 64, 4
    $region25: #{tpu_custom_call.1} parent=1 // pred_fallthru
      _
    // Predicated region
    $region26: #{tpu_custom_call.1} parent=1 // pred_check
      _
    $region27: #{tpu_custom_call.1} parent=1 // pred_check_branch
      %86 = sbr.rel (0) target = $region29
    $region28: #{tpu_custom_call.1} parent=1 // pred_region
      %s88 = ssub.s32 16, 16
      %89 = vsyncadd [#allocation12], %s88
      %s91 = sshll.u32 [#allocation13], 4
      %s92 = int_to_ptr.vmem [resolvable:$true] %s91
      %94 = dma.hbm_to_vmem [thread:$0]  %s6, 16, %s92, [#allocation12]
    $region29: #{tpu_custom_call.1} parent=1 // pred_fallthru
      _
    // Predicated region
    $region30: #{tpu_custom_call.1} parent=1 // pred_check
      _
    $region31: #{tpu_custom_call.1} parent=1 // pred_check_branch
      %96 = sbr.rel (0) target = $region33
    $region32: #{tpu_custom_call.1} parent=1 // pred_region
      %97 = dma.done [#allocation3], 1792
    $region33: #{tpu_custom_call.1} parent=1 // pred_fallthru
      _
    // Predicated region
    $region34: #{tpu_custom_call.1} parent=1 // pred_check
      _
    $region35: #{tpu_custom_call.1} parent=1 // pred_check_branch
      %99 = sbr.rel (0) target = $region37
    $region36: #{tpu_custom_call.1} parent=1 // pred_region
      %100 = dma.done [#allocation6], 50176
    $region37: #{tpu_custom_call.1} parent=1 // pred_fallthru
      _
    // Predicated region
    $region38: #{tpu_custom_call.1} parent=1 // pred_check
      _
    $region39: #{tpu_custom_call.1} parent=1 // pred_check_branch
      %102 = sbr.rel (0) target = $region41
    $region40: #{tpu_custom_call.1} parent=1 // pred_region
      %103 = dma.done [#allocation6], 128
    $region41: #{tpu_custom_call.1} parent=1 // pred_fallthru
      _
    // Predicated region
    $region42: #{tpu_custom_call.1} parent=1 // pred_check
      _
    $region43: #{tpu_custom_call.1} parent=1 // pred_check_branch
      %105 = sbr.rel (0) target = $region45
    $region44: #{tpu_custom_call.1} parent=1 // pred_region
      %106 = dma.done [#allocation9], 24576
    $region45: #{tpu_custom_call.1} parent=1 // pred_fallthru
      _
    // Predicated region
    $region46: #{tpu_custom_call.1} parent=1 // pred_check
      _
    $region47: #{tpu_custom_call.1} parent=1 // pred_check_branch
      %108 = sbr.rel (0) target = $region49
    $region48: #{tpu_custom_call.1} parent=1 // pred_region
      %109 = dma.done [#allocation9], 48
    $region49: #{tpu_custom_call.1} parent=1 // pred_fallthru
      _
    // Predicated region
    $region50: #{tpu_custom_call.1} parent=1 // pred_check
      _
    $region51: #{tpu_custom_call.1} parent=1 // pred_check_branch
      %111 = sbr.rel (0) target = $region53
    $region52: #{tpu_custom_call.1} parent=1 // pred_region
      %112 = dma.done [#allocation12], 3072
    $region53: #{tpu_custom_call.1} parent=1 // pred_fallthru
      _
    // Predicated region
    $region54: #{tpu_custom_call.1} parent=1 // pred_check
      _
    $region55: #{tpu_custom_call.1} parent=1 // pred_check_branch
      %114 = sbr.rel (0) target = $region57
    $region56: #{tpu_custom_call.1} parent=1 // pred_region
      %115 = dma.done [#allocation12], 16
    $region57: #{tpu_custom_call.1} parent=1 // pred_fallthru
      _
    %v117 = vld [vmem:[#allocation2] sm:$0xff]
    %v118 = vld [vmem:[#allocation2 + $0x8] sm:$0xff]
    %v119 = vld [vmem:[#allocation2 + $0x10] sm:$0xff]
    %v120 = vld [vmem:[#allocation2 + $0x18] sm:$0xff]
    %v121 = vld [vmem:[#allocation2 + $0x20] sm:$0xff]
    %v122 = vld [vmem:[#allocation2 + $0x28] sm:$0xff]
    %v123 = vld [vmem:[#allocation2 + $0x30] sm:$0xff]
    %v124 = vld [vmem:[#allocation2 + $0x38] sm:$0xff]
    %v125 = vld [vmem:[#allocation2 + $0x40] sm:$0xff]
    %v126 = vld [vmem:[#allocation2 + $0x48] sm:$0xff]
    %v127 = vld [vmem:[#allocation2 + $0x50] sm:$0xff]
    %v128 = vld [vmem:[#allocation2 + $0x58] sm:$0xff]
    %v129 = vld [vmem:[#allocation2 + $0x60] sm:$0xff]
    %v130 = vld [vmem:[#allocation2 + $0x68] sm:$0xff]
    %v131 = vpack.c.bf16 %v124, %v117
    %v132 = vpack.c.bf16 %v125, %v118
    %v133 = vpack.c.bf16 %v126, %v119
    %v134 = vpack.c.bf16 %v127, %v120
    %v135 = vpack.c.bf16 %v128, %v121
    %v136 = vpack.c.bf16 %v129, %v122
    %v137 = vpack.c.bf16 %v130, %v123
    %v138 = vld [vmem:[#allocation5] sm:$0xff]
    %v139 = vld [vmem:[#allocation5 + $0x8] sm:$0xff]
    %v140 = vld [vmem:[#allocation5 + $0x10] sm:$0xff]
    %v141 = vld [vmem:[#allocation5 + $0x18] sm:$0xff]
    %v142 = vld [vmem:[#allocation5 + $0x20] sm:$0xff]
    %v143 = vld [vmem:[#allocation5 + $0x28] sm:$0xff]
    %v144 = vld [vmem:[#allocation5 + $0x30] sm:$0xff]
    %v145 = vld [vmem:[#allocation5 + $0x38] sm:$0xff]
    %v146 = vld [vmem:[#allocation5 + $0x40] sm:$0xff]
    %v147 = vld [vmem:[#allocation5 + $0x48] sm:$0xff]
    %v148 = vld [vmem:[#allocation5 + $0x50] sm:$0xff]
    %v149 = vld [vmem:[#allocation5 + $0x58] sm:$0xff]
    %v150 = vld [vmem:[#allocation5 + $0x60] sm:$0xff]
    %v151 = vld [vmem:[#allocation5 + $0x68] sm:$0xff]
    %v152 = vld [vmem:[#allocation5 + $0x70] sm:$0xff]
    %v153 = vld [vmem:[#allocation5 + $0x78] sm:$0xff]
    %v154 = vld [vmem:[#allocation5 + $0x80] sm:$0xff]
    %v155 = vld [vmem:[#allocation5 + $0x88] sm:$0xff]
    %v156 = vld [vmem:[#allocation5 + $0x90] sm:$0xff]
    %v157 = vld [vmem:[#allocation5 + $0x98] sm:$0xff]
    %v158 = vld [vmem:[#allocation5 + $0xa0] sm:$0xff]
    %v159 = vld [vmem:[#allocation5 + $0xa8] sm:$0xff]
    %v160 = vld [vmem:[#allocation5 + $0xb0] sm:$0xff]
    %v161 = vld [vmem:[#allocation5 + $0xb8] sm:$0xff]
    %v162 = vld [vmem:[#allocation5 + $0xc0] sm:$0xff]
    %v163 = vld [vmem:[#allocation5 + $0xc8] sm:$0xff]
    %v164 = vld [vmem:[#allocation5 + $0xd0] sm:$0xff]
    %v165 = vld [vmem:[#allocation5 + $0xd8] sm:$0xff]
    %v166 = vld [vmem:[#allocation5 + $0xe0] sm:$0xff]
    %v167 = vld [vmem:[#allocation5 + $0xe8] sm:$0xff]
    %v168 = vld [vmem:[#allocation5 + $0xf0] sm:$0xff]
    %v169 = vld [vmem:[#allocation5 + $0xf8] sm:$0xff]
    %v170 = vld [vmem:[#allocation5 + $0x100] sm:$0xff]
    %v171 = vld [vmem:[#allocation5 + $0x108] sm:$0xff]
    %v172 = vld [vmem:[#allocation5 + $0x110] sm:$0xff]
    %v173 = vld [vmem:[#allocation5 + $0x118] sm:$0xff]
    %v174 = vld [vmem:[#allocation5 + $0x120] sm:$0xff]
    %v175 = vld [vmem:[#allocation5 + $0x128] sm:$0xff]
    %v176 = vld [vmem:[#allocation5 + $0x130] sm:$0xff]
    %v177 = vld [vmem:[#allocation5 + $0x138] sm:$0xff]
    %v178 = vld [vmem:[#allocation5 + $0x140] sm:$0xff]
    %v179 = vld [vmem:[#allocation5 + $0x148] sm:$0xff]
    %v180 = vld [vmem:[#allocation5 + $0x150] sm:$0xff]
    %v181 = vld [vmem:[#allocation5 + $0x158] sm:$0xff]
    %v182 = vld [vmem:[#allocation5 + $0x160] sm:$0xff]
    %v183 = vld [vmem:[#allocation5 + $0x168] sm:$0xff]
    %v184 = vld [vmem:[#allocation5 + $0x170] sm:$0xff]
    %v185 = vld [vmem:[#allocation5 + $0x178] sm:$0xff]
    %v186 = vld [vmem:[#allocation5 + $0x180] sm:$0xff]
    %v187 = vld [vmem:[#allocation5 + $0x188] sm:$0xff]
    %v188 = vld [vmem:[#allocation5 + $0x190] sm:$0xff]
    %v189 = vld [vmem:[#allocation5 + $0x198] sm:$0xff]
    %v190 = vld [vmem:[#allocation5 + $0x1a0] sm:$0xff]
    %v191 = vld [vmem:[#allocation5 + $0x1a8] sm:$0xff]
    %v192 = vld [vmem:[#allocation5 + $0x1b0] sm:$0xff]
    %v193 = vld [vmem:[#allocation5 + $0x1b8] sm:$0xff]
    %v194 = vld [vmem:[#allocation5 + $0x1c0] sm:$0xff]
    %v195 = vld [vmem:[#allocation5 + $0x1c8] sm:$0xff]
    %v196 = vld [vmem:[#allocation5 + $0x1d0] sm:$0xff]
    %v197 = vld [vmem:[#allocation5 + $0x1d8] sm:$0xff]
    %v198 = vld [vmem:[#allocation5 + $0x1e0] sm:$0xff]
    %v199 = vld [vmem:[#allocation5 + $0x1e8] sm:$0xff]
    %v200 = vld [vmem:[#allocation5 + $0x1f0] sm:$0xff]
    %v201 = vld [vmem:[#allocation5 + $0x1f8] sm:$0xff]
    %v202 = vld [vmem:[#allocation5 + $0x200] sm:$0xff]
    %v203 = vld [vmem:[#allocation5 + $0x208] sm:$0xff]
    %v204 = vld [vmem:[#allocation5 + $0x210] sm:$0xff]
    %v205 = vld [vmem:[#allocation5 + $0x218] sm:$0xff]
    %v206 = vld [vmem:[#allocation5 + $0x220] sm:$0xff]
    %v207 = vld [vmem:[#allocation5 + $0x228] sm:$0xff]
    %v208 = vld [vmem:[#allocation5 + $0x230] sm:$0xff]
    %v209 = vld [vmem:[#allocation5 + $0x238] sm:$0xff]
    %v210 = vld [vmem:[#allocation5 + $0x240] sm:$0xff]
    %v211 = vld [vmem:[#allocation5 + $0x248] sm:$0xff]
    %v212 = vld [vmem:[#allocation5 + $0x250] sm:$0xff]
    %v213 = vld [vmem:[#allocation5 + $0x258] sm:$0xff]
    %v214 = vld [vmem:[#allocation5 + $0x260] sm:$0xff]
    %v215 = vld [vmem:[#allocation5 + $0x268] sm:$0xff]
    %v216 = vld [vmem:[#allocation5 + $0x270] sm:$0xff]
    %v217 = vld [vmem:[#allocation5 + $0x278] sm:$0xff]
    %v218 = vld [vmem:[#allocation5 + $0x280] sm:$0xff]
    %v219 = vld [vmem:[#allocation5 + $0x288] sm:$0xff]
    %v220 = vld [vmem:[#allocation5 + $0x290] sm:$0xff]
    %v221 = vld [vmem:[#allocation5 + $0x298] sm:$0xff]
    %v222 = vld [vmem:[#allocation5 + $0x2a0] sm:$0xff]
    %v223 = vld [vmem:[#allocation5 + $0x2a8] sm:$0xff]
    %v224 = vld [vmem:[#allocation5 + $0x2b0] sm:$0xff]
    %v225 = vld [vmem:[#allocation5 + $0x2b8] sm:$0xff]
    %v226 = vld [vmem:[#allocation5 + $0x2c0] sm:$0xff]
    %v227 = vld [vmem:[#allocation5 + $0x2c8] sm:$0xff]
    %v228 = vld [vmem:[#allocation5 + $0x2d0] sm:$0xff]
    %v229 = vld [vmem:[#allocation5 + $0x2d8] sm:$0xff]
    %v230 = vld [vmem:[#allocation5 + $0x2e0] sm:$0xff]
    %v231 = vld [vmem:[#allocation5 + $0x2e8] sm:$0xff]
    %v232 = vld [vmem:[#allocation5 + $0x2f0] sm:$0xff]
    %v233 = vld [vmem:[#allocation5 + $0x2f8] sm:$0xff]
    %v234 = vld [vmem:[#allocation5 + $0x300] sm:$0xff]
    %v235 = vld [vmem:[#allocation5 + $0x308] sm:$0xff]
    %v236 = vld [vmem:[#allocation5 + $0x310] sm:$0xff]
    %v237 = vld [vmem:[#allocation5 + $0x318] sm:$0xff]
    %v238 = vld [vmem:[#allocation5 + $0x320] sm:$0xff]
    %v239 = vld [vmem:[#allocation5 + $0x328] sm:$0xff]
    %v240 = vld [vmem:[#allocation5 + $0x330] sm:$0xff]
    %v241 = vld [vmem:[#allocation5 + $0x338] sm:$0xff]
    %v242 = vld [vmem:[#allocation5 + $0x340] sm:$0xff]
    %v243 = vld [vmem:[#allocation5 + $0x348] sm:$0xff]
    %v244 = vld [vmem:[#allocation5 + $0x350] sm:$0xff]
    %v245 = vld [vmem:[#allocation5 + $0x358] sm:$0xff]
    %v246 = vld [vmem:[#allocation5 + $0x360] sm:$0xff]
    %v247 = vld [vmem:[#allocation5 + $0x368] sm:$0xff]
    %v248 = vld [vmem:[#allocation5 + $0x370] sm:$0xff]
    %v249 = vld [vmem:[#allocation5 + $0x378] sm:$0xff]
    %v250 = vld [vmem:[#allocation5 + $0x380] sm:$0xff]
    %v251 = vld [vmem:[#allocation5 + $0x388] sm:$0xff]
    %v252 = vld [vmem:[#allocation5 + $0x390] sm:$0xff]
    %v253 = vld [vmem:[#allocation5 + $0x398] sm:$0xff]
    %v254 = vld [vmem:[#allocation5 + $0x3a0] sm:$0xff]
    %v255 = vld [vmem:[#allocation5 + $0x3a8] sm:$0xff]
    %v256 = vld [vmem:[#allocation5 + $0x3b0] sm:$0xff]
    %v257 = vld [vmem:[#allocation5 + $0x3b8] sm:$0xff]
    %v258 = vld [vmem:[#allocation5 + $0x3c0] sm:$0xff]
    %v259 = vld [vmem:[#allocation5 + $0x3c8] sm:$0xff]
    %v260 = vld [vmem:[#allocation5 + $0x3d0] sm:$0xff]
    %v261 = vld [vmem:[#allocation5 + $0x3d8] sm:$0xff]
    %v262 = vld [vmem:[#allocation5 + $0x3e0] sm:$0xff]
    %v263 = vld [vmem:[#allocation5 + $0x3e8] sm:$0xff]
    %v264 = vld [vmem:[#allocation5 + $0x3f0] sm:$0xff]
    %v265 = vld [vmem:[#allocation5 + $0x3f8] sm:$0xff]
    %v266 = vld [vmem:[#allocation5 + $0x400] sm:$0xff]
    %v267 = vld [vmem:[#allocation5 + $0x408] sm:$0xff]
    %v268 = vld [vmem:[#allocation5 + $0x410] sm:$0xff]
    %v269 = vld [vmem:[#allocation5 + $0x418] sm:$0xff]
    %v270 = vld [vmem:[#allocation5 + $0x420] sm:$0xff]
    %v271 = vld [vmem:[#allocation5 + $0x428] sm:$0xff]
    %v272 = vld [vmem:[#allocation5 + $0x430] sm:$0xff]
    %v273 = vld [vmem:[#allocation5 + $0x438] sm:$0xff]
    %v274 = vld [vmem:[#allocation5 + $0x440] sm:$0xff]
    %v275 = vld [vmem:[#allocation5 + $0x448] sm:$0xff]
    %v276 = vld [vmem:[#allocation5 + $0x450] sm:$0xff]
    %v277 = vld [vmem:[#allocation5 + $0x458] sm:$0xff]
    %v278 = vld [vmem:[#allocation5 + $0x460] sm:$0xff]
    %v279 = vld [vmem:[#allocation5 + $0x468] sm:$0xff]
    %v280 = vld [vmem:[#allocation5 + $0x470] sm:$0xff]
    %v281 = vld [vmem:[#allocation5 + $0x478] sm:$0xff]
    %v282 = vld [vmem:[#allocation5 + $0x480] sm:$0xff]
    %v283 = vld [vmem:[#allocation5 + $0x488] sm:$0xff]
    %v284 = vld [vmem:[#allocation5 + $0x490] sm:$0xff]
    %v285 = vld [vmem:[#allocation5 + $0x498] sm:$0xff]
    %v286 = vld [vmem:[#allocation5 + $0x4a0] sm:$0xff]
    %v287 = vld [vmem:[#allocation5 + $0x4a8] sm:$0xff]
    %v288 = vld [vmem:[#allocation5 + $0x4b0] sm:$0xff]
    %v289 = vld [vmem:[#allocation5 + $0x4b8] sm:$0xff]
    %v290 = vld [vmem:[#allocation5 + $0x4c0] sm:$0xff]
    %v291 = vld [vmem:[#allocation5 + $0x4c8] sm:$0xff]
    %v292 = vld [vmem:[#allocation5 + $0x4d0] sm:$0xff]
    %v293 = vld [vmem:[#allocation5 + $0x4d8] sm:$0xff]
    %v294 = vld [vmem:[#allocation5 + $0x4e0] sm:$0xff]
    %v295 = vld [vmem:[#allocation5 + $0x4e8] sm:$0xff]
    %v296 = vld [vmem:[#allocation5 + $0x4f0] sm:$0xff]
    %v297 = vld [vmem:[#allocation5 + $0x4f8] sm:$0xff]
    %v298 = vld [vmem:[#allocation5 + $0x500] sm:$0xff]
    %v299 = vld [vmem:[#allocation5 + $0x508] sm:$0xff]
    %v300 = vld [vmem:[#allocation5 + $0x510] sm:$0xff]
    %v301 = vld [vmem:[#allocation5 + $0x518] sm:$0xff]
    %v302 = vld [vmem:[#allocation5 + $0x520] sm:$0xff]
    %v303 = vld [vmem:[#allocation5 + $0x528] sm:$0xff]
    %v304 = vld [vmem:[#allocation5 + $0x530] sm:$0xff]
    %v305 = vld [vmem:[#allocation5 + $0x538] sm:$0xff]
    %v306 = vld [vmem:[#allocation5 + $0x540] sm:$0xff]
    %v307 = vld [vmem:[#allocation5 + $0x548] sm:$0xff]
    %v308 = vld [vmem:[#allocation5 + $0x550] sm:$0xff]
    %v309 = vld [vmem:[#allocation5 + $0x558] sm:$0xff]
    %v310 = vld [vmem:[#allocation5 + $0x560] sm:$0xff]
    %v311 = vld [vmem:[#allocation5 + $0x568] sm:$0xff]
    %v312 = vld [vmem:[#allocation5 + $0x570] sm:$0xff]
    %v313 = vld [vmem:[#allocation5 + $0x578] sm:$0xff]
    %v314 = vld [vmem:[#allocation5 + $0x580] sm:$0xff]
    %v315 = vld [vmem:[#allocation5 + $0x588] sm:$0xff]
    %v316 = vld [vmem:[#allocation5 + $0x590] sm:$0xff]
    %v317 = vld [vmem:[#allocation5 + $0x598] sm:$0xff]
    %v318 = vld [vmem:[#allocation5 + $0x5a0] sm:$0xff]
    %v319 = vld [vmem:[#allocation5 + $0x5a8] sm:$0xff]
    %v320 = vld [vmem:[#allocation5 + $0x5b0] sm:$0xff]
    %v321 = vld [vmem:[#allocation5 + $0x5b8] sm:$0xff]
    %v322 = vld [vmem:[#allocation5 + $0x5c0] sm:$0xff]
    %v323 = vld [vmem:[#allocation5 + $0x5c8] sm:$0xff]
    %v324 = vld [vmem:[#allocation5 + $0x5d0] sm:$0xff]
    %v325 = vld [vmem:[#allocation5 + $0x5d8] sm:$0xff]
    %v326 = vld [vmem:[#allocation5 + $0x5e0] sm:$0xff]
    %v327 = vld [vmem:[#allocation5 + $0x5e8] sm:$0xff]
    %v328 = vld [vmem:[#allocation5 + $0x5f0] sm:$0xff]
    %v329 = vld [vmem:[#allocation5 + $0x5f8] sm:$0xff]
    %v330 = vld [vmem:[#allocation5 + $0x600] sm:$0xff]
    %v331 = vld [vmem:[#allocation5 + $0x608] sm:$0xff]
    %v332 = vld [vmem:[#allocation5 + $0x610] sm:$0xff]
    %v333 = vld [vmem:[#allocation5 + $0x618] sm:$0xff]
    %v334 = vld [vmem:[#allocation5 + $0x620] sm:$0xff]
    %v335 = vld [vmem:[#allocation5 + $0x628] sm:$0xff]
    %v336 = vld [vmem:[#allocation5 + $0x630] sm:$0xff]
    %v337 = vld [vmem:[#allocation5 + $0x638] sm:$0xff]
    %v338 = vld [vmem:[#allocation5 + $0x640] sm:$0xff]
    %v339 = vld [vmem:[#allocation5 + $0x648] sm:$0xff]
    %v340 = vld [vmem:[#allocation5 + $0x650] sm:$0xff]
    %v341 = vld [vmem:[#allocation5 + $0x658] sm:$0xff]
    %v342 = vld [vmem:[#allocation5 + $0x660] sm:$0xff]
    %v343 = vld [vmem:[#allocation5 + $0x668] sm:$0xff]
    %v344 = vld [vmem:[#allocation5 + $0x670] sm:$0xff]
    %v345 = vld [vmem:[#allocation5 + $0x678] sm:$0xff]
    %v346 = vld [vmem:[#allocation5 + $0x680] sm:$0xff]
    %v347 = vld [vmem:[#allocation5 + $0x688] sm:$0xff]
    %v348 = vld [vmem:[#allocation5 + $0x690] sm:$0xff]
    %v349 = vld [vmem:[#allocation5 + $0x698] sm:$0xff]
    %v350 = vld [vmem:[#allocation5 + $0x6a0] sm:$0xff]
    %v351 = vld [vmem:[#allocation5 + $0x6a8] sm:$0xff]
    %v352 = vld [vmem:[#allocation5 + $0x6b0] sm:$0xff]
    %v353 = vld [vmem:[#allocation5 + $0x6b8] sm:$0xff]
    %v354 = vld [vmem:[#allocation5 + $0x6c0] sm:$0xff]
    %v355 = vld [vmem:[#allocation5 + $0x6c8] sm:$0xff]
    %v356 = vld [vmem:[#allocation5 + $0x6d0] sm:$0xff]
    %v357 = vld [vmem:[#allocation5 + $0x6d8] sm:$0xff]
    %v358 = vld [vmem:[#allocation5 + $0x6e0] sm:$0xff]
    %v359 = vld [vmem:[#allocation5 + $0x6e8] sm:$0xff]
    %v360 = vld [vmem:[#allocation5 + $0x6f0] sm:$0xff]
    %v361 = vld [vmem:[#allocation5 + $0x6f8] sm:$0xff]
    %v362 = vld [vmem:[#allocation5 + $0x700] sm:$0xff]
    %v363 = vld [vmem:[#allocation5 + $0x708] sm:$0xff]
    %v364 = vld [vmem:[#allocation5 + $0x710] sm:$0xff]
    %v365 = vld [vmem:[#allocation5 + $0x718] sm:$0xff]
    %v366 = vld [vmem:[#allocation5 + $0x720] sm:$0xff]
    %v367 = vld [vmem:[#allocation5 + $0x728] sm:$0xff]
    %v368 = vld [vmem:[#allocation5 + $0x730] sm:$0xff]
    %v369 = vld [vmem:[#allocation5 + $0x738] sm:$0xff]
    %v370 = vld [vmem:[#allocation5 + $0x740] sm:$0xff]
    %v371 = vld [vmem:[#allocation5 + $0x748] sm:$0xff]
    %v372 = vld [vmem:[#allocation5 + $0x750] sm:$0xff]
    %v373 = vld [vmem:[#allocation5 + $0x758] sm:$0xff]
    %v374 = vld [vmem:[#allocation5 + $0x760] sm:$0xff]
    %v375 = vld [vmem:[#allocation5 + $0x768] sm:$0xff]
    %v376 = vld [vmem:[#allocation5 + $0x770] sm:$0xff]
    %v377 = vld [vmem:[#allocation5 + $0x778] sm:$0xff]
    %v378 = vld [vmem:[#allocation5 + $0x780] sm:$0xff]
    %v379 = vld [vmem:[#allocation5 + $0x788] sm:$0xff]
    %v380 = vld [vmem:[#allocation5 + $0x790] sm:$0xff]
    %v381 = vld [vmem:[#allocation5 + $0x798] sm:$0xff]
    %v382 = vld [vmem:[#allocation5 + $0x7a0] sm:$0xff]
    %v383 = vld [vmem:[#allocation5 + $0x7a8] sm:$0xff]
    %v384 = vld [vmem:[#allocation5 + $0x7b0] sm:$0xff]
    %v385 = vld [vmem:[#allocation5 + $0x7b8] sm:$0xff]
    %v386 = vld [vmem:[#allocation5 + $0x7c0] sm:$0xff]
    %v387 = vld [vmem:[#allocation5 + $0x7c8] sm:$0xff]
    %v388 = vld [vmem:[#allocation5 + $0x7d0] sm:$0xff]
    %v389 = vld [vmem:[#allocation5 + $0x7d8] sm:$0xff]
    %v390 = vld [vmem:[#allocation5 + $0x7e0] sm:$0xff]
    %v391 = vld [vmem:[#allocation5 + $0x7e8] sm:$0xff]
    %v392 = vld [vmem:[#allocation5 + $0x7f0] sm:$0xff]
    %v393 = vld [vmem:[#allocation5 + $0x7f8] sm:$0xff]
    %v394 = vld [vmem:[#allocation5 + $0x800] sm:$0xff]
    %v395 = vld [vmem:[#allocation5 + $0x808] sm:$0xff]
    %v396 = vld [vmem:[#allocation5 + $0x810] sm:$0xff]
    %v397 = vld [vmem:[#allocation5 + $0x818] sm:$0xff]
    %v398 = vld [vmem:[#allocation5 + $0x820] sm:$0xff]
    %v399 = vld [vmem:[#allocation5 + $0x828] sm:$0xff]
    %v400 = vld [vmem:[#allocation5 + $0x830] sm:$0xff]
    %v401 = vld [vmem:[#allocation5 + $0x838] sm:$0xff]
    %v402 = vld [vmem:[#allocation5 + $0x840] sm:$0xff]
    %v403 = vld [vmem:[#allocation5 + $0x848] sm:$0xff]
    %v404 = vld [vmem:[#allocation5 + $0x850] sm:$0xff]
    %v405 = vld [vmem:[#allocation5 + $0x858] sm:$0xff]
    %v406 = vld [vmem:[#allocation5 + $0x860] sm:$0xff]
    %v407 = vld [vmem:[#allocation5 + $0x868] sm:$0xff]
    %v408 = vld [vmem:[#allocation5 + $0x870] sm:$0xff]
    %v409 = vld [vmem:[#allocation5 + $0x878] sm:$0xff]
    %v410 = vld [vmem:[#allocation5 + $0x880] sm:$0xff]
    %v411 = vld [vmem:[#allocation5 + $0x888] sm:$0xff]
    %v412 = vld [vmem:[#allocation5 + $0x890] sm:$0xff]
    %v413 = vld [vmem:[#allocation5 + $0x898] sm:$0xff]
    %v414 = vld [vmem:[#allocation5 + $0x8a0] sm:$0xff]
    %v415 = vld [vmem:[#allocation5 + $0x8a8] sm:$0xff]
    %v416 = vld [vmem:[#allocation5 + $0x8b0] sm:$0xff]
    %v417 = vld [vmem:[#allocation5 + $0x8b8] sm:$0xff]
    %v418 = vld [vmem:[#allocation5 + $0x8c0] sm:$0xff]
    %v419 = vld [vmem:[#allocation5 + $0x8c8] sm:$0xff]
    %v420 = vld [vmem:[#allocation5 + $0x8d0] sm:$0xff]
    %v421 = vld [vmem:[#allocation5 + $0x8d8] sm:$0xff]
    %v422 = vld [vmem:[#allocation5 + $0x8e0] sm:$0xff]
    %v423 = vld [vmem:[#allocation5 + $0x8e8] sm:$0xff]
    %v424 = vld [vmem:[#allocation5 + $0x8f0] sm:$0xff]
    %v425 = vld [vmem:[#allocation5 + $0x8f8] sm:$0xff]
    %v426 = vld [vmem:[#allocation5 + $0x900] sm:$0xff]
    %v427 = vld [vmem:[#allocation5 + $0x908] sm:$0xff]
    %v428 = vld [vmem:[#allocation5 + $0x910] sm:$0xff]
    %v429 = vld [vmem:[#allocation5 + $0x918] sm:$0xff]
    %v430 = vld [vmem:[#allocation5 + $0x920] sm:$0xff]
    %v431 = vld [vmem:[#allocation5 + $0x928] sm:$0xff]
    %v432 = vld [vmem:[#allocation5 + $0x930] sm:$0xff]
    %v433 = vld [vmem:[#allocation5 + $0x938] sm:$0xff]
    %v434 = vld [vmem:[#allocation5 + $0x940] sm:$0xff]
    %v435 = vld [vmem:[#allocation5 + $0x948] sm:$0xff]
    %v436 = vld [vmem:[#allocation5 + $0x950] sm:$0xff]
    %v437 = vld [vmem:[#allocation5 + $0x958] sm:$0xff]
    %v438 = vld [vmem:[#allocation5 + $0x960] sm:$0xff]
    %v439 = vld [vmem:[#allocation5 + $0x968] sm:$0xff]
    %v440 = vld [vmem:[#allocation5 + $0x970] sm:$0xff]
    %v441 = vld [vmem:[#allocation5 + $0x978] sm:$0xff]
    %v442 = vld [vmem:[#allocation5 + $0x980] sm:$0xff]
    %v443 = vld [vmem:[#allocation5 + $0x988] sm:$0xff]
    %v444 = vld [vmem:[#allocation5 + $0x990] sm:$0xff]
    %v445 = vld [vmem:[#allocation5 + $0x998] sm:$0xff]
    %v446 = vld [vmem:[#allocation5 + $0x9a0] sm:$0xff]
    %v447 = vld [vmem:[#allocation5 + $0x9a8] sm:$0xff]
    %v448 = vld [vmem:[#allocation5 + $0x9b0] sm:$0xff]
    %v449 = vld [vmem:[#allocation5 + $0x9b8] sm:$0xff]
    %v450 = vld [vmem:[#allocation5 + $0x9c0] sm:$0xff]
    %v451 = vld [vmem:[#allocation5 + $0x9c8] sm:$0xff]
    %v452 = vld [vmem:[#allocation5 + $0x9d0] sm:$0xff]
    %v453 = vld [vmem:[#allocation5 + $0x9d8] sm:$0xff]
    %v454 = vld [vmem:[#allocation5 + $0x9e0] sm:$0xff]
    %v455 = vld [vmem:[#allocation5 + $0x9e8] sm:$0xff]
    %v456 = vld [vmem:[#allocation5 + $0x9f0] sm:$0xff]
    %v457 = vld [vmem:[#allocation5 + $0x9f8] sm:$0xff]
    %v458 = vld [vmem:[#allocation5 + $0xa00] sm:$0xff]
    %v459 = vld [vmem:[#allocation5 + $0xa08] sm:$0xff]
    %v460 = vld [vmem:[#allocation5 + $0xa10] sm:$0xff]
    %v461 = vld [vmem:[#allocation5 + $0xa18] sm:$0xff]
    %v462 = vld [vmem:[#allocation5 + $0xa20] sm:$0xff]
    %v463 = vld [vmem:[#allocation5 + $0xa28] sm:$0xff]
    %v464 = vld [vmem:[#allocation5 + $0xa30] sm:$0xff]
    %v465 = vld [vmem:[#allocation5 + $0xa38] sm:$0xff]
    %v466 = vld [vmem:[#allocation5 + $0xa40] sm:$0xff]
    %v467 = vld [vmem:[#allocation5 + $0xa48] sm:$0xff]
    %v468 = vld [vmem:[#allocation5 + $0xa50] sm:$0xff]
    %v469 = vld [vmem:[#allocation5 + $0xa58] sm:$0xff]
    %v470 = vld [vmem:[#allocation5 + $0xa60] sm:$0xff]
    %v471 = vld [vmem:[#allocation5 + $0xa68] sm:$0xff]
    %v472 = vld [vmem:[#allocation5 + $0xa70] sm:$0xff]
    %v473 = vld [vmem:[#allocation5 + $0xa78] sm:$0xff]
    %v474 = vld [vmem:[#allocation5 + $0xa80] sm:$0xff]
    %v475 = vld [vmem:[#allocation5 + $0xa88] sm:$0xff]
    %v476 = vld [vmem:[#allocation5 + $0xa90] sm:$0xff]
    %v477 = vld [vmem:[#allocation5 + $0xa98] sm:$0xff]
    %v478 = vld [vmem:[#allocation5 + $0xaa0] sm:$0xff]
    %v479 = vld [vmem:[#allocation5 + $0xaa8] sm:$0xff]
    %v480 = vld [vmem:[#allocation5 + $0xab0] sm:$0xff]
    %v481 = vld [vmem:[#allocation5 + $0xab8] sm:$0xff]
    %v482 = vld [vmem:[#allocation5 + $0xac0] sm:$0xff]
    %v483 = vld [vmem:[#allocation5 + $0xac8] sm:$0xff]
    %v484 = vld [vmem:[#allocation5 + $0xad0] sm:$0xff]
    %v485 = vld [vmem:[#allocation5 + $0xad8] sm:$0xff]
    %v486 = vld [vmem:[#allocation5 + $0xae0] sm:$0xff]
    %v487 = vld [vmem:[#allocation5 + $0xae8] sm:$0xff]
    %v488 = vld [vmem:[#allocation5 + $0xaf0] sm:$0xff]
    %v489 = vld [vmem:[#allocation5 + $0xaf8] sm:$0xff]
    %v490 = vld [vmem:[#allocation5 + $0xb00] sm:$0xff]
    %v491 = vld [vmem:[#allocation5 + $0xb08] sm:$0xff]
    %v492 = vld [vmem:[#allocation5 + $0xb10] sm:$0xff]
    %v493 = vld [vmem:[#allocation5 + $0xb18] sm:$0xff]
    %v494 = vld [vmem:[#allocation5 + $0xb20] sm:$0xff]
    %v495 = vld [vmem:[#allocation5 + $0xb28] sm:$0xff]
    %v496 = vld [vmem:[#allocation5 + $0xb30] sm:$0xff]
    %v497 = vld [vmem:[#allocation5 + $0xb38] sm:$0xff]
    %v498 = vld [vmem:[#allocation5 + $0xb40] sm:$0xff]
    %v499 = vld [vmem:[#allocation5 + $0xb48] sm:$0xff]
    %v500 = vld [vmem:[#allocation5 + $0xb50] sm:$0xff]
    %v501 = vld [vmem:[#allocation5 + $0xb58] sm:$0xff]
    %v502 = vld [vmem:[#allocation5 + $0xb60] sm:$0xff]
    %v503 = vld [vmem:[#allocation5 + $0xb68] sm:$0xff]
    %v504 = vld [vmem:[#allocation5 + $0xb70] sm:$0xff]
    %v505 = vld [vmem:[#allocation5 + $0xb78] sm:$0xff]
    %v506 = vld [vmem:[#allocation5 + $0xb80] sm:$0xff]
    %v507 = vld [vmem:[#allocation5 + $0xb88] sm:$0xff]
    %v508 = vld [vmem:[#allocation5 + $0xb90] sm:$0xff]
    %v509 = vld [vmem:[#allocation5 + $0xb98] sm:$0xff]
    %v510 = vld [vmem:[#allocation5 + $0xba0] sm:$0xff]
    %v511 = vld [vmem:[#allocation5 + $0xba8] sm:$0xff]
    %v512 = vld [vmem:[#allocation5 + $0xbb0] sm:$0xff]
    %v513 = vld [vmem:[#allocation5 + $0xbb8] sm:$0xff]
    %v514 = vld [vmem:[#allocation5 + $0xbc0] sm:$0xff]
    %v515 = vld [vmem:[#allocation5 + $0xbc8] sm:$0xff]
    %v516 = vld [vmem:[#allocation5 + $0xbd0] sm:$0xff]
    %v517 = vld [vmem:[#allocation5 + $0xbd8] sm:$0xff]
    %v518 = vld [vmem:[#allocation5 + $0xbe0] sm:$0xff]
    %v519 = vld [vmem:[#allocation5 + $0xbe8] sm:$0xff]
    %v520 = vld [vmem:[#allocation5 + $0xbf0] sm:$0xff]
    %v521 = vld [vmem:[#allocation5 + $0xbf8] sm:$0xff]
    %v522 = vld [vmem:[#allocation5 + $0xc00] sm:$0xff]
    %v523 = vld [vmem:[#allocation5 + $0xc08] sm:$0xff]
    %v524 = vld [vmem:[#allocation5 + $0xc10] sm:$0xff]
    %v525 = vld [vmem:[#allocation5 + $0xc18] sm:$0xff]
    %v526 = vld [vmem:[#allocation5 + $0xc20] sm:$0xff]
    %v527 = vld [vmem:[#allocation5 + $0xc28] sm:$0xff]
    %v528 = vld [vmem:[#allocation5 + $0xc30] sm:$0xff]
    %v529 = vld [vmem:[#allocation5 + $0xc38] sm:$0xff]
    %v530 = vld [vmem:[#allocation7] sm:$0xff]
    %v532 = vlaneseq
    %v533 = vshrl.u32 %v532, 7
    %v534 = vsub.s32 0, %v533
    %v535 = vrot.slane %v530, %v534
    %v536 = vlaneseq
    %v537 = vshrl.u32 %v536, 7
    %v538 = vsub.s32 1, %v537
    %v539 = vrot.slane %v530, %v538
    %v540 = vlaneseq
    %v541 = vshrl.u32 %v540, 7
    %v542 = vsub.s32 2, %v541
    %v543 = vrot.slane %v530, %v542
    %v544 = vlaneseq
    %v545 = vshrl.u32 %v544, 7
    %v546 = vsub.s32 3, %v545
    %v547 = vrot.slane %v530, %v546
    %v548 = vlaneseq
    %v549 = vshrl.u32 %v548, 7
    %v550 = vsub.s32 4, %v549
    %v551 = vrot.slane %v530, %v550
    %v552 = vlaneseq
    %v553 = vshrl.u32 %v552, 7
    %v554 = vsub.s32 5, %v553
    %v555 = vrot.slane %v530, %v554
    %v556 = vlaneseq
    %v557 = vshrl.u32 %v556, 7
    %v558 = vsub.s32 6, %v557
    %v559 = vrot.slane %v530, %v558
    %v560 = vlaneseq
    %v561 = vshrl.u32 %v560, 7
    %v562 = vsub.s32 7, %v561
    %v563 = vrot.slane %v530, %v562
    %v964 = vunpack.c.l.b16 %v138
    %v965 = vunpack.c.h.b16 %v138
    %v966 = vunpack.c.l.b16 %v139
    %v967 = vunpack.c.h.b16 %v139
    %v968 = vunpack.c.l.b16 %v140
    %v969 = vunpack.c.h.b16 %v140
    %v970 = vunpack.c.l.b16 %v141
    %v971 = vunpack.c.h.b16 %v141
    %v972 = vunpack.c.l.b16 %v142
    %v973 = vunpack.c.h.b16 %v142
    %v974 = vunpack.c.l.b16 %v143
    %v975 = vunpack.c.h.b16 %v143
    %v976 = vunpack.c.l.b16 %v144
    %v977 = vunpack.c.h.b16 %v144
    %v978 = vunpack.c.l.b16 %v145
    %v979 = vunpack.c.h.b16 %v145
    %v980 = vunpack.c.l.b16 %v146
    %v981 = vunpack.c.h.b16 %v146
    %v982 = vunpack.c.l.b16 %v147
    %v983 = vunpack.c.h.b16 %v147
    %v984 = vunpack.c.l.b16 %v148
    %v985 = vunpack.c.h.b16 %v148
    %v986 = vunpack.c.l.b16 %v149
    %v987 = vunpack.c.h.b16 %v149
    %v988 = vunpack.c.l.b16 %v150
    %v989 = vunpack.c.h.b16 %v150
    %v990 = vunpack.c.l.b16 %v151
    %v991 = vunpack.c.h.b16 %v151
    %v992 = vunpack.c.l.b16 %v152
    %v993 = vunpack.c.h.b16 %v152
    %v994 = vunpack.c.l.b16 %v153
    %v995 = vunpack.c.h.b16 %v153
    %v996 = vunpack.c.l.b16 %v154
    %v997 = vunpack.c.h.b16 %v154
    %v998 = vunpack.c.l.b16 %v155
    %v999 = vunpack.c.h.b16 %v155
    %v1000 = vunpack.c.l.b16 %v156
    %v1001 = vunpack.c.h.b16 %v156
    %v1002 = vunpack.c.l.b16 %v157
    %v1003 = vunpack.c.h.b16 %v157
    %v1004 = vunpack.c.l.b16 %v158
    %v1005 = vunpack.c.h.b16 %v158
    %v1006 = vunpack.c.l.b16 %v159
    %v1007 = vunpack.c.h.b16 %v159
    %v1008 = vunpack.c.l.b16 %v160
    %v1009 = vunpack.c.h.b16 %v160
    %v1010 = vunpack.c.l.b16 %v161
    %v1011 = vunpack.c.h.b16 %v161
    %v1012 = vunpack.c.l.b16 %v162
    %v1013 = vunpack.c.h.b16 %v162
    %v1014 = vunpack.c.l.b16 %v163
    %v1015 = vunpack.c.h.b16 %v163
    %v1016 = vunpack.c.l.b16 %v164
    %v1017 = vunpack.c.h.b16 %v164
    %v1018 = vunpack.c.l.b16 %v165
    %v1019 = vunpack.c.h.b16 %v165
    %v1020 = vunpack.c.l.b16 %v166
    %v1021 = vunpack.c.h.b16 %v166
    %v1022 = vunpack.c.l.b16 %v167
    %v1023 = vunpack.c.h.b16 %v167
    %v1024 = vunpack.c.l.b16 %v168
    %v1025 = vunpack.c.h.b16 %v168
    %v1026 = vunpack.c.l.b16 %v169
    %v1027 = vunpack.c.h.b16 %v169
    %v1028 = vunpack.c.l.b16 %v170
    %v1029 = vunpack.c.h.b16 %v170
    %v1030 = vunpack.c.l.b16 %v171
    %v1031 = vunpack.c.h.b16 %v171
    %v1032 = vunpack.c.l.b16 %v172
    %v1033 = vunpack.c.h.b16 %v172
    %v1034 = vunpack.c.l.b16 %v173
    %v1035 = vunpack.c.h.b16 %v173
    %v1036 = vunpack.c.l.b16 %v174
    %v1037 = vunpack.c.h.b16 %v174
    %v1038 = vunpack.c.l.b16 %v175
    %v1039 = vunpack.c.h.b16 %v175
    %v1040 = vunpack.c.l.b16 %v176
    %v1041 = vunpack.c.h.b16 %v176
    %v1042 = vunpack.c.l.b16 %v177
    %v1043 = vunpack.c.h.b16 %v177
    %v1044 = vunpack.c.l.b16 %v178
    %v1045 = vunpack.c.h.b16 %v178
    %v1046 = vunpack.c.l.b16 %v179
    %v1047 = vunpack.c.h.b16 %v179
    %v1048 = vunpack.c.l.b16 %v180
    %v1049 = vunpack.c.h.b16 %v180
    %v1050 = vunpack.c.l.b16 %v181
    %v1051 = vunpack.c.h.b16 %v181
    %v1052 = vunpack.c.l.b16 %v182
    %v1053 = vunpack.c.h.b16 %v182
    %v1054 = vunpack.c.l.b16 %v183
    %v1055 = vunpack.c.h.b16 %v183
    %v1056 = vunpack.c.l.b16 %v184
    %v1057 = vunpack.c.h.b16 %v184
    %v1058 = vunpack.c.l.b16 %v185
    %v1059 = vunpack.c.h.b16 %v185
    %v1060 = vunpack.c.l.b16 %v186
    %v1061 = vunpack.c.h.b16 %v186
    %v1062 = vunpack.c.l.b16 %v187
    %v1063 = vunpack.c.h.b16 %v187
    %v1064 = vunpack.c.l.b16 %v188
    %v1065 = vunpack.c.h.b16 %v188
    %v1066 = vunpack.c.l.b16 %v189
    %v1067 = vunpack.c.h.b16 %v189
    %v1068 = vunpack.c.l.b16 %v190
    %v1069 = vunpack.c.h.b16 %v190
    %v1070 = vunpack.c.l.b16 %v191
    %v1071 = vunpack.c.h.b16 %v191
    %v1072 = vunpack.c.l.b16 %v192
    %v1073 = vunpack.c.h.b16 %v192
    %v1074 = vunpack.c.l.b16 %v193
    %v1075 = vunpack.c.h.b16 %v193
    %v1076 = vunpack.c.l.b16 %v194
    %v1077 = vunpack.c.h.b16 %v194
    %v1078 = vunpack.c.l.b16 %v195
    %v1079 = vunpack.c.h.b16 %v195
    %v1080 = vunpack.c.l.b16 %v196
    %v1081 = vunpack.c.h.b16 %v196
    %v1082 = vunpack.c.l.b16 %v197
    %v1083 = vunpack.c.h.b16 %v197
    %v1084 = vunpack.c.l.b16 %v198
    %v1085 = vunpack.c.h.b16 %v198
    %v1086 = vunpack.c.l.b16 %v199
    %v1087 = vunpack.c.h.b16 %v199
    %v1088 = vunpack.c.l.b16 %v200
    %v1089 = vunpack.c.h.b16 %v200
    %v1090 = vunpack.c.l.b16 %v201
    %v1091 = vunpack.c.h.b16 %v201
    %v1092 = vunpack.c.l.b16 %v202
    %v1093 = vunpack.c.h.b16 %v202
    %v1094 = vunpack.c.l.b16 %v203
    %v1095 = vunpack.c.h.b16 %v203
    %v1096 = vunpack.c.l.b16 %v204
    %v1097 = vunpack.c.h.b16 %v204
    %v1098 = vunpack.c.l.b16 %v205
    %v1099 = vunpack.c.h.b16 %v205
    %v1100 = vunpack.c.l.b16 %v206
    %v1101 = vunpack.c.h.b16 %v206
    %v1102 = vunpack.c.l.b16 %v207
    %v1103 = vunpack.c.h.b16 %v207
    %v1104 = vunpack.c.l.b16 %v208
    %v1105 = vunpack.c.h.b16 %v208
    %v1106 = vunpack.c.l.b16 %v209
    %v1107 = vunpack.c.h.b16 %v209
    %v1108 = vunpack.c.l.b16 %v210
    %v1109 = vunpack.c.h.b16 %v210
    %v1110 = vunpack.c.l.b16 %v211
    %v1111 = vunpack.c.h.b16 %v211
    %v1112 = vunpack.c.l.b16 %v212
    %v1113 = vunpack.c.h.b16 %v212
    %v1114 = vunpack.c.l.b16 %v213
    %v1115 = vunpack.c.h.b16 %v213
    %v1116 = vunpack.c.l.b16 %v214
    %v1117 = vunpack.c.h.b16 %v214
    %v1118 = vunpack.c.l.b16 %v215
    %v1119 = vunpack.c.h.b16 %v215
    %v1120 = vunpack.c.l.b16 %v216
    %v1121 = vunpack.c.h.b16 %v216
    %v1122 = vunpack.c.l.b16 %v217
    %v1123 = vunpack.c.h.b16 %v217
    %v1124 = vunpack.c.l.b16 %v218
    %v1125 = vunpack.c.h.b16 %v218
    %v1126 = vunpack.c.l.b16 %v219
    %v1127 = vunpack.c.h.b16 %v219
    %v1128 = vunpack.c.l.b16 %v220
    %v1129 = vunpack.c.h.b16 %v220
    %v1130 = vunpack.c.l.b16 %v221
    %v1131 = vunpack.c.h.b16 %v221
    %v1132 = vunpack.c.l.b16 %v222
    %v1133 = vunpack.c.h.b16 %v222
    %v1134 = vunpack.c.l.b16 %v223
    %v1135 = vunpack.c.h.b16 %v223
    %v1136 = vunpack.c.l.b16 %v224
    %v1137 = vunpack.c.h.b16 %v224
    %v1138 = vunpack.c.l.b16 %v225
    %v1139 = vunpack.c.h.b16 %v225
    %v1140 = vunpack.c.l.b16 %v226
    %v1141 = vunpack.c.h.b16 %v226
    %v1142 = vunpack.c.l.b16 %v227
    %v1143 = vunpack.c.h.b16 %v227
    %v1144 = vunpack.c.l.b16 %v228
    %v1145 = vunpack.c.h.b16 %v228
    %v1146 = vunpack.c.l.b16 %v229
    %v1147 = vunpack.c.h.b16 %v229
    %v1148 = vunpack.c.l.b16 %v230
    %v1149 = vunpack.c.h.b16 %v230
    %v1150 = vunpack.c.l.b16 %v231
    %v1151 = vunpack.c.h.b16 %v231
    %v1152 = vunpack.c.l.b16 %v232
    %v1153 = vunpack.c.h.b16 %v232
    %v1154 = vunpack.c.l.b16 %v233
    %v1155 = vunpack.c.h.b16 %v233
    %v1156 = vunpack.c.l.b16 %v234
    %v1157 = vunpack.c.h.b16 %v234
    %v1158 = vunpack.c.l.b16 %v235
    %v1159 = vunpack.c.h.b16 %v235
    %v1160 = vunpack.c.l.b16 %v236
    %v1161 = vunpack.c.h.b16 %v236
    %v1162 = vunpack.c.l.b16 %v237
    %v1163 = vunpack.c.h.b16 %v237
    %v1164 = vunpack.c.l.b16 %v238
    %v1165 = vunpack.c.h.b16 %v238
    %v1166 = vunpack.c.l.b16 %v239
    %v1167 = vunpack.c.h.b16 %v239
    %v1168 = vunpack.c.l.b16 %v240
    %v1169 = vunpack.c.h.b16 %v240
    %v1170 = vunpack.c.l.b16 %v241
    %v1171 = vunpack.c.h.b16 %v241
    %v1172 = vunpack.c.l.b16 %v242
    %v1173 = vunpack.c.h.b16 %v242
    %v1174 = vunpack.c.l.b16 %v243
    %v1175 = vunpack.c.h.b16 %v243
    %v1176 = vunpack.c.l.b16 %v244
    %v1177 = vunpack.c.h.b16 %v244
    %v1178 = vunpack.c.l.b16 %v245
    %v1179 = vunpack.c.h.b16 %v245
    %v1180 = vunpack.c.l.b16 %v246
    %v1181 = vunpack.c.h.b16 %v246
    %v1182 = vunpack.c.l.b16 %v247
    %v1183 = vunpack.c.h.b16 %v247
    %v1184 = vunpack.c.l.b16 %v248
    %v1185 = vunpack.c.h.b16 %v248
    %v1186 = vunpack.c.l.b16 %v249
    %v1187 = vunpack.c.h.b16 %v249
    %v1188 = vunpack.c.l.b16 %v250
    %v1189 = vunpack.c.h.b16 %v250
    %v1190 = vunpack.c.l.b16 %v251
    %v1191 = vunpack.c.h.b16 %v251
    %v1192 = vunpack.c.l.b16 %v252
    %v1193 = vunpack.c.h.b16 %v252
    %v1194 = vunpack.c.l.b16 %v253
    %v1195 = vunpack.c.h.b16 %v253
    %v1196 = vunpack.c.l.b16 %v254
    %v1197 = vunpack.c.h.b16 %v254
    %v1198 = vunpack.c.l.b16 %v255
    %v1199 = vunpack.c.h.b16 %v255
    %v1200 = vunpack.c.l.b16 %v256
    %v1201 = vunpack.c.h.b16 %v256
    %v1202 = vunpack.c.l.b16 %v257
    %v1203 = vunpack.c.h.b16 %v257
    %v1204 = vunpack.c.l.b16 %v258
    %v1205 = vunpack.c.h.b16 %v258
    %v1206 = vunpack.c.l.b16 %v259
    %v1207 = vunpack.c.h.b16 %v259
    %v1208 = vunpack.c.l.b16 %v260
    %v1209 = vunpack.c.h.b16 %v260
    %v1210 = vunpack.c.l.b16 %v261
    %v1211 = vunpack.c.h.b16 %v261
    %v1212 = vunpack.c.l.b16 %v262
    %v1213 = vunpack.c.h.b16 %v262
    %v1214 = vunpack.c.l.b16 %v263
    %v1215 = vunpack.c.h.b16 %v263
    %v1216 = vunpack.c.l.b16 %v264
    %v1217 = vunpack.c.h.b16 %v264
    %v1218 = vunpack.c.l.b16 %v265
    %v1219 = vunpack.c.h.b16 %v265
    %v1220 = vunpack.c.l.b16 %v266
    %v1221 = vunpack.c.h.b16 %v266
    %v1222 = vunpack.c.l.b16 %v267
    %v1223 = vunpack.c.h.b16 %v267
    %v1224 = vunpack.c.l.b16 %v268
    %v1225 = vunpack.c.h.b16 %v268
    %v1226 = vunpack.c.l.b16 %v269
    %v1227 = vunpack.c.h.b16 %v269
    %v1228 = vunpack.c.l.b16 %v270
    %v1229 = vunpack.c.h.b16 %v270
    %v1230 = vunpack.c.l.b16 %v271
    %v1231 = vunpack.c.h.b16 %v271
    %v1232 = vunpack.c.l.b16 %v272
    %v1233 = vunpack.c.h.b16 %v272
    %v1234 = vunpack.c.l.b16 %v273
    %v1235 = vunpack.c.h.b16 %v273
    %v1236 = vunpack.c.l.b16 %v274
    %v1237 = vunpack.c.h.b16 %v274
    %v1238 = vunpack.c.l.b16 %v275
    %v1239 = vunpack.c.h.b16 %v275
    %v1240 = vunpack.c.l.b16 %v276
    %v1241 = vunpack.c.h.b16 %v276
    %v1242 = vunpack.c.l.b16 %v277
    %v1243 = vunpack.c.h.b16 %v277
    %v1244 = vunpack.c.l.b16 %v278
    %v1245 = vunpack.c.h.b16 %v278
    %v1246 = vunpack.c.l.b16 %v279
    %v1247 = vunpack.c.h.b16 %v279
    %v1248 = vunpack.c.l.b16 %v280
    %v1249 = vunpack.c.h.b16 %v280
    %v1250 = vunpack.c.l.b16 %v281
    %v1251 = vunpack.c.h.b16 %v281
    %v1252 = vunpack.c.l.b16 %v282
    %v1253 = vunpack.c.h.b16 %v282
    %v1254 = vunpack.c.l.b16 %v283
    %v1255 = vunpack.c.h.b16 %v283
    %v1256 = vunpack.c.l.b16 %v284
    %v1257 = vunpack.c.h.b16 %v284
    %v1258 = vunpack.c.l.b16 %v285
    %v1259 = vunpack.c.h.b16 %v285
    %v1260 = vunpack.c.l.b16 %v286
    %v1261 = vunpack.c.h.b16 %v286
    %v1262 = vunpack.c.l.b16 %v287
    %v1263 = vunpack.c.h.b16 %v287
    %v1264 = vunpack.c.l.b16 %v288
    %v1265 = vunpack.c.h.b16 %v288
    %v1266 = vunpack.c.l.b16 %v289
    %v1267 = vunpack.c.h.b16 %v289
    %v1268 = vunpack.c.l.b16 %v290
    %v1269 = vunpack.c.h.b16 %v290
    %v1270 = vunpack.c.l.b16 %v291
    %v1271 = vunpack.c.h.b16 %v291
    %v1272 = vunpack.c.l.b16 %v292
    %v1273 = vunpack.c.h.b16 %v292
    %v1274 = vunpack.c.l.b16 %v293
    %v1275 = vunpack.c.h.b16 %v293
    %v1276 = vunpack.c.l.b16 %v294
    %v1277 = vunpack.c.h.b16 %v294
    %v1278 = vunpack.c.l.b16 %v295
    %v1279 = vunpack.c.h.b16 %v295
    %v1280 = vunpack.c.l.b16 %v296
    %v1281 = vunpack.c.h.b16 %v296
    %v1282 = vunpack.c.l.b16 %v297
    %v1283 = vunpack.c.h.b16 %v297
    %v1284 = vunpack.c.l.b16 %v298
    %v1285 = vunpack.c.h.b16 %v298
    %v1286 = vunpack.c.l.b16 %v299
    %v1287 = vunpack.c.h.b16 %v299
    %v1288 = vunpack.c.l.b16 %v300
    %v1289 = vunpack.c.h.b16 %v300
    %v1290 = vunpack.c.l.b16 %v301
    %v1291 = vunpack.c.h.b16 %v301
    %v1292 = vunpack.c.l.b16 %v302
    %v1293 = vunpack.c.h.b16 %v302
    %v1294 = vunpack.c.l.b16 %v303
    %v1295 = vunpack.c.h.b16 %v303
    %v1296 = vunpack.c.l.b16 %v304
    %v1297 = vunpack.c.h.b16 %v304
    %v1298 = vunpack.c.l.b16 %v305
    %v1299 = vunpack.c.h.b16 %v305
    %v1300 = vunpack.c.l.b16 %v306
    %v1301 = vunpack.c.h.b16 %v306
    %v1302 = vunpack.c.l.b16 %v307
    %v1303 = vunpack.c.h.b16 %v307
    %v1304 = vunpack.c.l.b16 %v308
    %v1305 = vunpack.c.h.b16 %v308
    %v1306 = vunpack.c.l.b16 %v309
    %v1307 = vunpack.c.h.b16 %v309
    %v1308 = vunpack.c.l.b16 %v310
    %v1309 = vunpack.c.h.b16 %v310
    %v1310 = vunpack.c.l.b16 %v311
    %v1311 = vunpack.c.h.b16 %v311
    %v1312 = vunpack.c.l.b16 %v312
    %v1313 = vunpack.c.h.b16 %v312
    %v1314 = vunpack.c.l.b16 %v313
    %v1315 = vunpack.c.h.b16 %v313
    %v1316 = vunpack.c.l.b16 %v314
    %v1317 = vunpack.c.h.b16 %v314
    %v1318 = vunpack.c.l.b16 %v315
    %v1319 = vunpack.c.h.b16 %v315
    %v1320 = vunpack.c.l.b16 %v316
    %v1321 = vunpack.c.h.b16 %v316
    %v1322 = vunpack.c.l.b16 %v317
    %v1323 = vunpack.c.h.b16 %v317
    %v1324 = vunpack.c.l.b16 %v318
    %v1325 = vunpack.c.h.b16 %v318
    %v1326 = vunpack.c.l.b16 %v319
    %v1327 = vunpack.c.h.b16 %v319
    %v1328 = vunpack.c.l.b16 %v320
    %v1329 = vunpack.c.h.b16 %v320
    %v1330 = vunpack.c.l.b16 %v321
    %v1331 = vunpack.c.h.b16 %v321
    %v1332 = vunpack.c.l.b16 %v322
    %v1333 = vunpack.c.h.b16 %v322
    %v1334 = vunpack.c.l.b16 %v323
    %v1335 = vunpack.c.h.b16 %v323
    %v1336 = vunpack.c.l.b16 %v324
    %v1337 = vunpack.c.h.b16 %v324
    %v1338 = vunpack.c.l.b16 %v325
    %v1339 = vunpack.c.h.b16 %v325
    %v1340 = vunpack.c.l.b16 %v326
    %v1341 = vunpack.c.h.b16 %v326
    %v1342 = vunpack.c.l.b16 %v327
    %v1343 = vunpack.c.h.b16 %v327
    %v1344 = vunpack.c.l.b16 %v328
    %v1345 = vunpack.c.h.b16 %v328
    %v1346 = vunpack.c.l.b16 %v329
    %v1347 = vunpack.c.h.b16 %v329
    %v1348 = vunpack.c.l.b16 %v330
    %v1349 = vunpack.c.h.b16 %v330
    %v1350 = vunpack.c.l.b16 %v331
    %v1351 = vunpack.c.h.b16 %v331
    %v1352 = vunpack.c.l.b16 %v332
    %v1353 = vunpack.c.h.b16 %v332
    %v1354 = vunpack.c.l.b16 %v333
    %v1355 = vunpack.c.h.b16 %v333
    %v1356 = vunpack.c.l.b16 %v334
    %v1357 = vunpack.c.h.b16 %v334
    %v1358 = vunpack.c.l.b16 %v335
    %v1359 = vunpack.c.h.b16 %v335
    %v1360 = vunpack.c.l.b16 %v336
    %v1361 = vunpack.c.h.b16 %v336
    %v1362 = vunpack.c.l.b16 %v337
    %v1363 = vunpack.c.h.b16 %v337
    %v1364 = vunpack.c.l.b16 %v338
    %v1365 = vunpack.c.h.b16 %v338
    %v1366 = vunpack.c.l.b16 %v339
    %v1367 = vunpack.c.h.b16 %v339
    %v1368 = vunpack.c.l.b16 %v340
    %v1369 = vunpack.c.h.b16 %v340
    %v1370 = vunpack.c.l.b16 %v341
    %v1371 = vunpack.c.h.b16 %v341
    %v1372 = vunpack.c.l.b16 %v342
    %v1373 = vunpack.c.h.b16 %v342
    %v1374 = vunpack.c.l.b16 %v343
    %v1375 = vunpack.c.h.b16 %v343
    %v1376 = vunpack.c.l.b16 %v344
    %v1377 = vunpack.c.h.b16 %v344
    %v1378 = vunpack.c.l.b16 %v345
    %v1379 = vunpack.c.h.b16 %v345
    %v1380 = vunpack.c.l.b16 %v346
    %v1381 = vunpack.c.h.b16 %v346
    %v1382 = vunpack.c.l.b16 %v347
    %v1383 = vunpack.c.h.b16 %v347
    %v1384 = vunpack.c.l.b16 %v348
    %v1385 = vunpack.c.h.b16 %v348
    %v1386 = vunpack.c.l.b16 %v349
    %v1387 = vunpack.c.h.b16 %v349
    %v1388 = vunpack.c.l.b16 %v350
    %v1389 = vunpack.c.h.b16 %v350
    %v1390 = vunpack.c.l.b16 %v351
    %v1391 = vunpack.c.h.b16 %v351
    %v1392 = vunpack.c.l.b16 %v352
    %v1393 = vunpack.c.h.b16 %v352
    %v1394 = vunpack.c.l.b16 %v353
    %v1395 = vunpack.c.h.b16 %v353
    %v1396 = vunpack.c.l.b16 %v354
    %v1397 = vunpack.c.h.b16 %v354
    %v1398 = vunpack.c.l.b16 %v355
    %v1399 = vunpack.c.h.b16 %v355
    %v1400 = vunpack.c.l.b16 %v356
    %v1401 = vunpack.c.h.b16 %v356
    %v1402 = vunpack.c.l.b16 %v357
    %v1403 = vunpack.c.h.b16 %v357
    %v1404 = vunpack.c.l.b16 %v358
    %v1405 = vunpack.c.h.b16 %v358
    %v1406 = vunpack.c.l.b16 %v359
    %v1407 = vunpack.c.h.b16 %v359
    %v1408 = vunpack.c.l.b16 %v360
    %v1409 = vunpack.c.h.b16 %v360
    %v1410 = vunpack.c.l.b16 %v361
    %v1411 = vunpack.c.h.b16 %v361
    %v1412 = vunpack.c.l.b16 %v362
    %v1413 = vunpack.c.h.b16 %v362
    %v1414 = vunpack.c.l.b16 %v363
    %v1415 = vunpack.c.h.b16 %v363
    %v1416 = vunpack.c.l.b16 %v364
    %v1417 = vunpack.c.h.b16 %v364
    %v1418 = vunpack.c.l.b16 %v365
    %v1419 = vunpack.c.h.b16 %v365
    %v1420 = vunpack.c.l.b16 %v366
    %v1421 = vunpack.c.h.b16 %v366
    %v1422 = vunpack.c.l.b16 %v367
    %v1423 = vunpack.c.h.b16 %v367
    %v1424 = vunpack.c.l.b16 %v368
    %v1425 = vunpack.c.h.b16 %v368
    %v1426 = vunpack.c.l.b16 %v369
    %v1427 = vunpack.c.h.b16 %v369
    %v1428 = vunpack.c.l.b16 %v370
    %v1429 = vunpack.c.h.b16 %v370
    %v1430 = vunpack.c.l.b16 %v371
    %v1431 = vunpack.c.h.b16 %v371
    %v1432 = vunpack.c.l.b16 %v372
    %v1433 = vunpack.c.h.b16 %v372
    %v1434 = vunpack.c.l.b16 %v373
    %v1435 = vunpack.c.h.b16 %v373
    %v1436 = vunpack.c.l.b16 %v374
    %v1437 = vunpack.c.h.b16 %v374
    %v1438 = vunpack.c.l.b16 %v375
    %v1439 = vunpack.c.h.b16 %v375
    %v1440 = vunpack.c.l.b16 %v376
    %v1441 = vunpack.c.h.b16 %v376
    %v1442 = vunpack.c.l.b16 %v377
    %v1443 = vunpack.c.h.b16 %v377
    %v1444 = vunpack.c.l.b16 %v378
    %v1445 = vunpack.c.h.b16 %v378
    %v1446 = vunpack.c.l.b16 %v379
    %v1447 = vunpack.c.h.b16 %v379
    %v1448 = vunpack.c.l.b16 %v380
    %v1449 = vunpack.c.h.b16 %v380
    %v1450 = vunpack.c.l.b16 %v381
    %v1451 = vunpack.c.h.b16 %v381
    %v1452 = vunpack.c.l.b16 %v382
    %v1453 = vunpack.c.h.b16 %v382
    %v1454 = vunpack.c.l.b16 %v383
    %v1455 = vunpack.c.h.b16 %v383
    %v1456 = vunpack.c.l.b16 %v384
    %v1457 = vunpack.c.h.b16 %v384
    %v1458 = vunpack.c.l.b16 %v385
    %v1459 = vunpack.c.h.b16 %v385
    %v1460 = vunpack.c.l.b16 %v386
    %v1461 = vunpack.c.h.b16 %v386
    %v1462 = vunpack.c.l.b16 %v387
    %v1463 = vunpack.c.h.b16 %v387
    %v1464 = vunpack.c.l.b16 %v388
    %v1465 = vunpack.c.h.b16 %v388
    %v1466 = vunpack.c.l.b16 %v389
    %v1467 = vunpack.c.h.b16 %v389
    %v1468 = vunpack.c.l.b16 %v390
    %v1469 = vunpack.c.h.b16 %v390
    %v1470 = vunpack.c.l.b16 %v391
    %v1471 = vunpack.c.h.b16 %v391
    %v1472 = vunpack.c.l.b16 %v392
    %v1473 = vunpack.c.h.b16 %v392
    %v1474 = vunpack.c.l.b16 %v393
    %v1475 = vunpack.c.h.b16 %v393
    %v1476 = vunpack.c.l.b16 %v394
    %v1477 = vunpack.c.h.b16 %v394
    %v1478 = vunpack.c.l.b16 %v395
    %v1479 = vunpack.c.h.b16 %v395
    %v1480 = vunpack.c.l.b16 %v396
    %v1481 = vunpack.c.h.b16 %v396
    %v1482 = vunpack.c.l.b16 %v397
    %v1483 = vunpack.c.h.b16 %v397
    %v1484 = vunpack.c.l.b16 %v398
    %v1485 = vunpack.c.h.b16 %v398
    %v1486 = vunpack.c.l.b16 %v399
    %v1487 = vunpack.c.h.b16 %v399
    %v1488 = vunpack.c.l.b16 %v400
    %v1489 = vunpack.c.h.b16 %v400
    %v1490 = vunpack.c.l.b16 %v401
    %v1491 = vunpack.c.h.b16 %v401
    %v1492 = vunpack.c.l.b16 %v402
    %v1493 = vunpack.c.h.b16 %v402
    %v1494 = vunpack.c.l.b16 %v403
    %v1495 = vunpack.c.h.b16 %v403
    %v1496 = vunpack.c.l.b16 %v404
    %v1497 = vunpack.c.h.b16 %v404
    %v1498 = vunpack.c.l.b16 %v405
    %v1499 = vunpack.c.h.b16 %v405
    %v1500 = vunpack.c.l.b16 %v406
    %v1501 = vunpack.c.h.b16 %v406
    %v1502 = vunpack.c.l.b16 %v407
    %v1503 = vunpack.c.h.b16 %v407
    %v1504 = vunpack.c.l.b16 %v408
    %v1505 = vunpack.c.h.b16 %v408
    %v1506 = vunpack.c.l.b16 %v409
    %v1507 = vunpack.c.h.b16 %v409
    %v1508 = vunpack.c.l.b16 %v410
    %v1509 = vunpack.c.h.b16 %v410
    %v1510 = vunpack.c.l.b16 %v411
    %v1511 = vunpack.c.h.b16 %v411
    %v1512 = vunpack.c.l.b16 %v412
    %v1513 = vunpack.c.h.b16 %v412
    %v1514 = vunpack.c.l.b16 %v413
    %v1515 = vunpack.c.h.b16 %v413
    %v1516 = vunpack.c.l.b16 %v414
    %v1517 = vunpack.c.h.b16 %v414
    %v1518 = vunpack.c.l.b16 %v415
    %v1519 = vunpack.c.h.b16 %v415
    %v1520 = vunpack.c.l.b16 %v416
    %v1521 = vunpack.c.h.b16 %v416
    %v1522 = vunpack.c.l.b16 %v417
    %v1523 = vunpack.c.h.b16 %v417
    %v1524 = vunpack.c.l.b16 %v418
    %v1525 = vunpack.c.h.b16 %v418
    %v1526 = vunpack.c.l.b16 %v419
    %v1527 = vunpack.c.h.b16 %v419
    %v1528 = vunpack.c.l.b16 %v420
    %v1529 = vunpack.c.h.b16 %v420
    %v1530 = vunpack.c.l.b16 %v421
    %v1531 = vunpack.c.h.b16 %v421
    %v1532 = vunpack.c.l.b16 %v422
    %v1533 = vunpack.c.h.b16 %v422
    %v1534 = vunpack.c.l.b16 %v423
    %v1535 = vunpack.c.h.b16 %v423
    %v1536 = vunpack.c.l.b16 %v424
    %v1537 = vunpack.c.h.b16 %v424
    %v1538 = vunpack.c.l.b16 %v425
    %v1539 = vunpack.c.h.b16 %v425
    %v1540 = vunpack.c.l.b16 %v426
    %v1541 = vunpack.c.h.b16 %v426
    %v1542 = vunpack.c.l.b16 %v427
    %v1543 = vunpack.c.h.b16 %v427
    %v1544 = vunpack.c.l.b16 %v428
    %v1545 = vunpack.c.h.b16 %v428
    %v1546 = vunpack.c.l.b16 %v429
    %v1547 = vunpack.c.h.b16 %v429
    %v1548 = vunpack.c.l.b16 %v430
    %v1549 = vunpack.c.h.b16 %v430
    %v1550 = vunpack.c.l.b16 %v431
    %v1551 = vunpack.c.h.b16 %v431
    %v1552 = vunpack.c.l.b16 %v432
    %v1553 = vunpack.c.h.b16 %v432
    %v1554 = vunpack.c.l.b16 %v433
    %v1555 = vunpack.c.h.b16 %v433
    %v1556 = vunpack.c.l.b16 %v434
    %v1557 = vunpack.c.h.b16 %v434
    %v1558 = vunpack.c.l.b16 %v435
    %v1559 = vunpack.c.h.b16 %v435
    %v1560 = vunpack.c.l.b16 %v436
    %v1561 = vunpack.c.h.b16 %v436
    %v1562 = vunpack.c.l.b16 %v437
    %v1563 = vunpack.c.h.b16 %v437
    %v1564 = vunpack.c.l.b16 %v438
    %v1565 = vunpack.c.h.b16 %v438
    %v1566 = vunpack.c.l.b16 %v439
    %v1567 = vunpack.c.h.b16 %v439
    %v1568 = vunpack.c.l.b16 %v440
    %v1569 = vunpack.c.h.b16 %v440
    %v1570 = vunpack.c.l.b16 %v441
    %v1571 = vunpack.c.h.b16 %v441
    %v1572 = vunpack.c.l.b16 %v442
    %v1573 = vunpack.c.h.b16 %v442
    %v1574 = vunpack.c.l.b16 %v443
    %v1575 = vunpack.c.h.b16 %v443
    %v1576 = vunpack.c.l.b16 %v444
    %v1577 = vunpack.c.h.b16 %v444
    %v1578 = vunpack.c.l.b16 %v445
    %v1579 = vunpack.c.h.b16 %v445
    %v1580 = vunpack.c.l.b16 %v446
    %v1581 = vunpack.c.h.b16 %v446
    %v1582 = vunpack.c.l.b16 %v447
    %v1583 = vunpack.c.h.b16 %v447
    %v1584 = vunpack.c.l.b16 %v448
    %v1585 = vunpack.c.h.b16 %v448
    %v1586 = vunpack.c.l.b16 %v449
    %v1587 = vunpack.c.h.b16 %v449
    %v1588 = vunpack.c.l.b16 %v450
    %v1589 = vunpack.c.h.b16 %v450
    %v1590 = vunpack.c.l.b16 %v451
    %v1591 = vunpack.c.h.b16 %v451
    %v1592 = vunpack.c.l.b16 %v452
    %v1593 = vunpack.c.h.b16 %v452
    %v1594 = vunpack.c.l.b16 %v453
    %v1595 = vunpack.c.h.b16 %v453
    %v1596 = vunpack.c.l.b16 %v454
    %v1597 = vunpack.c.h.b16 %v454
    %v1598 = vunpack.c.l.b16 %v455
    %v1599 = vunpack.c.h.b16 %v455
    %v1600 = vunpack.c.l.b16 %v456
    %v1601 = vunpack.c.h.b16 %v456
    %v1602 = vunpack.c.l.b16 %v457
    %v1603 = vunpack.c.h.b16 %v457
    %v1604 = vunpack.c.l.b16 %v458
    %v1605 = vunpack.c.h.b16 %v458
    %v1606 = vunpack.c.l.b16 %v459
    %v1607 = vunpack.c.h.b16 %v459
    %v1608 = vunpack.c.l.b16 %v460
    %v1609 = vunpack.c.h.b16 %v460
    %v1610 = vunpack.c.l.b16 %v461
    %v1611 = vunpack.c.h.b16 %v461
    %v1612 = vunpack.c.l.b16 %v462
    %v1613 = vunpack.c.h.b16 %v462
    %v1614 = vunpack.c.l.b16 %v463
    %v1615 = vunpack.c.h.b16 %v463
    %v1616 = vunpack.c.l.b16 %v464
    %v1617 = vunpack.c.h.b16 %v464
    %v1618 = vunpack.c.l.b16 %v465
    %v1619 = vunpack.c.h.b16 %v465
    %v1620 = vunpack.c.l.b16 %v466
    %v1621 = vunpack.c.h.b16 %v466
    %v1622 = vunpack.c.l.b16 %v467
    %v1623 = vunpack.c.h.b16 %v467
    %v1624 = vunpack.c.l.b16 %v468
    %v1625 = vunpack.c.h.b16 %v468
    %v1626 = vunpack.c.l.b16 %v469
    %v1627 = vunpack.c.h.b16 %v469
    %v1628 = vunpack.c.l.b16 %v470
    %v1629 = vunpack.c.h.b16 %v470
    %v1630 = vunpack.c.l.b16 %v471
    %v1631 = vunpack.c.h.b16 %v471
    %v1632 = vunpack.c.l.b16 %v472
    %v1633 = vunpack.c.h.b16 %v472
    %v1634 = vunpack.c.l.b16 %v473
    %v1635 = vunpack.c.h.b16 %v473
    %v1636 = vunpack.c.l.b16 %v474
    %v1637 = vunpack.c.h.b16 %v474
    %v1638 = vunpack.c.l.b16 %v475
    %v1639 = vunpack.c.h.b16 %v475
    %v1640 = vunpack.c.l.b16 %v476
    %v1641 = vunpack.c.h.b16 %v476
    %v1642 = vunpack.c.l.b16 %v477
    %v1643 = vunpack.c.h.b16 %v477
    %v1644 = vunpack.c.l.b16 %v478
    %v1645 = vunpack.c.h.b16 %v478
    %v1646 = vunpack.c.l.b16 %v479
    %v1647 = vunpack.c.h.b16 %v479
    %v1648 = vunpack.c.l.b16 %v480
    %v1649 = vunpack.c.h.b16 %v480
    %v1650 = vunpack.c.l.b16 %v481
    %v1651 = vunpack.c.h.b16 %v481
    %v1652 = vunpack.c.l.b16 %v482
    %v1653 = vunpack.c.h.b16 %v482
    %v1654 = vunpack.c.l.b16 %v483
    %v1655 = vunpack.c.h.b16 %v483
    %v1656 = vunpack.c.l.b16 %v484
    %v1657 = vunpack.c.h.b16 %v484
    %v1658 = vunpack.c.l.b16 %v485
    %v1659 = vunpack.c.h.b16 %v485
    %v1660 = vunpack.c.l.b16 %v486
    %v1661 = vunpack.c.h.b16 %v486
    %v1662 = vunpack.c.l.b16 %v487
    %v1663 = vunpack.c.h.b16 %v487
    %v1664 = vunpack.c.l.b16 %v488
    %v1665 = vunpack.c.h.b16 %v488
    %v1666 = vunpack.c.l.b16 %v489
    %v1667 = vunpack.c.h.b16 %v489
    %v1668 = vunpack.c.l.b16 %v490
    %v1669 = vunpack.c.h.b16 %v490
    %v1670 = vunpack.c.l.b16 %v491
    %v1671 = vunpack.c.h.b16 %v491
    %v1672 = vunpack.c.l.b16 %v492
    %v1673 = vunpack.c.h.b16 %v492
    %v1674 = vunpack.c.l.b16 %v493
    %v1675 = vunpack.c.h.b16 %v493
    %v1676 = vunpack.c.l.b16 %v494
    %v1677 = vunpack.c.h.b16 %v494
    %v1678 = vunpack.c.l.b16 %v495
    %v1679 = vunpack.c.h.b16 %v495
    %v1680 = vunpack.c.l.b16 %v496
    %v1681 = vunpack.c.h.b16 %v496
    %v1682 = vunpack.c.l.b16 %v497
    %v1683 = vunpack.c.h.b16 %v497
    %v1684 = vunpack.c.l.b16 %v498
    %v1685 = vunpack.c.h.b16 %v498
    %v1686 = vunpack.c.l.b16 %v499
    %v1687 = vunpack.c.h.b16 %v499
    %v1688 = vunpack.c.l.b16 %v500
    %v1689 = vunpack.c.h.b16 %v500
    %v1690 = vunpack.c.l.b16 %v501
    %v1691 = vunpack.c.h.b16 %v501
    %v1692 = vunpack.c.l.b16 %v502
    %v1693 = vunpack.c.h.b16 %v502
    %v1694 = vunpack.c.l.b16 %v503
    %v1695 = vunpack.c.h.b16 %v503
    %v1696 = vunpack.c.l.b16 %v504
    %v1697 = vunpack.c.h.b16 %v504
    %v1698 = vunpack.c.l.b16 %v505
    %v1699 = vunpack.c.h.b16 %v505
    %v1700 = vunpack.c.l.b16 %v506
    %v1701 = vunpack.c.h.b16 %v506
    %v1702 = vunpack.c.l.b16 %v507
    %v1703 = vunpack.c.h.b16 %v507
    %v1704 = vunpack.c.l.b16 %v508
    %v1705 = vunpack.c.h.b16 %v508
    %v1706 = vunpack.c.l.b16 %v509
    %v1707 = vunpack.c.h.b16 %v509
    %v1708 = vunpack.c.l.b16 %v510
    %v1709 = vunpack.c.h.b16 %v510
    %v1710 = vunpack.c.l.b16 %v511
    %v1711 = vunpack.c.h.b16 %v511
    %v1712 = vunpack.c.l.b16 %v512
    %v1713 = vunpack.c.h.b16 %v512
    %v1714 = vunpack.c.l.b16 %v513
    %v1715 = vunpack.c.h.b16 %v513
    %v1716 = vunpack.c.l.b16 %v514
    %v1717 = vunpack.c.h.b16 %v514
    %v1718 = vunpack.c.l.b16 %v515
    %v1719 = vunpack.c.h.b16 %v515
    %v1720 = vunpack.c.l.b16 %v516
    %v1721 = vunpack.c.h.b16 %v516
    %v1722 = vunpack.c.l.b16 %v517
    %v1723 = vunpack.c.h.b16 %v517
    %v1724 = vunpack.c.l.b16 %v518
    %v1725 = vunpack.c.h.b16 %v518
    %v1726 = vunpack.c.l.b16 %v519
    %v1727 = vunpack.c.h.b16 %v519
    %v1728 = vunpack.c.l.b16 %v520
    %v1729 = vunpack.c.h.b16 %v520
    %v1730 = vunpack.c.l.b16 %v521
    %v1731 = vunpack.c.h.b16 %v521
    %v1732 = vunpack.c.l.b16 %v522
    %v1733 = vunpack.c.h.b16 %v522
    %v1734 = vunpack.c.l.b16 %v523
    %v1735 = vunpack.c.h.b16 %v523
    %v1736 = vunpack.c.l.b16 %v524
    %v1737 = vunpack.c.h.b16 %v524
    %v1738 = vunpack.c.l.b16 %v525
    %v1739 = vunpack.c.h.b16 %v525
    %v1740 = vunpack.c.l.b16 %v526
    %v1741 = vunpack.c.h.b16 %v526
    %v1742 = vunpack.c.l.b16 %v527
    %v1743 = vunpack.c.h.b16 %v527
    %v1744 = vunpack.c.l.b16 %v528
    %v1745 = vunpack.c.h.b16 %v528
    %v1746 = vunpack.c.l.b16 %v529
    %v1747 = vunpack.c.h.b16 %v529
    %v1748 = vpack.c.b16 %v972, %v964
    %v1749 = vpack.c.b16 %v973, %v965
    %v1750 = vpack.c.b16 %v974, %v966
    %v1751 = vpack.c.b16 %v975, %v967
    %v1752 = vpack.c.b16 %v976, %v968
    %v1753 = vpack.c.b16 %v977, %v969
    %v1754 = vpack.c.b16 %v978, %v970
    %v1755 = vpack.c.b16 %v979, %v971
    %v1756 = vpack.c.b16 %v988, %v980
    %v1757 = vpack.c.b16 %v989, %v981
    %v1758 = vpack.c.b16 %v990, %v982
    %v1759 = vpack.c.b16 %v991, %v983
    %v1760 = vpack.c.b16 %v992, %v984
    %v1761 = vpack.c.b16 %v993, %v985
    %v1762 = vpack.c.b16 %v994, %v986
    %v1763 = vpack.c.b16 %v995, %v987
    %v1764 = vpack.c.b16 %v1004, %v996
    %v1765 = vpack.c.b16 %v1005, %v997
    %v1766 = vpack.c.b16 %v1006, %v998
    %v1767 = vpack.c.b16 %v1007, %v999
    %v1768 = vpack.c.b16 %v1008, %v1000
    %v1769 = vpack.c.b16 %v1009, %v1001
    %v1770 = vpack.c.b16 %v1010, %v1002
    %v1771 = vpack.c.b16 %v1011, %v1003
    %v1772 = vpack.c.b16 %v1020, %v1012
    %v1773 = vpack.c.b16 %v1021, %v1013
    %v1774 = vpack.c.b16 %v1022, %v1014
    %v1775 = vpack.c.b16 %v1023, %v1015
    %v1776 = vpack.c.b16 %v1024, %v1016
    %v1777 = vpack.c.b16 %v1025, %v1017
    %v1778 = vpack.c.b16 %v1026, %v1018
    %v1779 = vpack.c.b16 %v1027, %v1019
    %v1780 = vpack.c.b16 %v1036, %v1028
    %v1781 = vpack.c.b16 %v1037, %v1029
    %v1782 = vpack.c.b16 %v1038, %v1030
    %v1783 = vpack.c.b16 %v1039, %v1031
    %v1784 = vpack.c.b16 %v1040, %v1032
    %v1785 = vpack.c.b16 %v1041, %v1033
    %v1786 = vpack.c.b16 %v1042, %v1034
    %v1787 = vpack.c.b16 %v1043, %v1035
    %v1788 = vpack.c.b16 %v1052, %v1044
    %v1789 = vpack.c.b16 %v1053, %v1045
    %v1790 = vpack.c.b16 %v1054, %v1046
    %v1791 = vpack.c.b16 %v1055, %v1047
    %v1792 = vpack.c.b16 %v1056, %v1048
    %v1793 = vpack.c.b16 %v1057, %v1049
    %v1794 = vpack.c.b16 %v1058, %v1050
    %v1795 = vpack.c.b16 %v1059, %v1051
    %v1796 = vpack.c.b16 %v1068, %v1060
    %v1797 = vpack.c.b16 %v1069, %v1061
    %v1798 = vpack.c.b16 %v1070, %v1062
    %v1799 = vpack.c.b16 %v1071, %v1063
    %v1800 = vpack.c.b16 %v1072, %v1064
    %v1801 = vpack.c.b16 %v1073, %v1065
    %v1802 = vpack.c.b16 %v1074, %v1066
    %v1803 = vpack.c.b16 %v1075, %v1067
    %v1804 = vpack.c.b16 %v1084, %v1076
    %v1805 = vpack.c.b16 %v1085, %v1077
    %v1806 = vpack.c.b16 %v1086, %v1078
    %v1807 = vpack.c.b16 %v1087, %v1079
    %v1808 = vpack.c.b16 %v1088, %v1080
    %v1809 = vpack.c.b16 %v1089, %v1081
    %v1810 = vpack.c.b16 %v1090, %v1082
    %v1811 = vpack.c.b16 %v1091, %v1083
    %v1812 = vpack.c.b16 %v1100, %v1092
    %v1813 = vpack.c.b16 %v1101, %v1093
    %v1814 = vpack.c.b16 %v1102, %v1094
    %v1815 = vpack.c.b16 %v1103, %v1095
    %v1816 = vpack.c.b16 %v1104, %v1096
    %v1817 = vpack.c.b16 %v1105, %v1097
    %v1818 = vpack.c.b16 %v1106, %v1098
    %v1819 = vpack.c.b16 %v1107, %v1099
    %v1820 = vpack.c.b16 %v1116, %v1108
    %v1821 = vpack.c.b16 %v1117, %v1109
    %v1822 = vpack.c.b16 %v1118, %v1110
    %v1823 = vpack.c.b16 %v1119, %v1111
    %v1824 = vpack.c.b16 %v1120, %v1112
    %v1825 = vpack.c.b16 %v1121, %v1113
    %v1826 = vpack.c.b16 %v1122, %v1114
    %v1827 = vpack.c.b16 %v1123, %v1115
    %v1828 = vpack.c.b16 %v1132, %v1124
    %v1829 = vpack.c.b16 %v1133, %v1125
    %v1830 = vpack.c.b16 %v1134, %v1126
    %v1831 = vpack.c.b16 %v1135, %v1127
    %v1832 = vpack.c.b16 %v1136, %v1128
    %v1833 = vpack.c.b16 %v1137, %v1129
    %v1834 = vpack.c.b16 %v1138, %v1130
    %v1835 = vpack.c.b16 %v1139, %v1131
    %v1836 = vpack.c.b16 %v1148, %v1140
    %v1837 = vpack.c.b16 %v1149, %v1141
    %v1838 = vpack.c.b16 %v1150, %v1142
    %v1839 = vpack.c.b16 %v1151, %v1143
    %v1840 = vpack.c.b16 %v1152, %v1144
    %v1841 = vpack.c.b16 %v1153, %v1145
    %v1842 = vpack.c.b16 %v1154, %v1146
    %v1843 = vpack.c.b16 %v1155, %v1147
    %v1844 = vpack.c.b16 %v1164, %v1156
    %v1845 = vpack.c.b16 %v1165, %v1157
    %v1846 = vpack.c.b16 %v1166, %v1158
    %v1847 = vpack.c.b16 %v1167, %v1159
    %v1848 = vpack.c.b16 %v1168, %v1160
    %v1849 = vpack.c.b16 %v1169, %v1161
    %v1850 = vpack.c.b16 %v1170, %v1162
    %v1851 = vpack.c.b16 %v1171, %v1163
    %v1852 = vpack.c.b16 %v1180, %v1172
    %v1853 = vpack.c.b16 %v1181, %v1173
    %v1854 = vpack.c.b16 %v1182, %v1174
    %v1855 = vpack.c.b16 %v1183, %v1175
    %v1856 = vpack.c.b16 %v1184, %v1176
    %v1857 = vpack.c.b16 %v1185, %v1177
    %v1858 = vpack.c.b16 %v1186, %v1178
    %v1859 = vpack.c.b16 %v1187, %v1179
    %v1860 = vpack.c.b16 %v1196, %v1188
    %v1861 = vpack.c.b16 %v1197, %v1189
    %v1862 = vpack.c.b16 %v1198, %v1190
    %v1863 = vpack.c.b16 %v1199, %v1191
    %v1864 = vpack.c.b16 %v1200, %v1192
    %v1865 = vpack.c.b16 %v1201, %v1193
    %v1866 = vpack.c.b16 %v1202, %v1194
    %v1867 = vpack.c.b16 %v1203, %v1195
    %v1868 = vpack.c.b16 %v1212, %v1204
    %v1869 = vpack.c.b16 %v1213, %v1205
    %v1870 = vpack.c.b16 %v1214, %v1206
    %v1871 = vpack.c.b16 %v1215, %v1207
    %v1872 = vpack.c.b16 %v1216, %v1208
    %v1873 = vpack.c.b16 %v1217, %v1209
    %v1874 = vpack.c.b16 %v1218, %v1210
    %v1875 = vpack.c.b16 %v1219, %v1211
    %v1876 = vpack.c.b16 %v1228, %v1220
    %v1877 = vpack.c.b16 %v1229, %v1221
    %v1878 = vpack.c.b16 %v1230, %v1222
    %v1879 = vpack.c.b16 %v1231, %v1223
    %v1880 = vpack.c.b16 %v1232, %v1224
    %v1881 = vpack.c.b16 %v1233, %v1225
    %v1882 = vpack.c.b16 %v1234, %v1226
    %v1883 = vpack.c.b16 %v1235, %v1227
    %v1884 = vpack.c.b16 %v1244, %v1236
    %v1885 = vpack.c.b16 %v1245, %v1237
    %v1886 = vpack.c.b16 %v1246, %v1238
    %v1887 = vpack.c.b16 %v1247, %v1239
    %v1888 = vpack.c.b16 %v1248, %v1240
    %v1889 = vpack.c.b16 %v1249, %v1241
    %v1890 = vpack.c.b16 %v1250, %v1242
    %v1891 = vpack.c.b16 %v1251, %v1243
    %v1892 = vpack.c.b16 %v1260, %v1252
    %v1893 = vpack.c.b16 %v1261, %v1253
    %v1894 = vpack.c.b16 %v1262, %v1254
    %v1895 = vpack.c.b16 %v1263, %v1255
    %v1896 = vpack.c.b16 %v1264, %v1256
    %v1897 = vpack.c.b16 %v1265, %v1257
    %v1898 = vpack.c.b16 %v1266, %v1258
    %v1899 = vpack.c.b16 %v1267, %v1259
    %v1900 = vpack.c.b16 %v1276, %v1268
    %v1901 = vpack.c.b16 %v1277, %v1269
    %v1902 = vpack.c.b16 %v1278, %v1270
    %v1903 = vpack.c.b16 %v1279, %v1271
    %v1904 = vpack.c.b16 %v1280, %v1272
    %v1905 = vpack.c.b16 %v1281, %v1273
    %v1906 = vpack.c.b16 %v1282, %v1274
    %v1907 = vpack.c.b16 %v1283, %v1275
    %v1908 = vpack.c.b16 %v1292, %v1284
    %v1909 = vpack.c.b16 %v1293, %v1285
    %v1910 = vpack.c.b16 %v1294, %v1286
    %v1911 = vpack.c.b16 %v1295, %v1287
    %v1912 = vpack.c.b16 %v1296, %v1288
    %v1913 = vpack.c.b16 %v1297, %v1289
    %v1914 = vpack.c.b16 %v1298, %v1290
    %v1915 = vpack.c.b16 %v1299, %v1291
    %v1916 = vpack.c.b16 %v1308, %v1300
    %v1917 = vpack.c.b16 %v1309, %v1301
    %v1918 = vpack.c.b16 %v1310, %v1302
    %v1919 = vpack.c.b16 %v1311, %v1303
    %v1920 = vpack.c.b16 %v1312, %v1304
    %v1921 = vpack.c.b16 %v1313, %v1305
    %v1922 = vpack.c.b16 %v1314, %v1306
    %v1923 = vpack.c.b16 %v1315, %v1307
    %v1924 = vpack.c.b16 %v1324, %v1316
    %v1925 = vpack.c.b16 %v1325, %v1317
    %v1926 = vpack.c.b16 %v1326, %v1318
    %v1927 = vpack.c.b16 %v1327, %v1319
    %v1928 = vpack.c.b16 %v1328, %v1320
    %v1929 = vpack.c.b16 %v1329, %v1321
    %v1930 = vpack.c.b16 %v1330, %v1322
    %v1931 = vpack.c.b16 %v1331, %v1323
    %v1932 = vpack.c.b16 %v1340, %v1332
    %v1933 = vpack.c.b16 %v1341, %v1333
    %v1934 = vpack.c.b16 %v1342, %v1334
    %v1935 = vpack.c.b16 %v1343, %v1335
    %v1936 = vpack.c.b16 %v1344, %v1336
    %v1937 = vpack.c.b16 %v1345, %v1337
    %v1938 = vpack.c.b16 %v1346, %v1338
    %v1939 = vpack.c.b16 %v1347, %v1339
    %v1940 = vpack.c.b16 %v1356, %v1348
    %v1941 = vpack.c.b16 %v1357, %v1349
    %v1942 = vpack.c.b16 %v1358, %v1350
    %v1943 = vpack.c.b16 %v1359, %v1351
    %v1944 = vpack.c.b16 %v1360, %v1352
    %v1945 = vpack.c.b16 %v1361, %v1353
    %v1946 = vpack.c.b16 %v1362, %v1354
    %v1947 = vpack.c.b16 %v1363, %v1355
    %v1948 = vpack.c.b16 %v1372, %v1364
    %v1949 = vpack.c.b16 %v1373, %v1365
    %v1950 = vpack.c.b16 %v1374, %v1366
    %v1951 = vpack.c.b16 %v1375, %v1367
    %v1952 = vpack.c.b16 %v1376, %v1368
    %v1953 = vpack.c.b16 %v1377, %v1369
    %v1954 = vpack.c.b16 %v1378, %v1370
    %v1955 = vpack.c.b16 %v1379, %v1371
    %v1956 = vpack.c.b16 %v1388, %v1380
    %v1957 = vpack.c.b16 %v1389, %v1381
    %v1958 = vpack.c.b16 %v1390, %v1382
    %v1959 = vpack.c.b16 %v1391, %v1383
    %v1960 = vpack.c.b16 %v1392, %v1384
    %v1961 = vpack.c.b16 %v1393, %v1385
    %v1962 = vpack.c.b16 %v1394, %v1386
    %v1963 = vpack.c.b16 %v1395, %v1387
    %v1964 = vpack.c.b16 %v1404, %v1396
    %v1965 = vpack.c.b16 %v1405, %v1397
    %v1966 = vpack.c.b16 %v1406, %v1398
    %v1967 = vpack.c.b16 %v1407, %v1399
    %v1968 = vpack.c.b16 %v1408, %v1400
    %v1969 = vpack.c.b16 %v1409, %v1401
    %v1970 = vpack.c.b16 %v1410, %v1402
    %v1971 = vpack.c.b16 %v1411, %v1403
    %v1972 = vpack.c.b16 %v1420, %v1412
    %v1973 = vpack.c.b16 %v1421, %v1413
    %v1974 = vpack.c.b16 %v1422, %v1414
    %v1975 = vpack.c.b16 %v1423, %v1415
    %v1976 = vpack.c.b16 %v1424, %v1416
    %v1977 = vpack.c.b16 %v1425, %v1417
    %v1978 = vpack.c.b16 %v1426, %v1418
    %v1979 = vpack.c.b16 %v1427, %v1419
    %v1980 = vpack.c.b16 %v1436, %v1428
    %v1981 = vpack.c.b16 %v1437, %v1429
    %v1982 = vpack.c.b16 %v1438, %v1430
    %v1983 = vpack.c.b16 %v1439, %v1431
    %v1984 = vpack.c.b16 %v1440, %v1432
    %v1985 = vpack.c.b16 %v1441, %v1433
    %v1986 = vpack.c.b16 %v1442, %v1434
    %v1987 = vpack.c.b16 %v1443, %v1435
    %v1988 = vpack.c.b16 %v1452, %v1444
    %v1989 = vpack.c.b16 %v1453, %v1445
    %v1990 = vpack.c.b16 %v1454, %v1446
    %v1991 = vpack.c.b16 %v1455, %v1447
    %v1992 = vpack.c.b16 %v1456, %v1448
    %v1993 = vpack.c.b16 %v1457, %v1449
    %v1994 = vpack.c.b16 %v1458, %v1450
    %v1995 = vpack.c.b16 %v1459, %v1451
    %v1996 = vpack.c.b16 %v1468, %v1460
    %v1997 = vpack.c.b16 %v1469, %v1461
    %v1998 = vpack.c.b16 %v1470, %v1462
    %v1999 = vpack.c.b16 %v1471, %v1463
    %v2000 = vpack.c.b16 %v1472, %v1464
    %v2001 = vpack.c.b16 %v1473, %v1465
    %v2002 = vpack.c.b16 %v1474, %v1466
    %v2003 = vpack.c.b16 %v1475, %v1467
    %v2004 = vpack.c.b16 %v1484, %v1476
    %v2005 = vpack.c.b16 %v1485, %v1477
    %v2006 = vpack.c.b16 %v1486, %v1478
    %v2007 = vpack.c.b16 %v1487, %v1479
    %v2008 = vpack.c.b16 %v1488, %v1480
    %v2009 = vpack.c.b16 %v1489, %v1481
    %v2010 = vpack.c.b16 %v1490, %v1482
    %v2011 = vpack.c.b16 %v1491, %v1483
    %v2012 = vpack.c.b16 %v1500, %v1492
    %v2013 = vpack.c.b16 %v1501, %v1493
    %v2014 = vpack.c.b16 %v1502, %v1494
    %v2015 = vpack.c.b16 %v1503, %v1495
    %v2016 = vpack.c.b16 %v1504, %v1496
    %v2017 = vpack.c.b16 %v1505, %v1497
    %v2018 = vpack.c.b16 %v1506, %v1498
    %v2019 = vpack.c.b16 %v1507, %v1499
    %v2020 = vpack.c.b16 %v1516, %v1508
    %v2021 = vpack.c.b16 %v1517, %v1509
    %v2022 = vpack.c.b16 %v1518, %v1510
    %v2023 = vpack.c.b16 %v1519, %v1511
    %v2024 = vpack.c.b16 %v1520, %v1512
    %v2025 = vpack.c.b16 %v1521, %v1513
    %v2026 = vpack.c.b16 %v1522, %v1514
    %v2027 = vpack.c.b16 %v1523, %v1515
    %v2028 = vpack.c.b16 %v1532, %v1524
    %v2029 = vpack.c.b16 %v1533, %v1525
    %v2030 = vpack.c.b16 %v1534, %v1526
    %v2031 = vpack.c.b16 %v1535, %v1527
    %v2032 = vpack.c.b16 %v1536, %v1528
    %v2033 = vpack.c.b16 %v1537, %v1529
    %v2034 = vpack.c.b16 %v1538, %v1530
    %v2035 = vpack.c.b16 %v1539, %v1531
    %v2036 = vpack.c.b16 %v1548, %v1540
    %v2037 = vpack.c.b16 %v1549, %v1541
    %v2038 = vpack.c.b16 %v1550, %v1542
    %v2039 = vpack.c.b16 %v1551, %v1543
    %v2040 = vpack.c.b16 %v1552, %v1544
    %v2041 = vpack.c.b16 %v1553, %v1545
    %v2042 = vpack.c.b16 %v1554, %v1546
    %v2043 = vpack.c.b16 %v1555, %v1547
    %v2044 = vpack.c.b16 %v1564, %v1556
    %v2045 = vpack.c.b16 %v1565, %v1557
    %v2046 = vpack.c.b16 %v1566, %v1558
    %v2047 = vpack.c.b16 %v1567, %v1559
    %v2048 = vpack.c.b16 %v1568, %v1560
    %v2049 = vpack.c.b16 %v1569, %v1561
    %v2050 = vpack.c.b16 %v1570, %v1562
    %v2051 = vpack.c.b16 %v1571, %v1563
    %v2052 = vpack.c.b16 %v1580, %v1572
    %v2053 = vpack.c.b16 %v1581, %v1573
    %v2054 = vpack.c.b16 %v1582, %v1574
    %v2055 = vpack.c.b16 %v1583, %v1575
    %v2056 = vpack.c.b16 %v1584, %v1576
    %v2057 = vpack.c.b16 %v1585, %v1577
    %v2058 = vpack.c.b16 %v1586, %v1578
    %v2059 = vpack.c.b16 %v1587, %v1579
    %v2060 = vpack.c.b16 %v1596, %v1588
    %v2061 = vpack.c.b16 %v1597, %v1589
    %v2062 = vpack.c.b16 %v1598, %v1590
    %v2063 = vpack.c.b16 %v1599, %v1591
    %v2064 = vpack.c.b16 %v1600, %v1592
    %v2065 = vpack.c.b16 %v1601, %v1593
    %v2066 = vpack.c.b16 %v1602, %v1594
    %v2067 = vpack.c.b16 %v1603, %v1595
    %v2068 = vpack.c.b16 %v1612, %v1604
    %v2069 = vpack.c.b16 %v1613, %v1605
    %v2070 = vpack.c.b16 %v1614, %v1606
    %v2071 = vpack.c.b16 %v1615, %v1607
    %v2072 = vpack.c.b16 %v1616, %v1608
    %v2073 = vpack.c.b16 %v1617, %v1609
    %v2074 = vpack.c.b16 %v1618, %v1610
    %v2075 = vpack.c.b16 %v1619, %v1611
    %v2076 = vpack.c.b16 %v1628, %v1620
    %v2077 = vpack.c.b16 %v1629, %v1621
    %v2078 = vpack.c.b16 %v1630, %v1622
    %v2079 = vpack.c.b16 %v1631, %v1623
    %v2080 = vpack.c.b16 %v1632, %v1624
    %v2081 = vpack.c.b16 %v1633, %v1625
    %v2082 = vpack.c.b16 %v1634, %v1626
    %v2083 = vpack.c.b16 %v1635, %v1627
    %v2084 = vpack.c.b16 %v1644, %v1636
    %v2085 = vpack.c.b16 %v1645, %v1637
    %v2086 = vpack.c.b16 %v1646, %v1638
    %v2087 = vpack.c.b16 %v1647, %v1639
    %v2088 = vpack.c.b16 %v1648, %v1640
    %v2089 = vpack.c.b16 %v1649, %v1641
    %v2090 = vpack.c.b16 %v1650, %v1642
    %v2091 = vpack.c.b16 %v1651, %v1643
    %v2092 = vpack.c.b16 %v1660, %v1652
    %v2093 = vpack.c.b16 %v1661, %v1653
    %v2094 = vpack.c.b16 %v1662, %v1654
    %v2095 = vpack.c.b16 %v1663, %v1655
    %v2096 = vpack.c.b16 %v1664, %v1656
    %v2097 = vpack.c.b16 %v1665, %v1657
    %v2098 = vpack.c.b16 %v1666, %v1658
    %v2099 = vpack.c.b16 %v1667, %v1659
    %v2100 = vpack.c.b16 %v1676, %v1668
    %v2101 = vpack.c.b16 %v1677, %v1669
    %v2102 = vpack.c.b16 %v1678, %v1670
    %v2103 = vpack.c.b16 %v1679, %v1671
    %v2104 = vpack.c.b16 %v1680, %v1672
    %v2105 = vpack.c.b16 %v1681, %v1673
    %v2106 = vpack.c.b16 %v1682, %v1674
    %v2107 = vpack.c.b16 %v1683, %v1675
    %v2108 = vpack.c.b16 %v1692, %v1684
    %v2109 = vpack.c.b16 %v1693, %v1685
    %v2110 = vpack.c.b16 %v1694, %v1686
    %v2111 = vpack.c.b16 %v1695, %v1687
    %v2112 = vpack.c.b16 %v1696, %v1688
    %v2113 = vpack.c.b16 %v1697, %v1689
    %v2114 = vpack.c.b16 %v1698, %v1690
    %v2115 = vpack.c.b16 %v1699, %v1691
    %v2116 = vpack.c.b16 %v1708, %v1700
    %v2117 = vpack.c.b16 %v1709, %v1701
    %v2118 = vpack.c.b16 %v1710, %v1702
    %v2119 = vpack.c.b16 %v1711, %v1703
    %v2120 = vpack.c.b16 %v1712, %v1704
    %v2121 = vpack.c.b16 %v1713, %v1705
    %v2122 = vpack.c.b16 %v1714, %v1706
    %v2123 = vpack.c.b16 %v1715, %v1707
    %v2124 = vpack.c.b16 %v1724, %v1716
    %v2125 = vpack.c.b16 %v1725, %v1717
    %v2126 = vpack.c.b16 %v1726, %v1718
    %v2127 = vpack.c.b16 %v1727, %v1719
    %v2128 = vpack.c.b16 %v1728, %v1720
    %v2129 = vpack.c.b16 %v1729, %v1721
    %v2130 = vpack.c.b16 %v1730, %v1722
    %v2131 = vpack.c.b16 %v1731, %v1723
    %v2132 = vpack.c.b16 %v1740, %v1732
    %v2133 = vpack.c.b16 %v1741, %v1733
    %v2134 = vpack.c.b16 %v1742, %v1734
    %v2135 = vpack.c.b16 %v1743, %v1735
    %v2136 = vpack.c.b16 %v1744, %v1736
    %v2137 = vpack.c.b16 %v1745, %v1737
    %v2138 = vpack.c.b16 %v1746, %v1738
    %v2139 = vpack.c.b16 %v1747, %v1739
    %vm2532 = vcmask 130048
    %v2534 = vsel %vm2532, %v137, 0
    %2536 = vmatprep.subr.bf16.mxu0 %v1749
    %2537 = vmatpush1.bf16.msra.mxu0 %v1748
    %2538 = vmatprep.subr.bf16.mxu0 %v1757
    %2539 = vmatpush1.bf16.msra.mxu0 %v1756
    %2540 = vmatprep.subr.bf16.mxu0 %v1765
    %2541 = vmatpush1.bf16.msra.mxu0 %v1764
    %2542 = vmatprep.subr.bf16.mxu0 %v1773
    %2543 = vmatpush1.bf16.msra.mxu0 %v1772
    %2544 = vmatprep.subr.bf16.mxu0 %v1781
    %2545 = vmatpush1.bf16.msra.mxu0 %v1780
    %2546 = vmatprep.subr.bf16.mxu0 %v1789
    %2547 = vmatpush1.bf16.msra.mxu0 %v1788
    %2548 = vmatprep.subr.bf16.mxu0 %v1797
    %2549 = vmatpush1.bf16.msra.mxu0 %v1796
    %2550 = vmatprep.subr.bf16.mxu0 %v1805
    %2551 = vmatpush1.bf16.msra.mxu0 %v1804
    %2552 = vmatprep.subr.bf16.mxu0 %v1813
    %2553 = vmatpush1.bf16.msra.mxu0 %v1812
    %2554 = vmatprep.subr.bf16.mxu0 %v1821
    %2555 = vmatpush1.bf16.msra.mxu0 %v1820
    %2556 = vmatprep.subr.bf16.mxu0 %v1829
    %2557 = vmatpush1.bf16.msra.mxu0 %v1828
    %2558 = vmatprep.subr.bf16.mxu0 %v1837
    %2559 = vmatpush1.bf16.msra.mxu0 %v1836
    %2560 = vmatprep.subr.bf16.mxu0 %v1845
    %2561 = vmatpush1.bf16.msra.mxu0 %v1844
    %2562 = vmatprep.subr.bf16.mxu0 %v1853
    %2563 = vmatpush1.bf16.msra.mxu0 %v1852
    %2564 = vmatprep.subr.bf16.mxu0 %v1861
    %2565 = vmatpush1.bf16.msra.mxu0 %v1860
    %2566 = vmatprep.subr.bf16.mxu0 %v1869
    %2567 = vmatpush1.bf16.msra.mxu0 %v1868
    %2568 = vmatprep.mubr.bf16.mxu0 %v132
    %2569 = vmatmul.mubr.bf16.gmra.mrb[0].mxu0 %v131
    %v2570 = vpop.f32.mrb[0].mxu0
    %v2571 = vadd.f32 %v535, %v2570
    %v2572 = vpop.f32.mrb[0].mxu0
    %v2573 = vadd.f32 %v539, %v2572
    %v2574 = vpop.f32.mrb[0].mxu0
    %v2575 = vadd.f32 %v535, %v2574
    %v2576 = vpop.f32.mrb[0].mxu0
    %v2577 = vadd.f32 %v539, %v2576
    %2578 = vdwg.mxu0
    %2579 = vmatprep.subr.bf16.mxu0 %v1877
    %2580 = vmatpush1.bf16.msra.mxu0 %v1876
    %2581 = vmatprep.subr.bf16.mxu0 %v1885
    %2582 = vmatpush1.bf16.msra.mxu0 %v1884
    %2583 = vmatprep.subr.bf16.mxu0 %v1893
    %2584 = vmatpush1.bf16.msra.mxu0 %v1892
    %2585 = vmatprep.subr.bf16.mxu0 %v1901
    %2586 = vmatpush1.bf16.msra.mxu0 %v1900
    %2587 = vmatprep.subr.bf16.mxu0 %v1909
    %2588 = vmatpush1.bf16.msra.mxu0 %v1908
    %2589 = vmatprep.subr.bf16.mxu0 %v1917
    %2590 = vmatpush1.bf16.msra.mxu0 %v1916
    %2591 = vmatprep.subr.bf16.mxu0 %v1925
    %2592 = vmatpush1.bf16.msra.mxu0 %v1924
    %2593 = vmatprep.subr.bf16.mxu0 %v1933
    %2594 = vmatpush1.bf16.msra.mxu0 %v1932
    %2595 = vmatprep.subr.bf16.mxu0 %v1941
    %2596 = vmatpush1.bf16.msra.mxu0 %v1940
    %2597 = vmatprep.subr.bf16.mxu0 %v1949
    %2598 = vmatpush1.bf16.msra.mxu0 %v1948
    %2599 = vmatprep.subr.bf16.mxu0 %v1957
    %2600 = vmatpush1.bf16.msra.mxu0 %v1956
    %2601 = vmatprep.subr.bf16.mxu0 %v1965
    %2602 = vmatpush1.bf16.msra.mxu0 %v1964
    %2603 = vmatprep.subr.bf16.mxu0 %v1973
    %2604 = vmatpush1.bf16.msra.mxu0 %v1972
    %2605 = vmatprep.subr.bf16.mxu0 %v1981
    %2606 = vmatpush1.bf16.msra.mxu0 %v1980
    %2607 = vmatprep.subr.bf16.mxu0 %v1989
    %2608 = vmatpush1.bf16.msra.mxu0 %v1988
    %2609 = vmatprep.subr.bf16.mxu0 %v1997
    %2610 = vmatpush1.bf16.msra.mxu0 %v1996
    %2611 = vmatprep.mubr.bf16.mxu0 %v134
    %2612 = vmatmul.mubr.bf16.gmra.mrb[0].mxu0 %v133
    %v2613 = vpop.f32.mrb[0].mxu0
    %v2614 = vadd.f32 %v2571, %v2613
    %v2615 = vpop.f32.mrb[0].mxu0
    %v2616 = vadd.f32 %v2573, %v2615
    %v2617 = vpop.f32.mrb[0].mxu0
    %v2618 = vadd.f32 %v2575, %v2617
    %v2619 = vpop.f32.mrb[0].mxu0
    %v2620 = vadd.f32 %v2577, %v2619
    %2621 = vdwg.mxu0
    %2622 = vmatprep.subr.bf16.mxu0 %v2005
    %2623 = vmatpush1.bf16.msra.mxu0 %v2004
    %2624 = vmatprep.subr.bf16.mxu0 %v2013
    %2625 = vmatpush1.bf16.msra.mxu0 %v2012
    %2626 = vmatprep.subr.bf16.mxu0 %v2021
    %2627 = vmatpush1.bf16.msra.mxu0 %v2020
    %2628 = vmatprep.subr.bf16.mxu0 %v2029
    %2629 = vmatpush1.bf16.msra.mxu0 %v2028
    %2630 = vmatprep.subr.bf16.mxu0 %v2037
    %2631 = vmatpush1.bf16.msra.mxu0 %v2036
    %2632 = vmatprep.subr.bf16.mxu0 %v2045
    %2633 = vmatpush1.bf16.msra.mxu0 %v2044
    %2634 = vmatprep.subr.bf16.mxu0 %v2053
    %2635 = vmatpush1.bf16.msra.mxu0 %v2052
    %2636 = vmatprep.subr.bf16.mxu0 %v2061
    %2637 = vmatpush1.bf16.msra.mxu0 %v2060
    %2638 = vmatprep.subr.bf16.mxu0 %v2069
    %2639 = vmatpush1.bf16.msra.mxu0 %v2068
    %2640 = vmatprep.subr.bf16.mxu0 %v2077
    %2641 = vmatpush1.bf16.msra.mxu0 %v2076
    %2642 = vmatprep.subr.bf16.mxu0 %v2085
    %2643 = vmatpush1.bf16.msra.mxu0 %v2084
    %2644 = vmatprep.subr.bf16.mxu0 %v2093
    %2645 = vmatpush1.bf16.msra.mxu0 %v2092
    %2646 = vmatprep.subr.bf16.mxu0 %v2101
    %2647 = vmatpush1.bf16.msra.mxu0 %v2100
    %2648 = vmatprep.subr.bf16.mxu0 %v2109
    %2649 = vmatpush1.bf16.msra.mxu0 %v2108
    %2650 = vmatprep.subr.bf16.mxu0 %v2117
    %2651 = vmatpush1.bf16.msra.mxu0 %v2116
    %2652 = vmatprep.subr.bf16.mxu0 %v2125
    %2653 = vmatpush1.bf16.msra.mxu0 %v2124
    %2654 = vmatprep.mubr.bf16.mxu0 %v136
    %2655 = vmatmul.mubr.bf16.gmra.mrb[0].mxu0 %v135
    %v2656 = vpop.f32.mrb[0].mxu0
    %v2657 = vadd.f32 %v2614, %v2656
    %v2658 = vpop.f32.mrb[0].mxu0
    %v2659 = vadd.f32 %v2616, %v2658
    %v2660 = vpop.f32.mrb[0].mxu0
    %v2661 = vadd.f32 %v2618, %v2660
    %v2662 = vpop.f32.mrb[0].mxu0
    %v2663 = vadd.f32 %v2620, %v2662
    %2664 = vdwg.mxu0
    %2665 = vmatprep.subr.bf16.mxu0 %v2133
    %2666 = vmatpush1.bf16.msra.mxu0 %v2132
    %2667 = vmatprep.subr.bf16.mxu0 0
    %2668 = vmatpush1.bf16.msra.mxu0 0
    %2669 = vmatprep.subr.bf16.mxu0 0
    %2670 = vmatpush1.bf16.msra.mxu0 0
    %2671 = vmatprep.subr.bf16.mxu0 0
    %2672 = vmatpush1.bf16.msra.mxu0 0
    %2673 = vmatprep.subr.bf16.mxu0 0
    %2674 = vmatpush1.bf16.msra.mxu0 0
    %2675 = vmatprep.subr.bf16.mxu0 0
    %2676 = vmatpush1.bf16.msra.mxu0 0
    %2677 = vmatprep.subr.bf16.mxu0 0
    %2678 = vmatpush1.bf16.msra.mxu0 0
    %2679 = vmatprep.subr.bf16.mxu0 0
    %2680 = vmatpush1.bf16.msra.mxu0 0
    %2681 = vmatprep.subr.bf16.mxu0 0
    %2682 = vmatpush1.bf16.msra.mxu0 0
    %2683 = vmatprep.subr.bf16.mxu0 0
    %2684 = vmatpush1.bf16.msra.mxu0 0
    %2685 = vmatprep.subr.bf16.mxu0 0
    %2686 = vmatpush1.bf16.msra.mxu0 0
    %2687 = vmatprep.subr.bf16.mxu0 0
    %2688 = vmatpush1.bf16.msra.mxu0 0
    %2689 = vmatprep.subr.bf16.mxu0 0
    %2690 = vmatpush1.bf16.msra.mxu0 0
    %2691 = vmatprep.subr.bf16.mxu0 0
    %2692 = vmatpush1.bf16.msra.mxu0 0
    %2693 = vmatprep.subr.bf16.mxu0 0
    %2694 = vmatpush1.bf16.msra.mxu0 0
    %2695 = vmatprep.subr.bf16.mxu0 0
    %2696 = vmatpush1.bf16.msra.mxu0 0
    %2697 = vmatprep.mubr.bf16.mxu0 0
    %2698 = vmatmul.mubr.bf16.gmra.mrb[0].mxu0 %v2534
    %v2699 = vpop.f32.mrb[0].mxu0
    %v2700 = vadd.f32 %v2657, %v2699
    %v2701 = vpop.f32.mrb[0].mxu0
    %v2702 = vadd.f32 %v2659, %v2701
    %v2703 = vpop.f32.mrb[0].mxu0
    %v2704 = vadd.f32 %v2661, %v2703
    %v2705 = vpop.f32.mrb[0].mxu0
    %v2706 = vadd.f32 %v2663, %v2705
    %2707 = vdwg.mxu0
    %2708 = vmatprep.subr.bf16.mxu0 %v1751
    %2709 = vmatpush1.bf16.msra.mxu0 %v1750
    %2710 = vmatprep.subr.bf16.mxu0 %v1759
    %2711 = vmatpush1.bf16.msra.mxu0 %v1758
    %2712 = vmatprep.subr.bf16.mxu0 %v1767
    %2713 = vmatpush1.bf16.msra.mxu0 %v1766
    %2714 = vmatprep.subr.bf16.mxu0 %v1775
    %2715 = vmatpush1.bf16.msra.mxu0 %v1774
    %2716 = vmatprep.subr.bf16.mxu0 %v1783
    %2717 = vmatpush1.bf16.msra.mxu0 %v1782
    %2718 = vmatprep.subr.bf16.mxu0 %v1791
    %2719 = vmatpush1.bf16.msra.mxu0 %v1790
    %2720 = vmatprep.subr.bf16.mxu0 %v1799
    %2721 = vmatpush1.bf16.msra.mxu0 %v1798
    %2722 = vmatprep.subr.bf16.mxu0 %v1807
    %2723 = vmatpush1.bf16.msra.mxu0 %v1806
    %2724 = vmatprep.subr.bf16.mxu0 %v1815
    %2725 = vmatpush1.bf16.msra.mxu0 %v1814
    %2726 = vmatprep.subr.bf16.mxu0 %v1823
    %2727 = vmatpush1.bf16.msra.mxu0 %v1822
    %2728 = vmatprep.subr.bf16.mxu0 %v1831
    %2729 = vmatpush1.bf16.msra.mxu0 %v1830
    %2730 = vmatprep.subr.bf16.mxu0 %v1839
    %2731 = vmatpush1.bf16.msra.mxu0 %v1838
    %2732 = vmatprep.subr.bf16.mxu0 %v1847
    %2733 = vmatpush1.bf16.msra.mxu0 %v1846
    %2734 = vmatprep.subr.bf16.mxu0 %v1855
    %2735 = vmatpush1.bf16.msra.mxu0 %v1854
    %2736 = vmatprep.subr.bf16.mxu0 %v1863
    %2737 = vmatpush1.bf16.msra.mxu0 %v1862
    %2738 = vmatprep.subr.bf16.mxu0 %v1871
    %2739 = vmatpush1.bf16.msra.mxu0 %v1870
    %2740 = vmatprep.mubr.bf16.mxu0 %v132
    %2741 = vmatmul.mubr.bf16.gmra.mrb[0].mxu0 %v131
    %v2742 = vpop.f32.mrb[0].mxu0
    %v2743 = vadd.f32 %v543, %v2742
    %v2744 = vpop.f32.mrb[0].mxu0
    %v2745 = vadd.f32 %v547, %v2744
    %v2746 = vpop.f32.mrb[0].mxu0
    %v2747 = vadd.f32 %v543, %v2746
    %v2748 = vpop.f32.mrb[0].mxu0
    %v2749 = vadd.f32 %v547, %v2748
    %2750 = vdwg.mxu0
    %2751 = vmatprep.subr.bf16.mxu0 %v1879
    %2752 = vmatpush1.bf16.msra.mxu0 %v1878
    %2753 = vmatprep.subr.bf16.mxu0 %v1887
    %2754 = vmatpush1.bf16.msra.mxu0 %v1886
    %2755 = vmatprep.subr.bf16.mxu0 %v1895
    %2756 = vmatpush1.bf16.msra.mxu0 %v1894
    %2757 = vmatprep.subr.bf16.mxu0 %v1903
    %2758 = vmatpush1.bf16.msra.mxu0 %v1902
    %2759 = vmatprep.subr.bf16.mxu0 %v1911
    %2760 = vmatpush1.bf16.msra.mxu0 %v1910
    %2761 = vmatprep.subr.bf16.mxu0 %v1919
    %2762 = vmatpush1.bf16.msra.mxu0 %v1918
    %2763 = vmatprep.subr.bf16.mxu0 %v1927
    %2764 = vmatpush1.bf16.msra.mxu0 %v1926
    %2765 = vmatprep.subr.bf16.mxu0 %v1935
    %2766 = vmatpush1.bf16.msra.mxu0 %v1934
    %2767 = vmatprep.subr.bf16.mxu0 %v1943
    %2768 = vmatpush1.bf16.msra.mxu0 %v1942
    %2769 = vmatprep.subr.bf16.mxu0 %v1951
    %2770 = vmatpush1.bf16.msra.mxu0 %v1950
    %2771 = vmatprep.subr.bf16.mxu0 %v1959
    %2772 = vmatpush1.bf16.msra.mxu0 %v1958
    %2773 = vmatprep.subr.bf16.mxu0 %v1967
    %2774 = vmatpush1.bf16.msra.mxu0 %v1966
    %2775 = vmatprep.subr.bf16.mxu0 %v1975
    %2776 = vmatpush1.bf16.msra.mxu0 %v1974
    %2777 = vmatprep.subr.bf16.mxu0 %v1983
    %2778 = vmatpush1.bf16.msra.mxu0 %v1982
    %2779 = vmatprep.subr.bf16.mxu0 %v1991
    %2780 = vmatpush1.bf16.msra.mxu0 %v1990
    %2781 = vmatprep.subr.bf16.mxu0 %v1999
    %2782 = vmatpush1.bf16.msra.mxu0 %v1998
    %2783 = vmatprep.mubr.bf16.mxu0 %v134
    %2784 = vmatmul.mubr.bf16.gmra.mrb[0].mxu0 %v133
    %v2785 = vpop.f32.mrb[0].mxu0
    %v2786 = vadd.f32 %v2743, %v2785
    %v2787 = vpop.f32.mrb[0].mxu0
    %v2788 = vadd.f32 %v2745, %v2787
    %v2789 = vpop.f32.mrb[0].mxu0
    %v2790 = vadd.f32 %v2747, %v2789
    %v2791 = vpop.f32.mrb[0].mxu0
    %v2792 = vadd.f32 %v2749, %v2791
    %2793 = vdwg.mxu0
    %2794 = vmatprep.subr.bf16.mxu0 %v2007
    %2795 = vmatpush1.bf16.msra.mxu0 %v2006
    %2796 = vmatprep.subr.bf16.mxu0 %v2015
    %2797 = vmatpush1.bf16.msra.mxu0 %v2014
    %2798 = vmatprep.subr.bf16.mxu0 %v2023
    %2799 = vmatpush1.bf16.msra.mxu0 %v2022
    %2800 = vmatprep.subr.bf16.mxu0 %v2031
    %2801 = vmatpush1.bf16.msra.mxu0 %v2030
    %2802 = vmatprep.subr.bf16.mxu0 %v2039
    %2803 = vmatpush1.bf16.msra.mxu0 %v2038
    %2804 = vmatprep.subr.bf16.mxu0 %v2047
    %2805 = vmatpush1.bf16.msra.mxu0 %v2046
    %2806 = vmatprep.subr.bf16.mxu0 %v2055
    %2807 = vmatpush1.bf16.msra.mxu0 %v2054
    %2808 = vmatprep.subr.bf16.mxu0 %v2063
    %2809 = vmatpush1.bf16.msra.mxu0 %v2062
    %2810 = vmatprep.subr.bf16.mxu0 %v2071
    %2811 = vmatpush1.bf16.msra.mxu0 %v2070
    %2812 = vmatprep.subr.bf16.mxu0 %v2079
    %2813 = vmatpush1.bf16.msra.mxu0 %v2078
    %2814 = vmatprep.subr.bf16.mxu0 %v2087
    %2815 = vmatpush1.bf16.msra.mxu0 %v2086
    %2816 = vmatprep.subr.bf16.mxu0 %v2095
    %2817 = vmatpush1.bf16.msra.mxu0 %v2094
    %2818 = vmatprep.subr.bf16.mxu0 %v2103
    %2819 = vmatpush1.bf16.msra.mxu0 %v2102
    %2820 = vmatprep.subr.bf16.mxu0 %v2111
    %2821 = vmatpush1.bf16.msra.mxu0 %v2110
    %2822 = vmatprep.subr.bf16.mxu0 %v2119
    %2823 = vmatpush1.bf16.msra.mxu0 %v2118
    %2824 = vmatprep.subr.bf16.mxu0 %v2127
    %2825 = vmatpush1.bf16.msra.mxu0 %v2126
    %2826 = vmatprep.mubr.bf16.mxu0 %v136
    %2827 = vmatmul.mubr.bf16.gmra.mrb[0].mxu0 %v135
    %v2828 = vpop.f32.mrb[0].mxu0
    %v2829 = vadd.f32 %v2786, %v2828
    %v2830 = vpop.f32.mrb[0].mxu0
    %v2831 = vadd.f32 %v2788, %v2830
    %v2832 = vpop.f32.mrb[0].mxu0
    %v2833 = vadd.f32 %v2790, %v2832
    %v2834 = vpop.f32.mrb[0].mxu0
    %v2835 = vadd.f32 %v2792, %v2834
    %2836 = vdwg.mxu0
    %2837 = vmatprep.subr.bf16.mxu0 %v2135
    %2838 = vmatpush1.bf16.msra.mxu0 %v2134
    %2839 = vmatprep.subr.bf16.mxu0 0
    %2840 = vmatpush1.bf16.msra.mxu0 0
    %2841 = vmatprep.subr.bf16.mxu0 0
    %2842 = vmatpush1.bf16.msra.mxu0 0
    %2843 = vmatprep.subr.bf16.mxu0 0
    %2844 = vmatpush1.bf16.msra.mxu0 0
    %2845 = vmatprep.subr.bf16.mxu0 0
    %2846 = vmatpush1.bf16.msra.mxu0 0
    %2847 = vmatprep.subr.bf16.mxu0 0
    %2848 = vmatpush1.bf16.msra.mxu0 0
    %2849 = vmatprep.subr.bf16.mxu0 0
    %2850 = vmatpush1.bf16.msra.mxu0 0
    %2851 = vmatprep.subr.bf16.mxu0 0
    %2852 = vmatpush1.bf16.msra.mxu0 0
    %2853 = vmatprep.subr.bf16.mxu0 0
    %2854 = vmatpush1.bf16.msra.mxu0 0
    %2855 = vmatprep.subr.bf16.mxu0 0
    %2856 = vmatpush1.bf16.msra.mxu0 0
    %2857 = vmatprep.subr.bf16.mxu0 0
    %2858 = vmatpush1.bf16.msra.mxu0 0
    %2859 = vmatprep.subr.bf16.mxu0 0
    %2860 = vmatpush1.bf16.msra.mxu0 0
    %2861 = vmatprep.subr.bf16.mxu0 0
    %2862 = vmatpush1.bf16.msra.mxu0 0
    %2863 = vmatprep.subr.bf16.mxu0 0
    %2864 = vmatpush1.bf16.msra.mxu0 0
    %2865 = vmatprep.subr.bf16.mxu0 0
    %2866 = vmatpush1.bf16.msra.mxu0 0
    %2867 = vmatprep.subr.bf16.mxu0 0
    %2868 = vmatpush1.bf16.msra.mxu0 0
    %2869 = vmatprep.mubr.bf16.mxu0 0
    %2870 = vmatmul.mubr.bf16.gmra.mrb[0].mxu0 %v2534
    %v2871 = vpop.f32.mrb[0].mxu0
    %v2872 = vadd.f32 %v2829, %v2871
    %v2873 = vpop.f32.mrb[0].mxu0
    %v2874 = vadd.f32 %v2831, %v2873
    %v2875 = vpop.f32.mrb[0].mxu0
    %v2876 = vadd.f32 %v2833, %v2875
    %v2877 = vpop.f32.mrb[0].mxu0
    %v2878 = vadd.f32 %v2835, %v2877
    %2879 = vdwg.mxu0
    %2880 = vmatprep.subr.bf16.mxu0 %v1753
    %2881 = vmatpush1.bf16.msra.mxu0 %v1752
    %2882 = vmatprep.subr.bf16.mxu0 %v1761
    %2883 = vmatpush1.bf16.msra.mxu0 %v1760
    %2884 = vmatprep.subr.bf16.mxu0 %v1769
    %2885 = vmatpush1.bf16.msra.mxu0 %v1768
    %2886 = vmatprep.subr.bf16.mxu0 %v1777
    %2887 = vmatpush1.bf16.msra.mxu0 %v1776
    %2888 = vmatprep.subr.bf16.mxu0 %v1785
    %2889 = vmatpush1.bf16.msra.mxu0 %v1784
    %2890 = vmatprep.subr.bf16.mxu0 %v1793
    %2891 = vmatpush1.bf16.msra.mxu0 %v1792
    %2892 = vmatprep.subr.bf16.mxu0 %v1801
    %2893 = vmatpush1.bf16.msra.mxu0 %v1800
    %2894 = vmatprep.subr.bf16.mxu0 %v1809
    %2895 = vmatpush1.bf16.msra.mxu0 %v1808
    %2896 = vmatprep.subr.bf16.mxu0 %v1817
    %2897 = vmatpush1.bf16.msra.mxu0 %v1816
    %2898 = vmatprep.subr.bf16.mxu0 %v1825
    %2899 = vmatpush1.bf16.msra.mxu0 %v1824
    %2900 = vmatprep.subr.bf16.mxu0 %v1833
    %2901 = vmatpush1.bf16.msra.mxu0 %v1832
    %2902 = vmatprep.subr.bf16.mxu0 %v1841
    %2903 = vmatpush1.bf16.msra.mxu0 %v1840
    %2904 = vmatprep.subr.bf16.mxu0 %v1849
    %2905 = vmatpush1.bf16.msra.mxu0 %v1848
    %2906 = vmatprep.subr.bf16.mxu0 %v1857
    %2907 = vmatpush1.bf16.msra.mxu0 %v1856
    %2908 = vmatprep.subr.bf16.mxu0 %v1865
    %2909 = vmatpush1.bf16.msra.mxu0 %v1864
    %2910 = vmatprep.subr.bf16.mxu0 %v1873
    %2911 = vmatpush1.bf16.msra.mxu0 %v1872
    %2912 = vmatprep.mubr.bf16.mxu0 %v132
    %2913 = vmatmul.mubr.bf16.gmra.mrb[0].mxu0 %v131
    %v2914 = vpop.f32.mrb[0].mxu0
    %v2915 = vadd.f32 %v551, %v2914
    %v2916 = vpop.f32.mrb[0].mxu0
    %v2917 = vadd.f32 %v555, %v2916
    %v2918 = vpop.f32.mrb[0].mxu0
    %v2919 = vadd.f32 %v551, %v2918
    %v2920 = vpop.f32.mrb[0].mxu0
    %v2921 = vadd.f32 %v555, %v2920
    %2922 = vdwg.mxu0
    %2923 = vmatprep.subr.bf16.mxu0 %v1881
    %2924 = vmatpush1.bf16.msra.mxu0 %v1880
    %2925 = vmatprep.subr.bf16.mxu0 %v1889
    %2926 = vmatpush1.bf16.msra.mxu0 %v1888
    %2927 = vmatprep.subr.bf16.mxu0 %v1897
    %2928 = vmatpush1.bf16.msra.mxu0 %v1896
    %2929 = vmatprep.subr.bf16.mxu0 %v1905
    %2930 = vmatpush1.bf16.msra.mxu0 %v1904
    %2931 = vmatprep.subr.bf16.mxu0 %v1913
    %2932 = vmatpush1.bf16.msra.mxu0 %v1912
    %2933 = vmatprep.subr.bf16.mxu0 %v1921
    %2934 = vmatpush1.bf16.msra.mxu0 %v1920
    %2935 = vmatprep.subr.bf16.mxu0 %v1929
    %2936 = vmatpush1.bf16.msra.mxu0 %v1928
    %2937 = vmatprep.subr.bf16.mxu0 %v1937
    %2938 = vmatpush1.bf16.msra.mxu0 %v1936
    %2939 = vmatprep.subr.bf16.mxu0 %v1945
    %2940 = vmatpush1.bf16.msra.mxu0 %v1944
    %2941 = vmatprep.subr.bf16.mxu0 %v1953
    %2942 = vmatpush1.bf16.msra.mxu0 %v1952
    %2943 = vmatprep.subr.bf16.mxu0 %v1961
    %2944 = vmatpush1.bf16.msra.mxu0 %v1960
    %2945 = vmatprep.subr.bf16.mxu0 %v1969
    %2946 = vmatpush1.bf16.msra.mxu0 %v1968
    %2947 = vmatprep.subr.bf16.mxu0 %v1977
    %2948 = vmatpush1.bf16.msra.mxu0 %v1976
    %2949 = vmatprep.subr.bf16.mxu0 %v1985
    %2950 = vmatpush1.bf16.msra.mxu0 %v1984
    %2951 = vmatprep.subr.bf16.mxu0 %v1993
    %2952 = vmatpush1.bf16.msra.mxu0 %v1992
    %2953 = vmatprep.subr.bf16.mxu0 %v2001
    %2954 = vmatpush1.bf16.msra.mxu0 %v2000
    %2955 = vmatprep.mubr.bf16.mxu0 %v134
    %2956 = vmatmul.mubr.bf16.gmra.mrb[0].mxu0 %v133
    %v2957 = vpop.f32.mrb[0].mxu0
    %v2958 = vadd.f32 %v2915, %v2957
    %v2959 = vpop.f32.mrb[0].mxu0
    %v2960 = vadd.f32 %v2917, %v2959
    %v2961 = vpop.f32.mrb[0].mxu0
    %v2962 = vadd.f32 %v2919, %v2961
    %v2963 = vpop.f32.mrb[0].mxu0
    %v2964 = vadd.f32 %v2921, %v2963
    %2965 = vdwg.mxu0
    %2966 = vmatprep.subr.bf16.mxu0 %v2009
    %2967 = vmatpush1.bf16.msra.mxu0 %v2008
    %2968 = vmatprep.subr.bf16.mxu0 %v2017
    %2969 = vmatpush1.bf16.msra.mxu0 %v2016
    %2970 = vmatprep.subr.bf16.mxu0 %v2025
    %2971 = vmatpush1.bf16.msra.mxu0 %v2024
    %2972 = vmatprep.subr.bf16.mxu0 %v2033
    %2973 = vmatpush1.bf16.msra.mxu0 %v2032
    %2974 = vmatprep.subr.bf16.mxu0 %v2041
    %2975 = vmatpush1.bf16.msra.mxu0 %v2040
    %2976 = vmatprep.subr.bf16.mxu0 %v2049
    %2977 = vmatpush1.bf16.msra.mxu0 %v2048
    %2978 = vmatprep.subr.bf16.mxu0 %v2057
    %2979 = vmatpush1.bf16.msra.mxu0 %v2056
    %2980 = vmatprep.subr.bf16.mxu0 %v2065
    %2981 = vmatpush1.bf16.msra.mxu0 %v2064
    %2982 = vmatprep.subr.bf16.mxu0 %v2073
    %2983 = vmatpush1.bf16.msra.mxu0 %v2072
    %2984 = vmatprep.subr.bf16.mxu0 %v2081
    %2985 = vmatpush1.bf16.msra.mxu0 %v2080
    %2986 = vmatprep.subr.bf16.mxu0 %v2089
    %2987 = vmatpush1.bf16.msra.mxu0 %v2088
    %2988 = vmatprep.subr.bf16.mxu0 %v2097
    %2989 = vmatpush1.bf16.msra.mxu0 %v2096
    %2990 = vmatprep.subr.bf16.mxu0 %v2105
    %2991 = vmatpush1.bf16.msra.mxu0 %v2104
    %2992 = vmatprep.subr.bf16.mxu0 %v2113
    %2993 = vmatpush1.bf16.msra.mxu0 %v2112
    %2994 = vmatprep.subr.bf16.mxu0 %v2121
    %2995 = vmatpush1.bf16.msra.mxu0 %v2120
    %2996 = vmatprep.subr.bf16.mxu0 %v2129
    %2997 = vmatpush1.bf16.msra.mxu0 %v2128
    %2998 = vmatprep.mubr.bf16.mxu0 %v136
    %2999 = vmatmul.mubr.bf16.gmra.mrb[0].mxu0 %v135
    %v3000 = vpop.f32.mrb[0].mxu0
    %v3001 = vadd.f32 %v2958, %v3000
    %v3002 = vpop.f32.mrb[0].mxu0
    %v3003 = vadd.f32 %v2960, %v3002
    %v3004 = vpop.f32.mrb[0].mxu0
    %v3005 = vadd.f32 %v2962, %v3004
    %v3006 = vpop.f32.mrb[0].mxu0
    %v3007 = vadd.f32 %v2964, %v3006
    %3008 = vdwg.mxu0
    %3009 = vmatprep.subr.bf16.mxu0 %v2137
    %3010 = vmatpush1.bf16.msra.mxu0 %v2136
    %3011 = vmatprep.subr.bf16.mxu0 0
    %3012 = vmatpush1.bf16.msra.mxu0 0
    %3013 = vmatprep.subr.bf16.mxu0 0
    %3014 = vmatpush1.bf16.msra.mxu0 0
    %3015 = vmatprep.subr.bf16.mxu0 0
    %3016 = vmatpush1.bf16.msra.mxu0 0
    %3017 = vmatprep.subr.bf16.mxu0 0
    %3018 = vmatpush1.bf16.msra.mxu0 0
    %3019 = vmatprep.subr.bf16.mxu0 0
    %3020 = vmatpush1.bf16.msra.mxu0 0
    %3021 = vmatprep.subr.bf16.mxu0 0
    %3022 = vmatpush1.bf16.msra.mxu0 0
    %3023 = vmatprep.subr.bf16.mxu0 0
    %3024 = vmatpush1.bf16.msra.mxu0 0
    %3025 = vmatprep.subr.bf16.mxu0 0
    %3026 = vmatpush1.bf16.msra.mxu0 0
    %3027 = vmatprep.subr.bf16.mxu0 0
    %3028 = vmatpush1.bf16.msra.mxu0 0
    %3029 = vmatprep.subr.bf16.mxu0 0
    %3030 = vmatpush1.bf16.msra.mxu0 0
    %3031 = vmatprep.subr.bf16.mxu0 0
    %3032 = vmatpush1.bf16.msra.mxu0 0
    %3033 = vmatprep.subr.bf16.mxu0 0
    %3034 = vmatpush1.bf16.msra.mxu0 0
    %3035 = vmatprep.subr.bf16.mxu0 0
    %3036 = vmatpush1.bf16.msra.mxu0 0
    %3037 = vmatprep.subr.bf16.mxu0 0
    %3038 = vmatpush1.bf16.msra.mxu0 0
    %3039 = vmatprep.subr.bf16.mxu0 0
    %3040 = vmatpush1.bf16.msra.mxu0 0
    %3041 = vmatprep.mubr.bf16.mxu0 0
    %3042 = vmatmul.mubr.bf16.gmra.mrb[0].mxu0 %v2534
    %v3043 = vpop.f32.mrb[0].mxu0
    %v3044 = vadd.f32 %v3001, %v3043
    %v3045 = vpop.f32.mrb[0].mxu0
    %v3046 = vadd.f32 %v3003, %v3045
    %v3047 = vpop.f32.mrb[0].mxu0
    %v3048 = vadd.f32 %v3005, %v3047
    %v3049 = vpop.f32.mrb[0].mxu0
    %v3050 = vadd.f32 %v3007, %v3049
    %3051 = vdwg.mxu0
    %3052 = vmatprep.subr.bf16.mxu0 %v1755
    %3053 = vmatpush1.bf16.msra.mxu0 %v1754
    %3054 = vmatprep.subr.bf16.mxu0 %v1763
    %3055 = vmatpush1.bf16.msra.mxu0 %v1762
    %3056 = vmatprep.subr.bf16.mxu0 %v1771
    %3057 = vmatpush1.bf16.msra.mxu0 %v1770
    %3058 = vmatprep.subr.bf16.mxu0 %v1779
    %3059 = vmatpush1.bf16.msra.mxu0 %v1778
    %3060 = vmatprep.subr.bf16.mxu0 %v1787
    %3061 = vmatpush1.bf16.msra.mxu0 %v1786
    %3062 = vmatprep.subr.bf16.mxu0 %v1795
    %3063 = vmatpush1.bf16.msra.mxu0 %v1794
    %3064 = vmatprep.subr.bf16.mxu0 %v1803
    %3065 = vmatpush1.bf16.msra.mxu0 %v1802
    %3066 = vmatprep.subr.bf16.mxu0 %v1811
    %3067 = vmatpush1.bf16.msra.mxu0 %v1810
    %3068 = vmatprep.subr.bf16.mxu0 %v1819
    %3069 = vmatpush1.bf16.msra.mxu0 %v1818
    %3070 = vmatprep.subr.bf16.mxu0 %v1827
    %3071 = vmatpush1.bf16.msra.mxu0 %v1826
    %3072 = vmatprep.subr.bf16.mxu0 %v1835
    %3073 = vmatpush1.bf16.msra.mxu0 %v1834
    %3074 = vmatprep.subr.bf16.mxu0 %v1843
    %3075 = vmatpush1.bf16.msra.mxu0 %v1842
    %3076 = vmatprep.subr.bf16.mxu0 %v1851
    %3077 = vmatpush1.bf16.msra.mxu0 %v1850
    %3078 = vmatprep.subr.bf16.mxu0 %v1859
    %3079 = vmatpush1.bf16.msra.mxu0 %v1858
    %3080 = vmatprep.subr.bf16.mxu0 %v1867
    %3081 = vmatpush1.bf16.msra.mxu0 %v1866
    %3082 = vmatprep.subr.bf16.mxu0 %v1875
    %3083 = vmatpush1.bf16.msra.mxu0 %v1874
    %3084 = vmatprep.mubr.bf16.mxu0 %v132
    %3085 = vmatmul.mubr.bf16.gmra.mrb[0].mxu0 %v131
    %v3086 = vpop.f32.mrb[0].mxu0
    %v3087 = vadd.f32 %v559, %v3086
    %v3088 = vpop.f32.mrb[0].mxu0
    %v3089 = vadd.f32 %v563, %v3088
    %v3090 = vpop.f32.mrb[0].mxu0
    %v3091 = vadd.f32 %v559, %v3090
    %v3092 = vpop.f32.mrb[0].mxu0
    %v3093 = vadd.f32 %v563, %v3092
    %3094 = vdwg.mxu0
    %3095 = vmatprep.subr.bf16.mxu0 %v1883
    %3096 = vmatpush1.bf16.msra.mxu0 %v1882
    %3097 = vmatprep.subr.bf16.mxu0 %v1891
    %3098 = vmatpush1.bf16.msra.mxu0 %v1890
    %3099 = vmatprep.subr.bf16.mxu0 %v1899
    %3100 = vmatpush1.bf16.msra.mxu0 %v1898
    %3101 = vmatprep.subr.bf16.mxu0 %v1907
    %3102 = vmatpush1.bf16.msra.mxu0 %v1906
    %3103 = vmatprep.subr.bf16.mxu0 %v1915
    %3104 = vmatpush1.bf16.msra.mxu0 %v1914
    %3105 = vmatprep.subr.bf16.mxu0 %v1923
    %3106 = vmatpush1.bf16.msra.mxu0 %v1922
    %3107 = vmatprep.subr.bf16.mxu0 %v1931
    %3108 = vmatpush1.bf16.msra.mxu0 %v1930
    %3109 = vmatprep.subr.bf16.mxu0 %v1939
    %3110 = vmatpush1.bf16.msra.mxu0 %v1938
    %3111 = vmatprep.subr.bf16.mxu0 %v1947
    %3112 = vmatpush1.bf16.msra.mxu0 %v1946
    %3113 = vmatprep.subr.bf16.mxu0 %v1955
    %3114 = vmatpush1.bf16.msra.mxu0 %v1954
    %3115 = vmatprep.subr.bf16.mxu0 %v1963
    %3116 = vmatpush1.bf16.msra.mxu0 %v1962
    %3117 = vmatprep.subr.bf16.mxu0 %v1971
    %3118 = vmatpush1.bf16.msra.mxu0 %v1970
    %3119 = vmatprep.subr.bf16.mxu0 %v1979
    %3120 = vmatpush1.bf16.msra.mxu0 %v1978
    %3121 = vmatprep.subr.bf16.mxu0 %v1987
    %3122 = vmatpush1.bf16.msra.mxu0 %v1986
    %3123 = vmatprep.subr.bf16.mxu0 %v1995
    %3124 = vmatpush1.bf16.msra.mxu0 %v1994
    %3125 = vmatprep.subr.bf16.mxu0 %v2003
    %3126 = vmatpush1.bf16.msra.mxu0 %v2002
    %3127 = vmatprep.mubr.bf16.mxu0 %v134
    %3128 = vmatmul.mubr.bf16.gmra.mrb[0].mxu0 %v133
    %v3129 = vpop.f32.mrb[0].mxu0
    %v3130 = vadd.f32 %v3087, %v3129
    %v3131 = vpop.f32.mrb[0].mxu0
    %v3132 = vadd.f32 %v3089, %v3131
    %v3133 = vpop.f32.mrb[0].mxu0
    %v3134 = vadd.f32 %v3091, %v3133
    %v3135 = vpop.f32.mrb[0].mxu0
    %v3136 = vadd.f32 %v3093, %v3135
    %3137 = vdwg.mxu0
    %3138 = vmatprep.subr.bf16.mxu0 %v2011
    %3139 = vmatpush1.bf16.msra.mxu0 %v2010
    %3140 = vmatprep.subr.bf16.mxu0 %v2019
    %3141 = vmatpush1.bf16.msra.mxu0 %v2018
    %3142 = vmatprep.subr.bf16.mxu0 %v2027
    %3143 = vmatpush1.bf16.msra.mxu0 %v2026
    %3144 = vmatprep.subr.bf16.mxu0 %v2035
    %3145 = vmatpush1.bf16.msra.mxu0 %v2034
    %3146 = vmatprep.subr.bf16.mxu0 %v2043
    %3147 = vmatpush1.bf16.msra.mxu0 %v2042
    %3148 = vmatprep.subr.bf16.mxu0 %v2051
    %3149 = vmatpush1.bf16.msra.mxu0 %v2050
    %3150 = vmatprep.subr.bf16.mxu0 %v2059
    %3151 = vmatpush1.bf16.msra.mxu0 %v2058
    %3152 = vmatprep.subr.bf16.mxu0 %v2067
    %3153 = vmatpush1.bf16.msra.mxu0 %v2066
    %3154 = vmatprep.subr.bf16.mxu0 %v2075
    %3155 = vmatpush1.bf16.msra.mxu0 %v2074
    %3156 = vmatprep.subr.bf16.mxu0 %v2083
    %3157 = vmatpush1.bf16.msra.mxu0 %v2082
    %3158 = vmatprep.subr.bf16.mxu0 %v2091
    %3159 = vmatpush1.bf16.msra.mxu0 %v2090
    %3160 = vmatprep.subr.bf16.mxu0 %v2099
    %3161 = vmatpush1.bf16.msra.mxu0 %v2098
    %3162 = vmatprep.subr.bf16.mxu0 %v2107
    %3163 = vmatpush1.bf16.msra.mxu0 %v2106
    %3164 = vmatprep.subr.bf16.mxu0 %v2115
    %3165 = vmatpush1.bf16.msra.mxu0 %v2114
    %3166 = vmatprep.subr.bf16.mxu0 %v2123
    %3167 = vmatpush1.bf16.msra.mxu0 %v2122
    %3168 = vmatprep.subr.bf16.mxu0 %v2131
    %3169 = vmatpush1.bf16.msra.mxu0 %v2130
    %3170 = vmatprep.mubr.bf16.mxu0 %v136
    %3171 = vmatmul.mubr.bf16.gmra.mrb[0].mxu0 %v135
    %v3172 = vpop.f32.mrb[0].mxu0
    %v3173 = vadd.f32 %v3130, %v3172
    %v3174 = vpop.f32.mrb[0].mxu0
    %v3175 = vadd.f32 %v3132, %v3174
    %v3176 = vpop.f32.mrb[0].mxu0
    %v3177 = vadd.f32 %v3134, %v3176
    %v3178 = vpop.f32.mrb[0].mxu0
    %v3179 = vadd.f32 %v3136, %v3178
    %3180 = vdwg.mxu0
    %3181 = vmatprep.subr.bf16.mxu0 %v2139
    %3182 = vmatpush1.bf16.msra.mxu0 %v2138
    %3183 = vmatprep.subr.bf16.mxu0 0
    %3184 = vmatpush1.bf16.msra.mxu0 0
    %3185 = vmatprep.subr.bf16.mxu0 0
    %3186 = vmatpush1.bf16.msra.mxu0 0
    %3187 = vmatprep.subr.bf16.mxu0 0
    %3188 = vmatpush1.bf16.msra.mxu0 0
    %3189 = vmatprep.subr.bf16.mxu0 0
    %3190 = vmatpush1.bf16.msra.mxu0 0
    %3191 = vmatprep.subr.bf16.mxu0 0
    %3192 = vmatpush1.bf16.msra.mxu0 0
    %3193 = vmatprep.subr.bf16.mxu0 0
    %3194 = vmatpush1.bf16.msra.mxu0 0
    %3195 = vmatprep.subr.bf16.mxu0 0
    %3196 = vmatpush1.bf16.msra.mxu0 0
    %3197 = vmatprep.subr.bf16.mxu0 0
    %3198 = vmatpush1.bf16.msra.mxu0 0
    %3199 = vmatprep.subr.bf16.mxu0 0
    %3200 = vmatpush1.bf16.msra.mxu0 0
    %3201 = vmatprep.subr.bf16.mxu0 0
    %3202 = vmatpush1.bf16.msra.mxu0 0
    %3203 = vmatprep.subr.bf16.mxu0 0
    %3204 = vmatpush1.bf16.msra.mxu0 0
    %3205 = vmatprep.subr.bf16.mxu0 0
    %3206 = vmatpush1.bf16.msra.mxu0 0
    %3207 = vmatprep.subr.bf16.mxu0 0
    %3208 = vmatpush1.bf16.msra.mxu0 0
    %3209 = vmatprep.subr.bf16.mxu0 0
    %3210 = vmatpush1.bf16.msra.mxu0 0
    %3211 = vmatprep.subr.bf16.mxu0 0
    %3212 = vmatpush1.bf16.msra.mxu0 0
    %3213 = vmatprep.mubr.bf16.mxu0 0
    %3214 = vmatmul.mubr.bf16.gmra.mrb[0].mxu0 %v2534
    %v3215 = vpop.f32.mrb[0].mxu0
    %v3216 = vadd.f32 %v3173, %v3215
    %v3217 = vpop.f32.mrb[0].mxu0
    %v3218 = vadd.f32 %v3175, %v3217
    %v3219 = vpop.f32.mrb[0].mxu0
    %v3220 = vadd.f32 %v3177, %v3219
    %v3221 = vpop.f32.mrb[0].mxu0
    %v3222 = vadd.f32 %v3179, %v3221
    %3223 = vdwg.mxu0
    %v3224 = vmax.f32 %v2700, 0.0
    %v3225 = vmax.f32 %v2702, 0.0
    %v3226 = vmax.f32 %v2872, 0.0
    %v3227 = vmax.f32 %v2874, 0.0
    %v3228 = vmax.f32 %v3044, 0.0
    %v3229 = vmax.f32 %v3046, 0.0
    %v3230 = vmax.f32 %v3216, 0.0
    %v3231 = vmax.f32 %v3218, 0.0
    %v3232 = vmax.f32 %v2704, 0.0
    %v3233 = vmax.f32 %v2706, 0.0
    %v3234 = vmax.f32 %v2876, 0.0
    %v3235 = vmax.f32 %v2878, 0.0
    %v3236 = vmax.f32 %v3048, 0.0
    %v3237 = vmax.f32 %v3050, 0.0
    %v3238 = vmax.f32 %v3220, 0.0
    %v3239 = vmax.f32 %v3222, 0.0
    %v3240 = vpack.c.bf16 %v3232, %v3224
    %v3241 = vpack.c.bf16 %v3233, %v3225
    %v3242 = vpack.c.bf16 %v3234, %v3226
    %v3243 = vpack.c.bf16 %v3235, %v3227
    %v3244 = vpack.c.bf16 %v3236, %v3228
    %v3245 = vpack.c.bf16 %v3237, %v3229
    %v3246 = vpack.c.bf16 %v3238, %v3230
    %v3247 = vpack.c.bf16 %v3239, %v3231
    %v3248 = vld [vmem:[#allocation8] sm:$0xff]
    %v3249 = vld [vmem:[#allocation8 + $0x8] sm:$0xf]
    %v3250 = vld [vmem:[#allocation8 + $0xc] sm:$0xff]
    %v3251 = vld [vmem:[#allocation8 + $0x14] sm:$0xf]
    %v3252 = vld [vmem:[#allocation8 + $0x18] sm:$0xff]
    %v3253 = vld [vmem:[#allocation8 + $0x20] sm:$0xf]
    %v3254 = vld [vmem:[#allocation8 + $0x24] sm:$0xff]
    %v3255 = vld [vmem:[#allocation8 + $0x2c] sm:$0xf]
    %v3256 = vld [vmem:[#allocation8 + $0x30] sm:$0xff]
    %v3257 = vld [vmem:[#allocation8 + $0x38] sm:$0xf]
    %v3258 = vld [vmem:[#allocation8 + $0x3c] sm:$0xff]
    %v3259 = vld [vmem:[#allocation8 + $0x44] sm:$0xf]
    %v3260 = vld [vmem:[#allocation8 + $0x48] sm:$0xff]
    %v3261 = vld [vmem:[#allocation8 + $0x50] sm:$0xf]
    %v3262 = vld [vmem:[#allocation8 + $0x54] sm:$0xff]
    %v3263 = vld [vmem:[#allocation8 + $0x5c] sm:$0xf]
    %v3264 = vld [vmem:[#allocation8 + $0x60] sm:$0xff]
    %v3265 = vld [vmem:[#allocation8 + $0x68] sm:$0xf]
    %v3266 = vld [vmem:[#allocation8 + $0x6c] sm:$0xff]
    %v3267 = vld [vmem:[#allocation8 + $0x74] sm:$0xf]
    %v3268 = vld [vmem:[#allocation8 + $0x78] sm:$0xff]
    %v3269 = vld [vmem:[#allocation8 + $0x80] sm:$0xf]
    %v3270 = vld [vmem:[#allocation8 + $0x84] sm:$0xff]
    %v3271 = vld [vmem:[#allocation8 + $0x8c] sm:$0xf]
    %v3272 = vld [vmem:[#allocation8 + $0x90] sm:$0xff]
    %v3273 = vld [vmem:[#allocation8 + $0x98] sm:$0xf]
    %v3274 = vld [vmem:[#allocation8 + $0x9c] sm:$0xff]
    %v3275 = vld [vmem:[#allocation8 + $0xa4] sm:$0xf]
    %v3276 = vld [vmem:[#allocation8 + $0xa8] sm:$0xff]
    %v3277 = vld [vmem:[#allocation8 + $0xb0] sm:$0xf]
    %v3278 = vld [vmem:[#allocation8 + $0xb4] sm:$0xff]
    %v3279 = vld [vmem:[#allocation8 + $0xbc] sm:$0xf]
    %v3280 = vld [vmem:[#allocation8 + $0xc0] sm:$0xff]
    %v3281 = vld [vmem:[#allocation8 + $0xc8] sm:$0xf]
    %v3282 = vld [vmem:[#allocation8 + $0xcc] sm:$0xff]
    %v3283 = vld [vmem:[#allocation8 + $0xd4] sm:$0xf]
    %v3284 = vld [vmem:[#allocation8 + $0xd8] sm:$0xff]
    %v3285 = vld [vmem:[#allocation8 + $0xe0] sm:$0xf]
    %v3286 = vld [vmem:[#allocation8 + $0xe4] sm:$0xff]
    %v3287 = vld [vmem:[#allocation8 + $0xec] sm:$0xf]
    %v3288 = vld [vmem:[#allocation8 + $0xf0] sm:$0xff]
    %v3289 = vld [vmem:[#allocation8 + $0xf8] sm:$0xf]
    %v3290 = vld [vmem:[#allocation8 + $0xfc] sm:$0xff]
    %v3291 = vld [vmem:[#allocation8 + $0x104] sm:$0xf]
    %v3292 = vld [vmem:[#allocation8 + $0x108] sm:$0xff]
    %v3293 = vld [vmem:[#allocation8 + $0x110] sm:$0xf]
    %v3294 = vld [vmem:[#allocation8 + $0x114] sm:$0xff]
    %v3295 = vld [vmem:[#allocation8 + $0x11c] sm:$0xf]
    %v3296 = vld [vmem:[#allocation8 + $0x120] sm:$0xff]
    %v3297 = vld [vmem:[#allocation8 + $0x128] sm:$0xf]
    %v3298 = vld [vmem:[#allocation8 + $0x12c] sm:$0xff]
    %v3299 = vld [vmem:[#allocation8 + $0x134] sm:$0xf]
    %v3300 = vld [vmem:[#allocation8 + $0x138] sm:$0xff]
    %v3301 = vld [vmem:[#allocation8 + $0x140] sm:$0xf]
    %v3302 = vld [vmem:[#allocation8 + $0x144] sm:$0xff]
    %v3303 = vld [vmem:[#allocation8 + $0x14c] sm:$0xf]
    %v3304 = vld [vmem:[#allocation8 + $0x150] sm:$0xff]
    %v3305 = vld [vmem:[#allocation8 + $0x158] sm:$0xf]
    %v3306 = vld [vmem:[#allocation8 + $0x15c] sm:$0xff]
    %v3307 = vld [vmem:[#allocation8 + $0x164] sm:$0xf]
    %v3308 = vld [vmem:[#allocation8 + $0x168] sm:$0xff]
    %v3309 = vld [vmem:[#allocation8 + $0x170] sm:$0xf]
    %v3310 = vld [vmem:[#allocation8 + $0x174] sm:$0xff]
    %v3311 = vld [vmem:[#allocation8 + $0x17c] sm:$0xf]
    %v3312 = vld [vmem:[#allocation8 + $0x180] sm:$0xff]
    %v3313 = vld [vmem:[#allocation8 + $0x188] sm:$0xf]
    %v3314 = vld [vmem:[#allocation8 + $0x18c] sm:$0xff]
    %v3315 = vld [vmem:[#allocation8 + $0x194] sm:$0xf]
    %v3316 = vld [vmem:[#allocation8 + $0x198] sm:$0xff]
    %v3317 = vld [vmem:[#allocation8 + $0x1a0] sm:$0xf]
    %v3318 = vld [vmem:[#allocation8 + $0x1a4] sm:$0xff]
    %v3319 = vld [vmem:[#allocation8 + $0x1ac] sm:$0xf]
    %v3320 = vld [vmem:[#allocation8 + $0x1b0] sm:$0xff]
    %v3321 = vld [vmem:[#allocation8 + $0x1b8] sm:$0xf]
    %v3322 = vld [vmem:[#allocation8 + $0x1bc] sm:$0xff]
    %v3323 = vld [vmem:[#allocation8 + $0x1c4] sm:$0xf]
    %v3324 = vld [vmem:[#allocation8 + $0x1c8] sm:$0xff]
    %v3325 = vld [vmem:[#allocation8 + $0x1d0] sm:$0xf]
    %v3326 = vld [vmem:[#allocation8 + $0x1d4] sm:$0xff]
    %v3327 = vld [vmem:[#allocation8 + $0x1dc] sm:$0xf]
    %v3328 = vld [vmem:[#allocation8 + $0x1e0] sm:$0xff]
    %v3329 = vld [vmem:[#allocation8 + $0x1e8] sm:$0xf]
    %v3330 = vld [vmem:[#allocation8 + $0x1ec] sm:$0xff]
    %v3331 = vld [vmem:[#allocation8 + $0x1f4] sm:$0xf]
    %v3332 = vld [vmem:[#allocation8 + $0x1f8] sm:$0xff]
    %v3333 = vld [vmem:[#allocation8 + $0x200] sm:$0xf]
    %v3334 = vld [vmem:[#allocation8 + $0x204] sm:$0xff]
    %v3335 = vld [vmem:[#allocation8 + $0x20c] sm:$0xf]
    %v3336 = vld [vmem:[#allocation8 + $0x210] sm:$0xff]
    %v3337 = vld [vmem:[#allocation8 + $0x218] sm:$0xf]
    %v3338 = vld [vmem:[#allocation8 + $0x21c] sm:$0xff]
    %v3339 = vld [vmem:[#allocation8 + $0x224] sm:$0xf]
    %v3340 = vld [vmem:[#allocation8 + $0x228] sm:$0xff]
    %v3341 = vld [vmem:[#allocation8 + $0x230] sm:$0xf]
    %v3342 = vld [vmem:[#allocation8 + $0x234] sm:$0xff]
    %v3343 = vld [vmem:[#allocation8 + $0x23c] sm:$0xf]
    %v3344 = vld [vmem:[#allocation8 + $0x240] sm:$0xff]
    %v3345 = vld [vmem:[#allocation8 + $0x248] sm:$0xf]
    %v3346 = vld [vmem:[#allocation8 + $0x24c] sm:$0xff]
    %v3347 = vld [vmem:[#allocation8 + $0x254] sm:$0xf]
    %v3348 = vld [vmem:[#allocation8 + $0x258] sm:$0xff]
    %v3349 = vld [vmem:[#allocation8 + $0x260] sm:$0xf]
    %v3350 = vld [vmem:[#allocation8 + $0x264] sm:$0xff]
    %v3351 = vld [vmem:[#allocation8 + $0x26c] sm:$0xf]
    %v3352 = vld [vmem:[#allocation8 + $0x270] sm:$0xff]
    %v3353 = vld [vmem:[#allocation8 + $0x278] sm:$0xf]
    %v3354 = vld [vmem:[#allocation8 + $0x27c] sm:$0xff]
    %v3355 = vld [vmem:[#allocation8 + $0x284] sm:$0xf]
    %v3356 = vld [vmem:[#allocation8 + $0x288] sm:$0xff]
    %v3357 = vld [vmem:[#allocation8 + $0x290] sm:$0xf]
    %v3358 = vld [vmem:[#allocation8 + $0x294] sm:$0xff]
    %v3359 = vld [vmem:[#allocation8 + $0x29c] sm:$0xf]
    %v3360 = vld [vmem:[#allocation8 + $0x2a0] sm:$0xff]
    %v3361 = vld [vmem:[#allocation8 + $0x2a8] sm:$0xf]
    %v3362 = vld [vmem:[#allocation8 + $0x2ac] sm:$0xff]
    %v3363 = vld [vmem:[#allocation8 + $0x2b4] sm:$0xf]
    %v3364 = vld [vmem:[#allocation8 + $0x2b8] sm:$0xff]
    %v3365 = vld [vmem:[#allocation8 + $0x2c0] sm:$0xf]
    %v3366 = vld [vmem:[#allocation8 + $0x2c4] sm:$0xff]
    %v3367 = vld [vmem:[#allocation8 + $0x2cc] sm:$0xf]
    %v3368 = vld [vmem:[#allocation8 + $0x2d0] sm:$0xff]
    %v3369 = vld [vmem:[#allocation8 + $0x2d8] sm:$0xf]
    %v3370 = vld [vmem:[#allocation8 + $0x2dc] sm:$0xff]
    %v3371 = vld [vmem:[#allocation8 + $0x2e4] sm:$0xf]
    %v3372 = vld [vmem:[#allocation8 + $0x2e8] sm:$0xff]
    %v3373 = vld [vmem:[#allocation8 + $0x2f0] sm:$0xf]
    %v3374 = vld [vmem:[#allocation8 + $0x2f4] sm:$0xff]
    %v3375 = vld [vmem:[#allocation8 + $0x2fc] sm:$0xf]
    %v3376 = vld [vmem:[#allocation8 + $0x300] sm:$0xff]
    %v3377 = vld [vmem:[#allocation8 + $0x308] sm:$0xf]
    %v3378 = vld [vmem:[#allocation8 + $0x30c] sm:$0xff]
    %v3379 = vld [vmem:[#allocation8 + $0x314] sm:$0xf]
    %v3380 = vld [vmem:[#allocation8 + $0x318] sm:$0xff]
    %v3381 = vld [vmem:[#allocation8 + $0x320] sm:$0xf]
    %v3382 = vld [vmem:[#allocation8 + $0x324] sm:$0xff]
    %v3383 = vld [vmem:[#allocation8 + $0x32c] sm:$0xf]
    %v3384 = vld [vmem:[#allocation8 + $0x330] sm:$0xff]
    %v3385 = vld [vmem:[#allocation8 + $0x338] sm:$0xf]
    %v3386 = vld [vmem:[#allocation8 + $0x33c] sm:$0xff]
    %v3387 = vld [vmem:[#allocation8 + $0x344] sm:$0xf]
    %v3388 = vld [vmem:[#allocation8 + $0x348] sm:$0xff]
    %v3389 = vld [vmem:[#allocation8 + $0x350] sm:$0xf]
    %v3390 = vld [vmem:[#allocation8 + $0x354] sm:$0xff]
    %v3391 = vld [vmem:[#allocation8 + $0x35c] sm:$0xf]
    %v3392 = vld [vmem:[#allocation8 + $0x360] sm:$0xff]
    %v3393 = vld [vmem:[#allocation8 + $0x368] sm:$0xf]
    %v3394 = vld [vmem:[#allocation8 + $0x36c] sm:$0xff]
    %v3395 = vld [vmem:[#allocation8 + $0x374] sm:$0xf]
    %v3396 = vld [vmem:[#allocation8 + $0x378] sm:$0xff]
    %v3397 = vld [vmem:[#allocation8 + $0x380] sm:$0xf]
    %v3398 = vld [vmem:[#allocation8 + $0x384] sm:$0xff]
    %v3399 = vld [vmem:[#allocation8 + $0x38c] sm:$0xf]
    %v3400 = vld [vmem:[#allocation8 + $0x390] sm:$0xff]
    %v3401 = vld [vmem:[#allocation8 + $0x398] sm:$0xf]
    %v3402 = vld [vmem:[#allocation8 + $0x39c] sm:$0xff]
    %v3403 = vld [vmem:[#allocation8 + $0x3a4] sm:$0xf]
    %v3404 = vld [vmem:[#allocation8 + $0x3a8] sm:$0xff]
    %v3405 = vld [vmem:[#allocation8 + $0x3b0] sm:$0xf]
    %v3406 = vld [vmem:[#allocation8 + $0x3b4] sm:$0xff]
    %v3407 = vld [vmem:[#allocation8 + $0x3bc] sm:$0xf]
    %v3408 = vld [vmem:[#allocation8 + $0x3c0] sm:$0xff]
    %v3409 = vld [vmem:[#allocation8 + $0x3c8] sm:$0xf]
    %v3410 = vld [vmem:[#allocation8 + $0x3cc] sm:$0xff]
    %v3411 = vld [vmem:[#allocation8 + $0x3d4] sm:$0xf]
    %v3412 = vld [vmem:[#allocation8 + $0x3d8] sm:$0xff]
    %v3413 = vld [vmem:[#allocation8 + $0x3e0] sm:$0xf]
    %v3414 = vld [vmem:[#allocation8 + $0x3e4] sm:$0xff]
    %v3415 = vld [vmem:[#allocation8 + $0x3ec] sm:$0xf]
    %v3416 = vld [vmem:[#allocation8 + $0x3f0] sm:$0xff]
    %v3417 = vld [vmem:[#allocation8 + $0x3f8] sm:$0xf]
    %v3418 = vld [vmem:[#allocation8 + $0x3fc] sm:$0xff]
    %v3419 = vld [vmem:[#allocation8 + $0x404] sm:$0xf]
    %v3420 = vld [vmem:[#allocation8 + $0x408] sm:$0xff]
    %v3421 = vld [vmem:[#allocation8 + $0x410] sm:$0xf]
    %v3422 = vld [vmem:[#allocation8 + $0x414] sm:$0xff]
    %v3423 = vld [vmem:[#allocation8 + $0x41c] sm:$0xf]
    %v3424 = vld [vmem:[#allocation8 + $0x420] sm:$0xff]
    %v3425 = vld [vmem:[#allocation8 + $0x428] sm:$0xf]
    %v3426 = vld [vmem:[#allocation8 + $0x42c] sm:$0xff]
    %v3427 = vld [vmem:[#allocation8 + $0x434] sm:$0xf]
    %v3428 = vld [vmem:[#allocation8 + $0x438] sm:$0xff]
    %v3429 = vld [vmem:[#allocation8 + $0x440] sm:$0xf]
    %v3430 = vld [vmem:[#allocation8 + $0x444] sm:$0xff]
    %v3431 = vld [vmem:[#allocation8 + $0x44c] sm:$0xf]
    %v3432 = vld [vmem:[#allocation8 + $0x450] sm:$0xff]
    %v3433 = vld [vmem:[#allocation8 + $0x458] sm:$0xf]
    %v3434 = vld [vmem:[#allocation8 + $0x45c] sm:$0xff]
    %v3435 = vld [vmem:[#allocation8 + $0x464] sm:$0xf]
    %v3436 = vld [vmem:[#allocation8 + $0x468] sm:$0xff]
    %v3437 = vld [vmem:[#allocation8 + $0x470] sm:$0xf]
    %v3438 = vld [vmem:[#allocation8 + $0x474] sm:$0xff]
    %v3439 = vld [vmem:[#allocation8 + $0x47c] sm:$0xf]
    %v3440 = vld [vmem:[#allocation8 + $0x480] sm:$0xff]
    %v3441 = vld [vmem:[#allocation8 + $0x488] sm:$0xf]
    %v3442 = vld [vmem:[#allocation8 + $0x48c] sm:$0xff]
    %v3443 = vld [vmem:[#allocation8 + $0x494] sm:$0xf]
    %v3444 = vld [vmem:[#allocation8 + $0x498] sm:$0xff]
    %v3445 = vld [vmem:[#allocation8 + $0x4a0] sm:$0xf]
    %v3446 = vld [vmem:[#allocation8 + $0x4a4] sm:$0xff]
    %v3447 = vld [vmem:[#allocation8 + $0x4ac] sm:$0xf]
    %v3448 = vld [vmem:[#allocation8 + $0x4b0] sm:$0xff]
    %v3449 = vld [vmem:[#allocation8 + $0x4b8] sm:$0xf]
    %v3450 = vld [vmem:[#allocation8 + $0x4bc] sm:$0xff]
    %v3451 = vld [vmem:[#allocation8 + $0x4c4] sm:$0xf]
    %v3452 = vld [vmem:[#allocation8 + $0x4c8] sm:$0xff]
    %v3453 = vld [vmem:[#allocation8 + $0x4d0] sm:$0xf]
    %v3454 = vld [vmem:[#allocation8 + $0x4d4] sm:$0xff]
    %v3455 = vld [vmem:[#allocation8 + $0x4dc] sm:$0xf]
    %v3456 = vld [vmem:[#allocation8 + $0x4e0] sm:$0xff]
    %v3457 = vld [vmem:[#allocation8 + $0x4e8] sm:$0xf]
    %v3458 = vld [vmem:[#allocation8 + $0x4ec] sm:$0xff]
    %v3459 = vld [vmem:[#allocation8 + $0x4f4] sm:$0xf]
    %v3460 = vld [vmem:[#allocation8 + $0x4f8] sm:$0xff]
    %v3461 = vld [vmem:[#allocation8 + $0x500] sm:$0xf]
    %v3462 = vld [vmem:[#allocation8 + $0x504] sm:$0xff]
    %v3463 = vld [vmem:[#allocation8 + $0x50c] sm:$0xf]
    %v3464 = vld [vmem:[#allocation8 + $0x510] sm:$0xff]
    %v3465 = vld [vmem:[#allocation8 + $0x518] sm:$0xf]
    %v3466 = vld [vmem:[#allocation8 + $0x51c] sm:$0xff]
    %v3467 = vld [vmem:[#allocation8 + $0x524] sm:$0xf]
    %v3468 = vld [vmem:[#allocation8 + $0x528] sm:$0xff]
    %v3469 = vld [vmem:[#allocation8 + $0x530] sm:$0xf]
    %v3470 = vld [vmem:[#allocation8 + $0x534] sm:$0xff]
    %v3471 = vld [vmem:[#allocation8 + $0x53c] sm:$0xf]
    %v3472 = vld [vmem:[#allocation8 + $0x540] sm:$0xff]
    %v3473 = vld [vmem:[#allocation8 + $0x548] sm:$0xf]
    %v3474 = vld [vmem:[#allocation8 + $0x54c] sm:$0xff]
    %v3475 = vld [vmem:[#allocation8 + $0x554] sm:$0xf]
    %v3476 = vld [vmem:[#allocation8 + $0x558] sm:$0xff]
    %v3477 = vld [vmem:[#allocation8 + $0x560] sm:$0xf]
    %v3478 = vld [vmem:[#allocation8 + $0x564] sm:$0xff]
    %v3479 = vld [vmem:[#allocation8 + $0x56c] sm:$0xf]
    %v3480 = vld [vmem:[#allocation8 + $0x570] sm:$0xff]
    %v3481 = vld [vmem:[#allocation8 + $0x578] sm:$0xf]
    %v3482 = vld [vmem:[#allocation8 + $0x57c] sm:$0xff]
    %v3483 = vld [vmem:[#allocation8 + $0x584] sm:$0xf]
    %v3484 = vld [vmem:[#allocation8 + $0x588] sm:$0xff]
    %v3485 = vld [vmem:[#allocation8 + $0x590] sm:$0xf]
    %v3486 = vld [vmem:[#allocation8 + $0x594] sm:$0xff]
    %v3487 = vld [vmem:[#allocation8 + $0x59c] sm:$0xf]
    %v3488 = vld [vmem:[#allocation8 + $0x5a0] sm:$0xff]
    %v3489 = vld [vmem:[#allocation8 + $0x5a8] sm:$0xf]
    %v3490 = vld [vmem:[#allocation8 + $0x5ac] sm:$0xff]
    %v3491 = vld [vmem:[#allocation8 + $0x5b4] sm:$0xf]
    %v3492 = vld [vmem:[#allocation8 + $0x5b8] sm:$0xff]
    %v3493 = vld [vmem:[#allocation8 + $0x5c0] sm:$0xf]
    %v3494 = vld [vmem:[#allocation8 + $0x5c4] sm:$0xff]
    %v3495 = vld [vmem:[#allocation8 + $0x5cc] sm:$0xf]
    %v3496 = vld [vmem:[#allocation8 + $0x5d0] sm:$0xff]
    %v3497 = vld [vmem:[#allocation8 + $0x5d8] sm:$0xf]
    %v3498 = vld [vmem:[#allocation8 + $0x5dc] sm:$0xff]
    %v3499 = vld [vmem:[#allocation8 + $0x5e4] sm:$0xf]
    %v3500 = vld [vmem:[#allocation8 + $0x5e8] sm:$0xff]
    %v3501 = vld [vmem:[#allocation8 + $0x5f0] sm:$0xf]
    %v3502 = vld [vmem:[#allocation8 + $0x5f4] sm:$0xff]
    %v3503 = vld [vmem:[#allocation8 + $0x5fc] sm:$0xf]
    %v3504 = vld [vmem:[#allocation10] sm:$0x7]
    %v3506 = vlaneseq
    %v3507 = vshrl.u32 %v3506, 7
    %v3508 = vsub.s32 0, %v3507
    %v3509 = vrot.slane %v3504, %v3508
    %v3510 = vlaneseq
    %v3511 = vshrl.u32 %v3510, 7
    %v3512 = vsub.s32 1, %v3511
    %v3513 = vrot.slane %v3504, %v3512
    %v3514 = vlaneseq
    %v3515 = vshrl.u32 %v3514, 7
    %v3516 = vsub.s32 2, %v3515
    %v3517 = vrot.slane %v3504, %v3516
    %v3777 = vunpack.c.l.b16 %v3248
    %v3778 = vunpack.c.h.b16 %v3248
    %v3779 = vunpack.c.l.b16 %v3249
    %v3780 = vunpack.c.l.b16 %v3250
    %v3781 = vunpack.c.h.b16 %v3250
    %v3782 = vunpack.c.l.b16 %v3251
    %v3783 = vunpack.c.l.b16 %v3252
    %v3784 = vunpack.c.h.b16 %v3252
    %v3785 = vunpack.c.l.b16 %v3253
    %v3786 = vunpack.c.l.b16 %v3254
    %v3787 = vunpack.c.h.b16 %v3254
    %v3788 = vunpack.c.l.b16 %v3255
    %v3789 = vunpack.c.l.b16 %v3256
    %v3790 = vunpack.c.h.b16 %v3256
    %v3791 = vunpack.c.l.b16 %v3257
    %v3792 = vunpack.c.l.b16 %v3258
    %v3793 = vunpack.c.h.b16 %v3258
    %v3794 = vunpack.c.l.b16 %v3259
    %v3795 = vunpack.c.l.b16 %v3260
    %v3796 = vunpack.c.h.b16 %v3260
    %v3797 = vunpack.c.l.b16 %v3261
    %v3798 = vunpack.c.l.b16 %v3262
    %v3799 = vunpack.c.h.b16 %v3262
    %v3800 = vunpack.c.l.b16 %v3263
    %v3801 = vunpack.c.l.b16 %v3264
    %v3802 = vunpack.c.h.b16 %v3264
    %v3803 = vunpack.c.l.b16 %v3265
    %v3804 = vunpack.c.l.b16 %v3266
    %v3805 = vunpack.c.h.b16 %v3266
    %v3806 = vunpack.c.l.b16 %v3267
    %v3807 = vunpack.c.l.b16 %v3268
    %v3808 = vunpack.c.h.b16 %v3268
    %v3809 = vunpack.c.l.b16 %v3269
    %v3810 = vunpack.c.l.b16 %v3270
    %v3811 = vunpack.c.h.b16 %v3270
    %v3812 = vunpack.c.l.b16 %v3271
    %v3813 = vunpack.c.l.b16 %v3272
    %v3814 = vunpack.c.h.b16 %v3272
    %v3815 = vunpack.c.l.b16 %v3273
    %v3816 = vunpack.c.l.b16 %v3274
    %v3817 = vunpack.c.h.b16 %v3274
    %v3818 = vunpack.c.l.b16 %v3275
    %v3819 = vunpack.c.l.b16 %v3276
    %v3820 = vunpack.c.h.b16 %v3276
    %v3821 = vunpack.c.l.b16 %v3277
    %v3822 = vunpack.c.l.b16 %v3278
    %v3823 = vunpack.c.h.b16 %v3278
    %v3824 = vunpack.c.l.b16 %v3279
    %v3825 = vunpack.c.l.b16 %v3280
    %v3826 = vunpack.c.h.b16 %v3280
    %v3827 = vunpack.c.l.b16 %v3281
    %v3828 = vunpack.c.l.b16 %v3282
    %v3829 = vunpack.c.h.b16 %v3282
    %v3830 = vunpack.c.l.b16 %v3283
    %v3831 = vunpack.c.l.b16 %v3284
    %v3832 = vunpack.c.h.b16 %v3284
    %v3833 = vunpack.c.l.b16 %v3285
    %v3834 = vunpack.c.l.b16 %v3286
    %v3835 = vunpack.c.h.b16 %v3286
    %v3836 = vunpack.c.l.b16 %v3287
    %v3837 = vunpack.c.l.b16 %v3288
    %v3838 = vunpack.c.h.b16 %v3288
    %v3839 = vunpack.c.l.b16 %v3289
    %v3840 = vunpack.c.l.b16 %v3290
    %v3841 = vunpack.c.h.b16 %v3290
    %v3842 = vunpack.c.l.b16 %v3291
    %v3843 = vunpack.c.l.b16 %v3292
    %v3844 = vunpack.c.h.b16 %v3292
    %v3845 = vunpack.c.l.b16 %v3293
    %v3846 = vunpack.c.l.b16 %v3294
    %v3847 = vunpack.c.h.b16 %v3294
    %v3848 = vunpack.c.l.b16 %v3295
    %v3849 = vunpack.c.l.b16 %v3296
    %v3850 = vunpack.c.h.b16 %v3296
    %v3851 = vunpack.c.l.b16 %v3297
    %v3852 = vunpack.c.l.b16 %v3298
    %v3853 = vunpack.c.h.b16 %v3298
    %v3854 = vunpack.c.l.b16 %v3299
    %v3855 = vunpack.c.l.b16 %v3300
    %v3856 = vunpack.c.h.b16 %v3300
    %v3857 = vunpack.c.l.b16 %v3301
    %v3858 = vunpack.c.l.b16 %v3302
    %v3859 = vunpack.c.h.b16 %v3302
    %v3860 = vunpack.c.l.b16 %v3303
    %v3861 = vunpack.c.l.b16 %v3304
    %v3862 = vunpack.c.h.b16 %v3304
    %v3863 = vunpack.c.l.b16 %v3305
    %v3864 = vunpack.c.l.b16 %v3306
    %v3865 = vunpack.c.h.b16 %v3306
    %v3866 = vunpack.c.l.b16 %v3307
    %v3867 = vunpack.c.l.b16 %v3308
    %v3868 = vunpack.c.h.b16 %v3308
    %v3869 = vunpack.c.l.b16 %v3309
    %v3870 = vunpack.c.l.b16 %v3310
    %v3871 = vunpack.c.h.b16 %v3310
    %v3872 = vunpack.c.l.b16 %v3311
    %v3873 = vunpack.c.l.b16 %v3312
    %v3874 = vunpack.c.h.b16 %v3312
    %v3875 = vunpack.c.l.b16 %v3313
    %v3876 = vunpack.c.l.b16 %v3314
    %v3877 = vunpack.c.h.b16 %v3314
    %v3878 = vunpack.c.l.b16 %v3315
    %v3879 = vunpack.c.l.b16 %v3316
    %v3880 = vunpack.c.h.b16 %v3316
    %v3881 = vunpack.c.l.b16 %v3317
    %v3882 = vunpack.c.l.b16 %v3318
    %v3883 = vunpack.c.h.b16 %v3318
    %v3884 = vunpack.c.l.b16 %v3319
    %v3885 = vunpack.c.l.b16 %v3320
    %v3886 = vunpack.c.h.b16 %v3320
    %v3887 = vunpack.c.l.b16 %v3321
    %v3888 = vunpack.c.l.b16 %v3322
    %v3889 = vunpack.c.h.b16 %v3322
    %v3890 = vunpack.c.l.b16 %v3323
    %v3891 = vunpack.c.l.b16 %v3324
    %v3892 = vunpack.c.h.b16 %v3324
    %v3893 = vunpack.c.l.b16 %v3325
    %v3894 = vunpack.c.l.b16 %v3326
    %v3895 = vunpack.c.h.b16 %v3326
    %v3896 = vunpack.c.l.b16 %v3327
    %v3897 = vunpack.c.l.b16 %v3328
    %v3898 = vunpack.c.h.b16 %v3328
    %v3899 = vunpack.c.l.b16 %v3329
    %v3900 = vunpack.c.l.b16 %v3330
    %v3901 = vunpack.c.h.b16 %v3330
    %v3902 = vunpack.c.l.b16 %v3331
    %v3903 = vunpack.c.l.b16 %v3332
    %v3904 = vunpack.c.h.b16 %v3332
    %v3905 = vunpack.c.l.b16 %v3333
    %v3906 = vunpack.c.l.b16 %v3334
    %v3907 = vunpack.c.h.b16 %v3334
    %v3908 = vunpack.c.l.b16 %v3335
    %v3909 = vunpack.c.l.b16 %v3336
    %v3910 = vunpack.c.h.b16 %v3336
    %v3911 = vunpack.c.l.b16 %v3337
    %v3912 = vunpack.c.l.b16 %v3338
    %v3913 = vunpack.c.h.b16 %v3338
    %v3914 = vunpack.c.l.b16 %v3339
    %v3915 = vunpack.c.l.b16 %v3340
    %v3916 = vunpack.c.h.b16 %v3340
    %v3917 = vunpack.c.l.b16 %v3341
    %v3918 = vunpack.c.l.b16 %v3342
    %v3919 = vunpack.c.h.b16 %v3342
    %v3920 = vunpack.c.l.b16 %v3343
    %v3921 = vunpack.c.l.b16 %v3344
    %v3922 = vunpack.c.h.b16 %v3344
    %v3923 = vunpack.c.l.b16 %v3345
    %v3924 = vunpack.c.l.b16 %v3346
    %v3925 = vunpack.c.h.b16 %v3346
    %v3926 = vunpack.c.l.b16 %v3347
    %v3927 = vunpack.c.l.b16 %v3348
    %v3928 = vunpack.c.h.b16 %v3348
    %v3929 = vunpack.c.l.b16 %v3349
    %v3930 = vunpack.c.l.b16 %v3350
    %v3931 = vunpack.c.h.b16 %v3350
    %v3932 = vunpack.c.l.b16 %v3351
    %v3933 = vunpack.c.l.b16 %v3352
    %v3934 = vunpack.c.h.b16 %v3352
    %v3935 = vunpack.c.l.b16 %v3353
    %v3936 = vunpack.c.l.b16 %v3354
    %v3937 = vunpack.c.h.b16 %v3354
    %v3938 = vunpack.c.l.b16 %v3355
    %v3939 = vunpack.c.l.b16 %v3356
    %v3940 = vunpack.c.h.b16 %v3356
    %v3941 = vunpack.c.l.b16 %v3357
    %v3942 = vunpack.c.l.b16 %v3358
    %v3943 = vunpack.c.h.b16 %v3358
    %v3944 = vunpack.c.l.b16 %v3359
    %v3945 = vunpack.c.l.b16 %v3360
    %v3946 = vunpack.c.h.b16 %v3360
    %v3947 = vunpack.c.l.b16 %v3361
    %v3948 = vunpack.c.l.b16 %v3362
    %v3949 = vunpack.c.h.b16 %v3362
    %v3950 = vunpack.c.l.b16 %v3363
    %v3951 = vunpack.c.l.b16 %v3364
    %v3952 = vunpack.c.h.b16 %v3364
    %v3953 = vunpack.c.l.b16 %v3365
    %v3954 = vunpack.c.l.b16 %v3366
    %v3955 = vunpack.c.h.b16 %v3366
    %v3956 = vunpack.c.l.b16 %v3367
    %v3957 = vunpack.c.l.b16 %v3368
    %v3958 = vunpack.c.h.b16 %v3368
    %v3959 = vunpack.c.l.b16 %v3369
    %v3960 = vunpack.c.l.b16 %v3370
    %v3961 = vunpack.c.h.b16 %v3370
    %v3962 = vunpack.c.l.b16 %v3371
    %v3963 = vunpack.c.l.b16 %v3372
    %v3964 = vunpack.c.h.b16 %v3372
    %v3965 = vunpack.c.l.b16 %v3373
    %v3966 = vunpack.c.l.b16 %v3374
    %v3967 = vunpack.c.h.b16 %v3374
    %v3968 = vunpack.c.l.b16 %v3375
    %v3969 = vunpack.c.l.b16 %v3376
    %v3970 = vunpack.c.h.b16 %v3376
    %v3971 = vunpack.c.l.b16 %v3377
    %v3972 = vunpack.c.l.b16 %v3378
    %v3973 = vunpack.c.h.b16 %v3378
    %v3974 = vunpack.c.l.b16 %v3379
    %v3975 = vunpack.c.l.b16 %v3380
    %v3976 = vunpack.c.h.b16 %v3380
    %v3977 = vunpack.c.l.b16 %v3381
    %v3978 = vunpack.c.l.b16 %v3382
    %v3979 = vunpack.c.h.b16 %v3382
    %v3980 = vunpack.c.l.b16 %v3383
    %v3981 = vunpack.c.l.b16 %v3384
    %v3982 = vunpack.c.h.b16 %v3384
    %v3983 = vunpack.c.l.b16 %v3385
    %v3984 = vunpack.c.l.b16 %v3386
    %v3985 = vunpack.c.h.b16 %v3386
    %v3986 = vunpack.c.l.b16 %v3387
    %v3987 = vunpack.c.l.b16 %v3388
    %v3988 = vunpack.c.h.b16 %v3388
    %v3989 = vunpack.c.l.b16 %v3389
    %v3990 = vunpack.c.l.b16 %v3390
    %v3991 = vunpack.c.h.b16 %v3390
    %v3992 = vunpack.c.l.b16 %v3391
    %v3993 = vunpack.c.l.b16 %v3392
    %v3994 = vunpack.c.h.b16 %v3392
    %v3995 = vunpack.c.l.b16 %v3393
    %v3996 = vunpack.c.l.b16 %v3394
    %v3997 = vunpack.c.h.b16 %v3394
    %v3998 = vunpack.c.l.b16 %v3395
    %v3999 = vunpack.c.l.b16 %v3396
    %v4000 = vunpack.c.h.b16 %v3396
    %v4001 = vunpack.c.l.b16 %v3397
    %v4002 = vunpack.c.l.b16 %v3398
    %v4003 = vunpack.c.h.b16 %v3398
    %v4004 = vunpack.c.l.b16 %v3399
    %v4005 = vunpack.c.l.b16 %v3400
    %v4006 = vunpack.c.h.b16 %v3400
    %v4007 = vunpack.c.l.b16 %v3401
    %v4008 = vunpack.c.l.b16 %v3402
    %v4009 = vunpack.c.h.b16 %v3402
    %v4010 = vunpack.c.l.b16 %v3403
    %v4011 = vunpack.c.l.b16 %v3404
    %v4012 = vunpack.c.h.b16 %v3404
    %v4013 = vunpack.c.l.b16 %v3405
    %v4014 = vunpack.c.l.b16 %v3406
    %v4015 = vunpack.c.h.b16 %v3406
    %v4016 = vunpack.c.l.b16 %v3407
    %v4017 = vunpack.c.l.b16 %v3408
    %v4018 = vunpack.c.h.b16 %v3408
    %v4019 = vunpack.c.l.b16 %v3409
    %v4020 = vunpack.c.l.b16 %v3410
    %v4021 = vunpack.c.h.b16 %v3410
    %v4022 = vunpack.c.l.b16 %v3411
    %v4023 = vunpack.c.l.b16 %v3412
    %v4024 = vunpack.c.h.b16 %v3412
    %v4025 = vunpack.c.l.b16 %v3413
    %v4026 = vunpack.c.l.b16 %v3414
    %v4027 = vunpack.c.h.b16 %v3414
    %v4028 = vunpack.c.l.b16 %v3415
    %v4029 = vunpack.c.l.b16 %v3416
    %v4030 = vunpack.c.h.b16 %v3416
    %v4031 = vunpack.c.l.b16 %v3417
    %v4032 = vunpack.c.l.b16 %v3418
    %v4033 = vunpack.c.h.b16 %v3418
    %v4034 = vunpack.c.l.b16 %v3419
    %v4035 = vunpack.c.l.b16 %v3420
    %v4036 = vunpack.c.h.b16 %v3420
    %v4037 = vunpack.c.l.b16 %v3421
    %v4038 = vunpack.c.l.b16 %v3422
    %v4039 = vunpack.c.h.b16 %v3422
    %v4040 = vunpack.c.l.b16 %v3423
    %v4041 = vunpack.c.l.b16 %v3424
    %v4042 = vunpack.c.h.b16 %v3424
    %v4043 = vunpack.c.l.b16 %v3425
    %v4044 = vunpack.c.l.b16 %v3426
    %v4045 = vunpack.c.h.b16 %v3426
    %v4046 = vunpack.c.l.b16 %v3427
    %v4047 = vunpack.c.l.b16 %v3428
    %v4048 = vunpack.c.h.b16 %v3428
    %v4049 = vunpack.c.l.b16 %v3429
    %v4050 = vunpack.c.l.b16 %v3430
    %v4051 = vunpack.c.h.b16 %v3430
    %v4052 = vunpack.c.l.b16 %v3431
    %v4053 = vunpack.c.l.b16 %v3432
    %v4054 = vunpack.c.h.b16 %v3432
    %v4055 = vunpack.c.l.b16 %v3433
    %v4056 = vunpack.c.l.b16 %v3434
    %v4057 = vunpack.c.h.b16 %v3434
    %v4058 = vunpack.c.l.b16 %v3435
    %v4059 = vunpack.c.l.b16 %v3436
    %v4060 = vunpack.c.h.b16 %v3436
    %v4061 = vunpack.c.l.b16 %v3437
    %v4062 = vunpack.c.l.b16 %v3438
    %v4063 = vunpack.c.h.b16 %v3438
    %v4064 = vunpack.c.l.b16 %v3439
    %v4065 = vunpack.c.l.b16 %v3440
    %v4066 = vunpack.c.h.b16 %v3440
    %v4067 = vunpack.c.l.b16 %v3441
    %v4068 = vunpack.c.l.b16 %v3442
    %v4069 = vunpack.c.h.b16 %v3442
    %v4070 = vunpack.c.l.b16 %v3443
    %v4071 = vunpack.c.l.b16 %v3444
    %v4072 = vunpack.c.h.b16 %v3444
    %v4073 = vunpack.c.l.b16 %v3445
    %v4074 = vunpack.c.l.b16 %v3446
    %v4075 = vunpack.c.h.b16 %v3446
    %v4076 = vunpack.c.l.b16 %v3447
    %v4077 = vunpack.c.l.b16 %v3448
    %v4078 = vunpack.c.h.b16 %v3448
    %v4079 = vunpack.c.l.b16 %v3449
    %v4080 = vunpack.c.l.b16 %v3450
    %v4081 = vunpack.c.h.b16 %v3450
    %v4082 = vunpack.c.l.b16 %v3451
    %v4083 = vunpack.c.l.b16 %v3452
    %v4084 = vunpack.c.h.b16 %v3452
    %v4085 = vunpack.c.l.b16 %v3453
    %v4086 = vunpack.c.l.b16 %v3454
    %v4087 = vunpack.c.h.b16 %v3454
    %v4088 = vunpack.c.l.b16 %v3455
    %v4089 = vunpack.c.l.b16 %v3456
    %v4090 = vunpack.c.h.b16 %v3456
    %v4091 = vunpack.c.l.b16 %v3457
    %v4092 = vunpack.c.l.b16 %v3458
    %v4093 = vunpack.c.h.b16 %v3458
    %v4094 = vunpack.c.l.b16 %v3459
    %v4095 = vunpack.c.l.b16 %v3460
    %v4096 = vunpack.c.h.b16 %v3460
    %v4097 = vunpack.c.l.b16 %v3461
    %v4098 = vunpack.c.l.b16 %v3462
    %v4099 = vunpack.c.h.b16 %v3462
    %v4100 = vunpack.c.l.b16 %v3463
    %v4101 = vunpack.c.l.b16 %v3464
    %v4102 = vunpack.c.h.b16 %v3464
    %v4103 = vunpack.c.l.b16 %v3465
    %v4104 = vunpack.c.l.b16 %v3466
    %v4105 = vunpack.c.h.b16 %v3466
    %v4106 = vunpack.c.l.b16 %v3467
    %v4107 = vunpack.c.l.b16 %v3468
    %v4108 = vunpack.c.h.b16 %v3468
    %v4109 = vunpack.c.l.b16 %v3469
    %v4110 = vunpack.c.l.b16 %v3470
    %v4111 = vunpack.c.h.b16 %v3470
    %v4112 = vunpack.c.l.b16 %v3471
    %v4113 = vunpack.c.l.b16 %v3472
    %v4114 = vunpack.c.h.b16 %v3472
    %v4115 = vunpack.c.l.b16 %v3473
    %v4116 = vunpack.c.l.b16 %v3474
    %v4117 = vunpack.c.h.b16 %v3474
    %v4118 = vunpack.c.l.b16 %v3475
    %v4119 = vunpack.c.l.b16 %v3476
    %v4120 = vunpack.c.h.b16 %v3476
    %v4121 = vunpack.c.l.b16 %v3477
    %v4122 = vunpack.c.l.b16 %v3478
    %v4123 = vunpack.c.h.b16 %v3478
    %v4124 = vunpack.c.l.b16 %v3479
    %v4125 = vunpack.c.l.b16 %v3480
    %v4126 = vunpack.c.h.b16 %v3480
    %v4127 = vunpack.c.l.b16 %v3481
    %v4128 = vunpack.c.l.b16 %v3482
    %v4129 = vunpack.c.h.b16 %v3482
    %v4130 = vunpack.c.l.b16 %v3483
    %v4131 = vunpack.c.l.b16 %v3484
    %v4132 = vunpack.c.h.b16 %v3484
    %v4133 = vunpack.c.l.b16 %v3485
    %v4134 = vunpack.c.l.b16 %v3486
    %v4135 = vunpack.c.h.b16 %v3486
    %v4136 = vunpack.c.l.b16 %v3487
    %v4137 = vunpack.c.l.b16 %v3488
    %v4138 = vunpack.c.h.b16 %v3488
    %v4139 = vunpack.c.l.b16 %v3489
    %v4140 = vunpack.c.l.b16 %v3490
    %v4141 = vunpack.c.h.b16 %v3490
    %v4142 = vunpack.c.l.b16 %v3491
    %v4143 = vunpack.c.l.b16 %v3492
    %v4144 = vunpack.c.h.b16 %v3492
    %v4145 = vunpack.c.l.b16 %v3493
    %v4146 = vunpack.c.l.b16 %v3494
    %v4147 = vunpack.c.h.b16 %v3494
    %v4148 = vunpack.c.l.b16 %v3495
    %v4149 = vunpack.c.l.b16 %v3496
    %v4150 = vunpack.c.h.b16 %v3496
    %v4151 = vunpack.c.l.b16 %v3497
    %v4152 = vunpack.c.l.b16 %v3498
    %v4153 = vunpack.c.h.b16 %v3498
    %v4154 = vunpack.c.l.b16 %v3499
    %v4155 = vunpack.c.l.b16 %v3500
    %v4156 = vunpack.c.h.b16 %v3500
    %v4157 = vunpack.c.l.b16 %v3501
    %v4158 = vunpack.c.l.b16 %v3502
    %v4159 = vunpack.c.h.b16 %v3502
    %v4160 = vunpack.c.l.b16 %v3503
    %v4161 = vpack.c.b16 %v3780, %v3777
    %v4162 = vpack.c.b16 %v3781, %v3778
    %v4163 = vpack.c.b16 %v3782, %v3779
    %v4164 = vpack.c.b16 %v3786, %v3783
    %v4165 = vpack.c.b16 %v3787, %v3784
    %v4166 = vpack.c.b16 %v3788, %v3785
    %v4167 = vpack.c.b16 %v3792, %v3789
    %v4168 = vpack.c.b16 %v3793, %v3790
    %v4169 = vpack.c.b16 %v3794, %v3791
    %v4170 = vpack.c.b16 %v3798, %v3795
    %v4171 = vpack.c.b16 %v3799, %v3796
    %v4172 = vpack.c.b16 %v3800, %v3797
    %v4173 = vpack.c.b16 %v3804, %v3801
    %v4174 = vpack.c.b16 %v3805, %v3802
    %v4175 = vpack.c.b16 %v3806, %v3803
    %v4176 = vpack.c.b16 %v3810, %v3807
    %v4177 = vpack.c.b16 %v3811, %v3808
    %v4178 = vpack.c.b16 %v3812, %v3809
    %v4179 = vpack.c.b16 %v3816, %v3813
    %v4180 = vpack.c.b16 %v3817, %v3814
    %v4181 = vpack.c.b16 %v3818, %v3815
    %v4182 = vpack.c.b16 %v3822, %v3819
    %v4183 = vpack.c.b16 %v3823, %v3820
    %v4184 = vpack.c.b16 %v3824, %v3821
    %v4185 = vpack.c.b16 %v3828, %v3825
    %v4186 = vpack.c.b16 %v3829, %v3826
    %v4187 = vpack.c.b16 %v3830, %v3827
    %v4188 = vpack.c.b16 %v3834, %v3831
    %v4189 = vpack.c.b16 %v3835, %v3832
    %v4190 = vpack.c.b16 %v3836, %v3833
    %v4191 = vpack.c.b16 %v3840, %v3837
    %v4192 = vpack.c.b16 %v3841, %v3838
    %v4193 = vpack.c.b16 %v3842, %v3839
    %v4194 = vpack.c.b16 %v3846, %v3843
    %v4195 = vpack.c.b16 %v3847, %v3844
    %v4196 = vpack.c.b16 %v3848, %v3845
    %v4197 = vpack.c.b16 %v3852, %v3849
    %v4198 = vpack.c.b16 %v3853, %v3850
    %v4199 = vpack.c.b16 %v3854, %v3851
    %v4200 = vpack.c.b16 %v3858, %v3855
    %v4201 = vpack.c.b16 %v3859, %v3856
    %v4202 = vpack.c.b16 %v3860, %v3857
    %v4203 = vpack.c.b16 %v3864, %v3861
    %v4204 = vpack.c.b16 %v3865, %v3862
    %v4205 = vpack.c.b16 %v3866, %v3863
    %v4206 = vpack.c.b16 %v3870, %v3867
    %v4207 = vpack.c.b16 %v3871, %v3868
    %v4208 = vpack.c.b16 %v3872, %v3869
    %v4209 = vpack.c.b16 %v3876, %v3873
    %v4210 = vpack.c.b16 %v3877, %v3874
    %v4211 = vpack.c.b16 %v3878, %v3875
    %v4212 = vpack.c.b16 %v3882, %v3879
    %v4213 = vpack.c.b16 %v3883, %v3880
    %v4214 = vpack.c.b16 %v3884, %v3881
    %v4215 = vpack.c.b16 %v3888, %v3885
    %v4216 = vpack.c.b16 %v3889, %v3886
    %v4217 = vpack.c.b16 %v3890, %v3887
    %v4218 = vpack.c.b16 %v3894, %v3891
    %v4219 = vpack.c.b16 %v3895, %v3892
    %v4220 = vpack.c.b16 %v3896, %v3893
    %v4221 = vpack.c.b16 %v3900, %v3897
    %v4222 = vpack.c.b16 %v3901, %v3898
    %v4223 = vpack.c.b16 %v3902, %v3899
    %v4224 = vpack.c.b16 %v3906, %v3903
    %v4225 = vpack.c.b16 %v3907, %v3904
    %v4226 = vpack.c.b16 %v3908, %v3905
    %v4227 = vpack.c.b16 %v3912, %v3909
    %v4228 = vpack.c.b16 %v3913, %v3910
    %v4229 = vpack.c.b16 %v3914, %v3911
    %v4230 = vpack.c.b16 %v3918, %v3915
    %v4231 = vpack.c.b16 %v3919, %v3916
    %v4232 = vpack.c.b16 %v3920, %v3917
    %v4233 = vpack.c.b16 %v3924, %v3921
    %v4234 = vpack.c.b16 %v3925, %v3922
    %v4235 = vpack.c.b16 %v3926, %v3923
    %v4236 = vpack.c.b16 %v3930, %v3927
    %v4237 = vpack.c.b16 %v3931, %v3928
    %v4238 = vpack.c.b16 %v3932, %v3929
    %v4239 = vpack.c.b16 %v3936, %v3933
    %v4240 = vpack.c.b16 %v3937, %v3934
    %v4241 = vpack.c.b16 %v3938, %v3935
    %v4242 = vpack.c.b16 %v3942, %v3939
    %v4243 = vpack.c.b16 %v3943, %v3940
    %v4244 = vpack.c.b16 %v3944, %v3941
    %v4245 = vpack.c.b16 %v3948, %v3945
    %v4246 = vpack.c.b16 %v3949, %v3946
    %v4247 = vpack.c.b16 %v3950, %v3947
    %v4248 = vpack.c.b16 %v3954, %v3951
    %v4249 = vpack.c.b16 %v3955, %v3952
    %v4250 = vpack.c.b16 %v3956, %v3953
    %v4251 = vpack.c.b16 %v3960, %v3957
    %v4252 = vpack.c.b16 %v3961, %v3958
    %v4253 = vpack.c.b16 %v3962, %v3959
    %v4254 = vpack.c.b16 %v3966, %v3963
    %v4255 = vpack.c.b16 %v3967, %v3964
    %v4256 = vpack.c.b16 %v3968, %v3965
    %v4257 = vpack.c.b16 %v3972, %v3969
    %v4258 = vpack.c.b16 %v3973, %v3970
    %v4259 = vpack.c.b16 %v3974, %v3971
    %v4260 = vpack.c.b16 %v3978, %v3975
    %v4261 = vpack.c.b16 %v3979, %v3976
    %v4262 = vpack.c.b16 %v3980, %v3977
    %v4263 = vpack.c.b16 %v3984, %v3981
    %v4264 = vpack.c.b16 %v3985, %v3982
    %v4265 = vpack.c.b16 %v3986, %v3983
    %v4266 = vpack.c.b16 %v3990, %v3987
    %v4267 = vpack.c.b16 %v3991, %v3988
    %v4268 = vpack.c.b16 %v3992, %v3989
    %v4269 = vpack.c.b16 %v3996, %v3993
    %v4270 = vpack.c.b16 %v3997, %v3994
    %v4271 = vpack.c.b16 %v3998, %v3995
    %v4272 = vpack.c.b16 %v4002, %v3999
    %v4273 = vpack.c.b16 %v4003, %v4000
    %v4274 = vpack.c.b16 %v4004, %v4001
    %v4275 = vpack.c.b16 %v4008, %v4005
    %v4276 = vpack.c.b16 %v4009, %v4006
    %v4277 = vpack.c.b16 %v4010, %v4007
    %v4278 = vpack.c.b16 %v4014, %v4011
    %v4279 = vpack.c.b16 %v4015, %v4012
    %v4280 = vpack.c.b16 %v4016, %v4013
    %v4281 = vpack.c.b16 %v4020, %v4017
    %v4282 = vpack.c.b16 %v4021, %v4018
    %v4283 = vpack.c.b16 %v4022, %v4019
    %v4284 = vpack.c.b16 %v4026, %v4023
    %v4285 = vpack.c.b16 %v4027, %v4024
    %v4286 = vpack.c.b16 %v4028, %v4025
    %v4287 = vpack.c.b16 %v4032, %v4029
    %v4288 = vpack.c.b16 %v4033, %v4030
    %v4289 = vpack.c.b16 %v4034, %v4031
    %v4290 = vpack.c.b16 %v4038, %v4035
    %v4291 = vpack.c.b16 %v4039, %v4036
    %v4292 = vpack.c.b16 %v4040, %v4037
    %v4293 = vpack.c.b16 %v4044, %v4041
    %v4294 = vpack.c.b16 %v4045, %v4042
    %v4295 = vpack.c.b16 %v4046, %v4043
    %v4296 = vpack.c.b16 %v4050, %v4047
    %v4297 = vpack.c.b16 %v4051, %v4048
    %v4298 = vpack.c.b16 %v4052, %v4049
    %v4299 = vpack.c.b16 %v4056, %v4053
    %v4300 = vpack.c.b16 %v4057, %v4054
    %v4301 = vpack.c.b16 %v4058, %v4055
    %v4302 = vpack.c.b16 %v4062, %v4059
    %v4303 = vpack.c.b16 %v4063, %v4060
    %v4304 = vpack.c.b16 %v4064, %v4061
    %v4305 = vpack.c.b16 %v4068, %v4065
    %v4306 = vpack.c.b16 %v4069, %v4066
    %v4307 = vpack.c.b16 %v4070, %v4067
    %v4308 = vpack.c.b16 %v4074, %v4071
    %v4309 = vpack.c.b16 %v4075, %v4072
    %v4310 = vpack.c.b16 %v4076, %v4073
    %v4311 = vpack.c.b16 %v4080, %v4077
    %v4312 = vpack.c.b16 %v4081, %v4078
    %v4313 = vpack.c.b16 %v4082, %v4079
    %v4314 = vpack.c.b16 %v4086, %v4083
    %v4315 = vpack.c.b16 %v4087, %v4084
    %v4316 = vpack.c.b16 %v4088, %v4085
    %v4317 = vpack.c.b16 %v4092, %v4089
    %v4318 = vpack.c.b16 %v4093, %v4090
    %v4319 = vpack.c.b16 %v4094, %v4091
    %v4320 = vpack.c.b16 %v4098, %v4095
    %v4321 = vpack.c.b16 %v4099, %v4096
    %v4322 = vpack.c.b16 %v4100, %v4097
    %v4323 = vpack.c.b16 %v4104, %v4101
    %v4324 = vpack.c.b16 %v4105, %v4102
    %v4325 = vpack.c.b16 %v4106, %v4103
    %v4326 = vpack.c.b16 %v4110, %v4107
    %v4327 = vpack.c.b16 %v4111, %v4108
    %v4328 = vpack.c.b16 %v4112, %v4109
    %v4329 = vpack.c.b16 %v4116, %v4113
    %v4330 = vpack.c.b16 %v4117, %v4114
    %v4331 = vpack.c.b16 %v4118, %v4115
    %v4332 = vpack.c.b16 %v4122, %v4119
    %v4333 = vpack.c.b16 %v4123, %v4120
    %v4334 = vpack.c.b16 %v4124, %v4121
    %v4335 = vpack.c.b16 %v4128, %v4125
    %v4336 = vpack.c.b16 %v4129, %v4126
    %v4337 = vpack.c.b16 %v4130, %v4127
    %v4338 = vpack.c.b16 %v4134, %v4131
    %v4339 = vpack.c.b16 %v4135, %v4132
    %v4340 = vpack.c.b16 %v4136, %v4133
    %v4341 = vpack.c.b16 %v4140, %v4137
    %v4342 = vpack.c.b16 %v4141, %v4138
    %v4343 = vpack.c.b16 %v4142, %v4139
    %v4344 = vpack.c.b16 %v4146, %v4143
    %v4345 = vpack.c.b16 %v4147, %v4144
    %v4346 = vpack.c.b16 %v4148, %v4145
    %v4347 = vpack.c.b16 %v4152, %v4149
    %v4348 = vpack.c.b16 %v4153, %v4150
    %v4349 = vpack.c.b16 %v4154, %v4151
    %v4350 = vpack.c.b16 %v4158, %v4155
    %v4351 = vpack.c.b16 %v4159, %v4156
    %v4352 = vpack.c.b16 %v4160, %v4157
    %4545 = vmatprep.subr.bf16.mxu0 %v4162
    %4546 = vmatpush1.bf16.msra.mxu0 %v4161
    %4547 = vmatprep.subr.bf16.mxu0 %v4165
    %4548 = vmatpush1.bf16.msra.mxu0 %v4164
    %4549 = vmatprep.subr.bf16.mxu0 %v4168
    %4550 = vmatpush1.bf16.msra.mxu0 %v4167
    %4551 = vmatprep.subr.bf16.mxu0 %v4171
    %4552 = vmatpush1.bf16.msra.mxu0 %v4170
    %4553 = vmatprep.subr.bf16.mxu0 %v4174
    %4554 = vmatpush1.bf16.msra.mxu0 %v4173
    %4555 = vmatprep.subr.bf16.mxu0 %v4177
    %4556 = vmatpush1.bf16.msra.mxu0 %v4176
    %4557 = vmatprep.subr.bf16.mxu0 %v4180
    %4558 = vmatpush1.bf16.msra.mxu0 %v4179
    %4559 = vmatprep.subr.bf16.mxu0 %v4183
    %4560 = vmatpush1.bf16.msra.mxu0 %v4182
    %4561 = vmatprep.subr.bf16.mxu0 %v4186
    %4562 = vmatpush1.bf16.msra.mxu0 %v4185
    %4563 = vmatprep.subr.bf16.mxu0 %v4189
    %4564 = vmatpush1.bf16.msra.mxu0 %v4188
    %4565 = vmatprep.subr.bf16.mxu0 %v4192
    %4566 = vmatpush1.bf16.msra.mxu0 %v4191
    %4567 = vmatprep.subr.bf16.mxu0 %v4195
    %4568 = vmatpush1.bf16.msra.mxu0 %v4194
    %4569 = vmatprep.subr.bf16.mxu0 %v4198
    %4570 = vmatpush1.bf16.msra.mxu0 %v4197
    %4571 = vmatprep.subr.bf16.mxu0 %v4201
    %4572 = vmatpush1.bf16.msra.mxu0 %v4200
    %4573 = vmatprep.subr.bf16.mxu0 %v4204
    %4574 = vmatpush1.bf16.msra.mxu0 %v4203
    %4575 = vmatprep.subr.bf16.mxu0 %v4207
    %4576 = vmatpush1.bf16.msra.mxu0 %v4206
    %4577 = vmatprep.mubr.bf16.mxu0 %v3241
    %4578 = vmatmul.mubr.bf16.gmra.mrb[0].mxu0 %v3240
    %v4579 = vpop.f32.mrb[0].mxu0
    %v4580 = vadd.f32 %v3509, %v4579
    %v4581 = vpop.f32.mrb[0].mxu0
    %v4582 = vadd.f32 %v3513, %v4581
    %v4583 = vpop.f32.mrb[0].mxu0
    %v4584 = vadd.f32 %v3509, %v4583
    %v4585 = vpop.f32.mrb[0].mxu0
    %v4586 = vadd.f32 %v3513, %v4585
    %4587 = vdwg.mxu0
    %4588 = vmatprep.subr.bf16.mxu0 %v4210
    %4589 = vmatpush1.bf16.msra.mxu0 %v4209
    %4590 = vmatprep.subr.bf16.mxu0 %v4213
    %4591 = vmatpush1.bf16.msra.mxu0 %v4212
    %4592 = vmatprep.subr.bf16.mxu0 %v4216
    %4593 = vmatpush1.bf16.msra.mxu0 %v4215
    %4594 = vmatprep.subr.bf16.mxu0 %v4219
    %4595 = vmatpush1.bf16.msra.mxu0 %v4218
    %4596 = vmatprep.subr.bf16.mxu0 %v4222
    %4597 = vmatpush1.bf16.msra.mxu0 %v4221
    %4598 = vmatprep.subr.bf16.mxu0 %v4225
    %4599 = vmatpush1.bf16.msra.mxu0 %v4224
    %4600 = vmatprep.subr.bf16.mxu0 %v4228
    %4601 = vmatpush1.bf16.msra.mxu0 %v4227
    %4602 = vmatprep.subr.bf16.mxu0 %v4231
    %4603 = vmatpush1.bf16.msra.mxu0 %v4230
    %4604 = vmatprep.subr.bf16.mxu0 %v4234
    %4605 = vmatpush1.bf16.msra.mxu0 %v4233
    %4606 = vmatprep.subr.bf16.mxu0 %v4237
    %4607 = vmatpush1.bf16.msra.mxu0 %v4236
    %4608 = vmatprep.subr.bf16.mxu0 %v4240
    %4609 = vmatpush1.bf16.msra.mxu0 %v4239
    %4610 = vmatprep.subr.bf16.mxu0 %v4243
    %4611 = vmatpush1.bf16.msra.mxu0 %v4242
    %4612 = vmatprep.subr.bf16.mxu0 %v4246
    %4613 = vmatpush1.bf16.msra.mxu0 %v4245
    %4614 = vmatprep.subr.bf16.mxu0 %v4249
    %4615 = vmatpush1.bf16.msra.mxu0 %v4248
    %4616 = vmatprep.subr.bf16.mxu0 %v4252
    %4617 = vmatpush1.bf16.msra.mxu0 %v4251
    %4618 = vmatprep.subr.bf16.mxu0 %v4255
    %4619 = vmatpush1.bf16.msra.mxu0 %v4254
    %4620 = vmatprep.mubr.bf16.mxu0 %v3243
    %4621 = vmatmul.mubr.bf16.gmra.mrb[0].mxu0 %v3242
    %v4622 = vpop.f32.mrb[0].mxu0
    %v4623 = vadd.f32 %v4580, %v4622
    %v4624 = vpop.f32.mrb[0].mxu0
    %v4625 = vadd.f32 %v4582, %v4624
    %v4626 = vpop.f32.mrb[0].mxu0
    %v4627 = vadd.f32 %v4584, %v4626
    %v4628 = vpop.f32.mrb[0].mxu0
    %v4629 = vadd.f32 %v4586, %v4628
    %4630 = vdwg.mxu0
    %4631 = vmatprep.subr.bf16.mxu0 %v4258
    %4632 = vmatpush1.bf16.msra.mxu0 %v4257
    %4633 = vmatprep.subr.bf16.mxu0 %v4261
    %4634 = vmatpush1.bf16.msra.mxu0 %v4260
    %4635 = vmatprep.subr.bf16.mxu0 %v4264
    %4636 = vmatpush1.bf16.msra.mxu0 %v4263
    %4637 = vmatprep.subr.bf16.mxu0 %v4267
    %4638 = vmatpush1.bf16.msra.mxu0 %v4266
    %4639 = vmatprep.subr.bf16.mxu0 %v4270
    %4640 = vmatpush1.bf16.msra.mxu0 %v4269
    %4641 = vmatprep.subr.bf16.mxu0 %v4273
    %4642 = vmatpush1.bf16.msra.mxu0 %v4272
    %4643 = vmatprep.subr.bf16.mxu0 %v4276
    %4644 = vmatpush1.bf16.msra.mxu0 %v4275
    %4645 = vmatprep.subr.bf16.mxu0 %v4279
    %4646 = vmatpush1.bf16.msra.mxu0 %v4278
    %4647 = vmatprep.subr.bf16.mxu0 %v4282
    %4648 = vmatpush1.bf16.msra.mxu0 %v4281
    %4649 = vmatprep.subr.bf16.mxu0 %v4285
    %4650 = vmatpush1.bf16.msra.mxu0 %v4284
    %4651 = vmatprep.subr.bf16.mxu0 %v4288
    %4652 = vmatpush1.bf16.msra.mxu0 %v4287
    %4653 = vmatprep.subr.bf16.mxu0 %v4291
    %4654 = vmatpush1.bf16.msra.mxu0 %v4290
    %4655 = vmatprep.subr.bf16.mxu0 %v4294
    %4656 = vmatpush1.bf16.msra.mxu0 %v4293
    %4657 = vmatprep.subr.bf16.mxu0 %v4297
    %4658 = vmatpush1.bf16.msra.mxu0 %v4296
    %4659 = vmatprep.subr.bf16.mxu0 %v4300
    %4660 = vmatpush1.bf16.msra.mxu0 %v4299
    %4661 = vmatprep.subr.bf16.mxu0 %v4303
    %4662 = vmatpush1.bf16.msra.mxu0 %v4302
    %4663 = vmatprep.mubr.bf16.mxu0 %v3245
    %4664 = vmatmul.mubr.bf16.gmra.mrb[0].mxu0 %v3244
    %v4665 = vpop.f32.mrb[0].mxu0
    %v4666 = vadd.f32 %v4623, %v4665
    %v4667 = vpop.f32.mrb[0].mxu0
    %v4668 = vadd.f32 %v4625, %v4667
    %v4669 = vpop.f32.mrb[0].mxu0
    %v4670 = vadd.f32 %v4627, %v4669
    %v4671 = vpop.f32.mrb[0].mxu0
    %v4672 = vadd.f32 %v4629, %v4671
    %4673 = vdwg.mxu0
    %4674 = vmatprep.subr.bf16.mxu0 %v4306
    %4675 = vmatpush1.bf16.msra.mxu0 %v4305
    %4676 = vmatprep.subr.bf16.mxu0 %v4309
    %4677 = vmatpush1.bf16.msra.mxu0 %v4308
    %4678 = vmatprep.subr.bf16.mxu0 %v4312
    %4679 = vmatpush1.bf16.msra.mxu0 %v4311
    %4680 = vmatprep.subr.bf16.mxu0 %v4315
    %4681 = vmatpush1.bf16.msra.mxu0 %v4314
    %4682 = vmatprep.subr.bf16.mxu0 %v4318
    %4683 = vmatpush1.bf16.msra.mxu0 %v4317
    %4684 = vmatprep.subr.bf16.mxu0 %v4321
    %4685 = vmatpush1.bf16.msra.mxu0 %v4320
    %4686 = vmatprep.subr.bf16.mxu0 %v4324
    %4687 = vmatpush1.bf16.msra.mxu0 %v4323
    %4688 = vmatprep.subr.bf16.mxu0 %v4327
    %4689 = vmatpush1.bf16.msra.mxu0 %v4326
    %4690 = vmatprep.subr.bf16.mxu0 %v4330
    %4691 = vmatpush1.bf16.msra.mxu0 %v4329
    %4692 = vmatprep.subr.bf16.mxu0 %v4333
    %4693 = vmatpush1.bf16.msra.mxu0 %v4332
    %4694 = vmatprep.subr.bf16.mxu0 %v4336
    %4695 = vmatpush1.bf16.msra.mxu0 %v4335
    %4696 = vmatprep.subr.bf16.mxu0 %v4339
    %4697 = vmatpush1.bf16.msra.mxu0 %v4338
    %4698 = vmatprep.subr.bf16.mxu0 %v4342
    %4699 = vmatpush1.bf16.msra.mxu0 %v4341
    %4700 = vmatprep.subr.bf16.mxu0 %v4345
    %4701 = vmatpush1.bf16.msra.mxu0 %v4344
    %4702 = vmatprep.subr.bf16.mxu0 %v4348
    %4703 = vmatpush1.bf16.msra.mxu0 %v4347
    %4704 = vmatprep.subr.bf16.mxu0 %v4351
    %4705 = vmatpush1.bf16.msra.mxu0 %v4350
    %4706 = vmatprep.mubr.bf16.mxu0 %v3247
    %4707 = vmatmul.mubr.bf16.gmra.mrb[0].mxu0 %v3246
    %v4708 = vpop.f32.mrb[0].mxu0
    %v4709 = vadd.f32 %v4666, %v4708
    %v4710 = vpop.f32.mrb[0].mxu0
    %v4711 = vadd.f32 %v4668, %v4710
    %v4712 = vpop.f32.mrb[0].mxu0
    %v4713 = vadd.f32 %v4670, %v4712
    %v4714 = vpop.f32.mrb[0].mxu0
    %v4715 = vadd.f32 %v4672, %v4714
    %4716 = vdwg.mxu0
    %4717 = vmatprep.subr.bf16.mxu0 0
    %4718 = vmatpush1.bf16.msra.mxu0 %v4163
    %4719 = vmatprep.subr.bf16.mxu0 0
    %4720 = vmatpush1.bf16.msra.mxu0 %v4166
    %4721 = vmatprep.subr.bf16.mxu0 0
    %4722 = vmatpush1.bf16.msra.mxu0 %v4169
    %4723 = vmatprep.subr.bf16.mxu0 0
    %4724 = vmatpush1.bf16.msra.mxu0 %v4172
    %4725 = vmatprep.subr.bf16.mxu0 0
    %4726 = vmatpush1.bf16.msra.mxu0 %v4175
    %4727 = vmatprep.subr.bf16.mxu0 0
    %4728 = vmatpush1.bf16.msra.mxu0 %v4178
    %4729 = vmatprep.subr.bf16.mxu0 0
    %4730 = vmatpush1.bf16.msra.mxu0 %v4181
    %4731 = vmatprep.subr.bf16.mxu0 0
    %4732 = vmatpush1.bf16.msra.mxu0 %v4184
    %4733 = vmatprep.subr.bf16.mxu0 0
    %4734 = vmatpush1.bf16.msra.mxu0 %v4187
    %4735 = vmatprep.subr.bf16.mxu0 0
    %4736 = vmatpush1.bf16.msra.mxu0 %v4190
    %4737 = vmatprep.subr.bf16.mxu0 0
    %4738 = vmatpush1.bf16.msra.mxu0 %v4193
    %4739 = vmatprep.subr.bf16.mxu0 0
    %4740 = vmatpush1.bf16.msra.mxu0 %v4196
    %4741 = vmatprep.subr.bf16.mxu0 0
    %4742 = vmatpush1.bf16.msra.mxu0 %v4199
    %4743 = vmatprep.subr.bf16.mxu0 0
    %4744 = vmatpush1.bf16.msra.mxu0 %v4202
    %4745 = vmatprep.subr.bf16.mxu0 0
    %4746 = vmatpush1.bf16.msra.mxu0 %v4205
    %4747 = vmatprep.subr.bf16.mxu0 0
    %4748 = vmatpush1.bf16.msra.mxu0 %v4208
    %4749 = vmatprep.mubr.bf16.mxu0 %v3241
    %4750 = vmatmul.mubr.bf16.gmra.mrb[0].mxu0 %v3240
    %v4751 = vpop.f32.mrb[0].mxu0
    %v4752 = vadd.f32 %v3517, %v4751
    %v4753 = vpop.f32.mrb[0].mxu0
    %v4754 = vpop.f32.mrb[0].mxu0
    %v4755 = vadd.f32 %v3517, %v4754
    %v4756 = vpop.f32.mrb[0].mxu0
    %4757 = vdwg.mxu0
    %4758 = vmatprep.subr.bf16.mxu0 0
    %4759 = vmatpush1.bf16.msra.mxu0 %v4211
    %4760 = vmatprep.subr.bf16.mxu0 0
    %4761 = vmatpush1.bf16.msra.mxu0 %v4214
    %4762 = vmatprep.subr.bf16.mxu0 0
    %4763 = vmatpush1.bf16.msra.mxu0 %v4217
    %4764 = vmatprep.subr.bf16.mxu0 0
    %4765 = vmatpush1.bf16.msra.mxu0 %v4220
    %4766 = vmatprep.subr.bf16.mxu0 0
    %4767 = vmatpush1.bf16.msra.mxu0 %v4223
    %4768 = vmatprep.subr.bf16.mxu0 0
    %4769 = vmatpush1.bf16.msra.mxu0 %v4226
    %4770 = vmatprep.subr.bf16.mxu0 0
    %4771 = vmatpush1.bf16.msra.mxu0 %v4229
    %4772 = vmatprep.subr.bf16.mxu0 0
    %4773 = vmatpush1.bf16.msra.mxu0 %v4232
    %4774 = vmatprep.subr.bf16.mxu0 0
    %4775 = vmatpush1.bf16.msra.mxu0 %v4235
    %4776 = vmatprep.subr.bf16.mxu0 0
    %4777 = vmatpush1.bf16.msra.mxu0 %v4238
    %4778 = vmatprep.subr.bf16.mxu0 0
    %4779 = vmatpush1.bf16.msra.mxu0 %v4241
    %4780 = vmatprep.subr.bf16.mxu0 0
    %4781 = vmatpush1.bf16.msra.mxu0 %v4244
    %4782 = vmatprep.subr.bf16.mxu0 0
    %4783 = vmatpush1.bf16.msra.mxu0 %v4247
    %4784 = vmatprep.subr.bf16.mxu0 0
    %4785 = vmatpush1.bf16.msra.mxu0 %v4250
    %4786 = vmatprep.subr.bf16.mxu0 0
    %4787 = vmatpush1.bf16.msra.mxu0 %v4253
    %4788 = vmatprep.subr.bf16.mxu0 0
    %4789 = vmatpush1.bf16.msra.mxu0 %v4256
    %4790 = vmatprep.mubr.bf16.mxu0 %v3243
    %4791 = vmatmul.mubr.bf16.gmra.mrb[0].mxu0 %v3242
    %v4792 = vpop.f32.mrb[0].mxu0
    %v4793 = vadd.f32 %v4752, %v4792
    %v4794 = vpop.f32.mrb[0].mxu0
    %v4795 = vpop.f32.mrb[0].mxu0
    %v4796 = vadd.f32 %v4755, %v4795
    %v4797 = vpop.f32.mrb[0].mxu0
    %4798 = vdwg.mxu0
    %4799 = vmatprep.subr.bf16.mxu0 0
    %4800 = vmatpush1.bf16.msra.mxu0 %v4259
    %4801 = vmatprep.subr.bf16.mxu0 0
    %4802 = vmatpush1.bf16.msra.mxu0 %v4262
    %4803 = vmatprep.subr.bf16.mxu0 0
    %4804 = vmatpush1.bf16.msra.mxu0 %v4265
    %4805 = vmatprep.subr.bf16.mxu0 0
    %4806 = vmatpush1.bf16.msra.mxu0 %v4268
    %4807 = vmatprep.subr.bf16.mxu0 0
    %4808 = vmatpush1.bf16.msra.mxu0 %v4271
    %4809 = vmatprep.subr.bf16.mxu0 0
    %4810 = vmatpush1.bf16.msra.mxu0 %v4274
    %4811 = vmatprep.subr.bf16.mxu0 0
    %4812 = vmatpush1.bf16.msra.mxu0 %v4277
    %4813 = vmatprep.subr.bf16.mxu0 0
    %4814 = vmatpush1.bf16.msra.mxu0 %v4280
    %4815 = vmatprep.subr.bf16.mxu0 0
    %4816 = vmatpush1.bf16.msra.mxu0 %v4283
    %4817 = vmatprep.subr.bf16.mxu0 0
    %4818 = vmatpush1.bf16.msra.mxu0 %v4286
    %4819 = vmatprep.subr.bf16.mxu0 0
    %4820 = vmatpush1.bf16.msra.mxu0 %v4289
    %4821 = vmatprep.subr.bf16.mxu0 0
    %4822 = vmatpush1.bf16.msra.mxu0 %v4292
    %4823 = vmatprep.subr.bf16.mxu0 0
    %4824 = vmatpush1.bf16.msra.mxu0 %v4295
    %4825 = vmatprep.subr.bf16.mxu0 0
    %4826 = vmatpush1.bf16.msra.mxu0 %v4298
    %4827 = vmatprep.subr.bf16.mxu0 0
    %4828 = vmatpush1.bf16.msra.mxu0 %v4301
    %4829 = vmatprep.subr.bf16.mxu0 0
    %4830 = vmatpush1.bf16.msra.mxu0 %v4304
    %4831 = vmatprep.mubr.bf16.mxu0 %v3245
    %4832 = vmatmul.mubr.bf16.gmra.mrb[0].mxu0 %v3244
    %v4833 = vpop.f32.mrb[0].mxu0
    %v4834 = vadd.f32 %v4793, %v4833
    %v4835 = vpop.f32.mrb[0].mxu0
    %v4836 = vpop.f32.mrb[0].mxu0
    %v4837 = vadd.f32 %v4796, %v4836
    %v4838 = vpop.f32.mrb[0].mxu0
    %4839 = vdwg.mxu0
    %4840 = vmatprep.subr.bf16.mxu0 0
    %4841 = vmatpush1.bf16.msra.mxu0 %v4307
    %4842 = vmatprep.subr.bf16.mxu0 0
    %4843 = vmatpush1.bf16.msra.mxu0 %v4310
    %4844 = vmatprep.subr.bf16.mxu0 0
    %4845 = vmatpush1.bf16.msra.mxu0 %v4313
    %4846 = vmatprep.subr.bf16.mxu0 0
    %4847 = vmatpush1.bf16.msra.mxu0 %v4316
    %4848 = vmatprep.subr.bf16.mxu0 0
    %4849 = vmatpush1.bf16.msra.mxu0 %v4319
    %4850 = vmatprep.subr.bf16.mxu0 0
    %4851 = vmatpush1.bf16.msra.mxu0 %v4322
    %4852 = vmatprep.subr.bf16.mxu0 0
    %4853 = vmatpush1.bf16.msra.mxu0 %v4325
    %4854 = vmatprep.subr.bf16.mxu0 0
    %4855 = vmatpush1.bf16.msra.mxu0 %v4328
    %4856 = vmatprep.subr.bf16.mxu0 0
    %4857 = vmatpush1.bf16.msra.mxu0 %v4331
    %4858 = vmatprep.subr.bf16.mxu0 0
    %4859 = vmatpush1.bf16.msra.mxu0 %v4334
    %4860 = vmatprep.subr.bf16.mxu0 0
    %4861 = vmatpush1.bf16.msra.mxu0 %v4337
    %4862 = vmatprep.subr.bf16.mxu0 0
    %4863 = vmatpush1.bf16.msra.mxu0 %v4340
    %4864 = vmatprep.subr.bf16.mxu0 0
    %4865 = vmatpush1.bf16.msra.mxu0 %v4343
    %4866 = vmatprep.subr.bf16.mxu0 0
    %4867 = vmatpush1.bf16.msra.mxu0 %v4346
    %4868 = vmatprep.subr.bf16.mxu0 0
    %4869 = vmatpush1.bf16.msra.mxu0 %v4349
    %4870 = vmatprep.subr.bf16.mxu0 0
    %4871 = vmatpush1.bf16.msra.mxu0 %v4352
    %4872 = vmatprep.mubr.bf16.mxu0 %v3247
    %4873 = vmatmul.mubr.bf16.gmra.mrb[0].mxu0 %v3246
    %v4874 = vpop.f32.mrb[0].mxu0
    %v4875 = vadd.f32 %v4834, %v4874
    %v4876 = vpop.f32.mrb[0].mxu0
    %v4877 = vpop.f32.mrb[0].mxu0
    %v4878 = vadd.f32 %v4837, %v4877
    %v4879 = vpop.f32.mrb[0].mxu0
    %4880 = vdwg.mxu0
    %v4881 = vmax.f32 %v4709, 0.0
    %v4882 = vmax.f32 %v4711, 0.0
    %v4883 = vmax.f32 %v4875, 0.0
    %v4884 = vmax.f32 %v4713, 0.0
    %v4885 = vmax.f32 %v4715, 0.0
    %v4886 = vmax.f32 %v4878, 0.0
    %v4887 = vpack.c.bf16 %v4884, %v4881
    %v4888 = vpack.c.bf16 %v4885, %v4882
    %v4889 = vpack.c.bf16 %v4886, %v4883
    %v4890 = vld [vmem:[#allocation11] sm:$0xf]
    %v4891 = vld [vmem:[#allocation11 + $0x4] sm:$0xf]
    %v4892 = vld [vmem:[#allocation11 + $0x8] sm:$0xf]
    %v4893 = vld [vmem:[#allocation11 + $0xc] sm:$0xf]
    %v4894 = vld [vmem:[#allocation11 + $0x10] sm:$0xf]
    %v4895 = vld [vmem:[#allocation11 + $0x14] sm:$0xf]
    %v4896 = vld [vmem:[#allocation11 + $0x18] sm:$0xf]
    %v4897 = vld [vmem:[#allocation11 + $0x1c] sm:$0xf]
    %v4898 = vld [vmem:[#allocation11 + $0x20] sm:$0xf]
    %v4899 = vld [vmem:[#allocation11 + $0x24] sm:$0xf]
    %v4900 = vld [vmem:[#allocation11 + $0x28] sm:$0xf]
    %v4901 = vld [vmem:[#allocation11 + $0x2c] sm:$0xf]
    %v4902 = vld [vmem:[#allocation11 + $0x30] sm:$0xf]
    %v4903 = vld [vmem:[#allocation11 + $0x34] sm:$0xf]
    %v4904 = vld [vmem:[#allocation11 + $0x38] sm:$0xf]
    %v4905 = vld [vmem:[#allocation11 + $0x3c] sm:$0xf]
    %v4906 = vld [vmem:[#allocation11 + $0x40] sm:$0xf]
    %v4907 = vld [vmem:[#allocation11 + $0x44] sm:$0xf]
    %v4908 = vld [vmem:[#allocation11 + $0x48] sm:$0xf]
    %v4909 = vld [vmem:[#allocation11 + $0x4c] sm:$0xf]
    %v4910 = vld [vmem:[#allocation11 + $0x50] sm:$0xf]
    %v4911 = vld [vmem:[#allocation11 + $0x54] sm:$0xf]
    %v4912 = vld [vmem:[#allocation11 + $0x58] sm:$0xf]
    %v4913 = vld [vmem:[#allocation11 + $0x5c] sm:$0xf]
    %v4914 = vld [vmem:[#allocation11 + $0x60] sm:$0xf]
    %v4915 = vld [vmem:[#allocation11 + $0x64] sm:$0xf]
    %v4916 = vld [vmem:[#allocation11 + $0x68] sm:$0xf]
    %v4917 = vld [vmem:[#allocation11 + $0x6c] sm:$0xf]
    %v4918 = vld [vmem:[#allocation11 + $0x70] sm:$0xf]
    %v4919 = vld [vmem:[#allocation11 + $0x74] sm:$0xf]
    %v4920 = vld [vmem:[#allocation11 + $0x78] sm:$0xf]
    %v4921 = vld [vmem:[#allocation11 + $0x7c] sm:$0xf]
    %v4922 = vld [vmem:[#allocation11 + $0x80] sm:$0xf]
    %v4923 = vld [vmem:[#allocation11 + $0x84] sm:$0xf]
    %v4924 = vld [vmem:[#allocation11 + $0x88] sm:$0xf]
    %v4925 = vld [vmem:[#allocation11 + $0x8c] sm:$0xf]
    %v4926 = vld [vmem:[#allocation11 + $0x90] sm:$0xf]
    %v4927 = vld [vmem:[#allocation11 + $0x94] sm:$0xf]
    %v4928 = vld [vmem:[#allocation11 + $0x98] sm:$0xf]
    %v4929 = vld [vmem:[#allocation11 + $0x9c] sm:$0xf]
    %v4930 = vld [vmem:[#allocation11 + $0xa0] sm:$0xf]
    %v4931 = vld [vmem:[#allocation11 + $0xa4] sm:$0xf]
    %v4932 = vld [vmem:[#allocation11 + $0xa8] sm:$0xf]
    %v4933 = vld [vmem:[#allocation11 + $0xac] sm:$0xf]
    %v4934 = vld [vmem:[#allocation11 + $0xb0] sm:$0xf]
    %v4935 = vld [vmem:[#allocation11 + $0xb4] sm:$0xf]
    %v4936 = vld [vmem:[#allocation11 + $0xb8] sm:$0xf]
    %v4937 = vld [vmem:[#allocation11 + $0xbc] sm:$0xf]
    %v4938 = vld [vmem:[#allocation13] sm:$0x1]
    %v4940 = vlaneseq
    %v4941 = vshrl.u32 %v4940, 7
    %v4942 = vsub.s32 0, %v4941
    %v4943 = vrot.slane %v4938, %v4942
    %v4993 = vunpack.c.l.b16 %v4890
    %v4994 = vunpack.c.l.b16 %v4891
    %v4995 = vunpack.c.l.b16 %v4892
    %v4996 = vunpack.c.l.b16 %v4893
    %v4997 = vunpack.c.l.b16 %v4894
    %v4998 = vunpack.c.l.b16 %v4895
    %v4999 = vunpack.c.l.b16 %v4896
    %v5000 = vunpack.c.l.b16 %v4897
    %v5001 = vunpack.c.l.b16 %v4898
    %v5002 = vunpack.c.l.b16 %v4899
    %v5003 = vunpack.c.l.b16 %v4900
    %v5004 = vunpack.c.l.b16 %v4901
    %v5005 = vunpack.c.l.b16 %v4902
    %v5006 = vunpack.c.l.b16 %v4903
    %v5007 = vunpack.c.l.b16 %v4904
    %v5008 = vunpack.c.l.b16 %v4905
    %v5009 = vunpack.c.l.b16 %v4906
    %v5010 = vunpack.c.l.b16 %v4907
    %v5011 = vunpack.c.l.b16 %v4908
    %v5012 = vunpack.c.l.b16 %v4909
    %v5013 = vunpack.c.l.b16 %v4910
    %v5014 = vunpack.c.l.b16 %v4911
    %v5015 = vunpack.c.l.b16 %v4912
    %v5016 = vunpack.c.l.b16 %v4913
    %v5017 = vunpack.c.l.b16 %v4914
    %v5018 = vunpack.c.l.b16 %v4915
    %v5019 = vunpack.c.l.b16 %v4916
    %v5020 = vunpack.c.l.b16 %v4917
    %v5021 = vunpack.c.l.b16 %v4918
    %v5022 = vunpack.c.l.b16 %v4919
    %v5023 = vunpack.c.l.b16 %v4920
    %v5024 = vunpack.c.l.b16 %v4921
    %v5025 = vunpack.c.l.b16 %v4922
    %v5026 = vunpack.c.l.b16 %v4923
    %v5027 = vunpack.c.l.b16 %v4924
    %v5028 = vunpack.c.l.b16 %v4925
    %v5029 = vunpack.c.l.b16 %v4926
    %v5030 = vunpack.c.l.b16 %v4927
    %v5031 = vunpack.c.l.b16 %v4928
    %v5032 = vunpack.c.l.b16 %v4929
    %v5033 = vunpack.c.l.b16 %v4930
    %v5034 = vunpack.c.l.b16 %v4931
    %v5035 = vunpack.c.l.b16 %v4932
    %v5036 = vunpack.c.l.b16 %v4933
    %v5037 = vunpack.c.l.b16 %v4934
    %v5038 = vunpack.c.l.b16 %v4935
    %v5039 = vunpack.c.l.b16 %v4936
    %v5040 = vunpack.c.l.b16 %v4937
    %v5041 = vpack.c.b16 %v4994, %v4993
    %v5042 = vpack.c.b16 %v4996, %v4995
    %v5043 = vpack.c.b16 %v4998, %v4997
    %v5044 = vpack.c.b16 %v5000, %v4999
    %v5045 = vpack.c.b16 %v5002, %v5001
    %v5046 = vpack.c.b16 %v5004, %v5003
    %v5047 = vpack.c.b16 %v5006, %v5005
    %v5048 = vpack.c.b16 %v5008, %v5007
    %v5049 = vpack.c.b16 %v5010, %v5009
    %v5050 = vpack.c.b16 %v5012, %v5011
    %v5051 = vpack.c.b16 %v5014, %v5013
    %v5052 = vpack.c.b16 %v5016, %v5015
    %v5053 = vpack.c.b16 %v5018, %v5017
    %v5054 = vpack.c.b16 %v5020, %v5019
    %v5055 = vpack.c.b16 %v5022, %v5021
    %v5056 = vpack.c.b16 %v5024, %v5023
    %v5057 = vpack.c.b16 %v5026, %v5025
    %v5058 = vpack.c.b16 %v5028, %v5027
    %v5059 = vpack.c.b16 %v5030, %v5029
    %v5060 = vpack.c.b16 %v5032, %v5031
    %v5061 = vpack.c.b16 %v5034, %v5033
    %v5062 = vpack.c.b16 %v5036, %v5035
    %v5063 = vpack.c.b16 %v5038, %v5037
    %v5064 = vpack.c.b16 %v5040, %v5039
    %5089 = vmatprep.subr.bf16.mxu0 0
    %5090 = vmatpush1.bf16.msra.mxu0 %v5041
    %5091 = vmatprep.subr.bf16.mxu0 0
    %5092 = vmatpush1.bf16.msra.mxu0 %v5042
    %5093 = vmatprep.subr.bf16.mxu0 0
    %5094 = vmatpush1.bf16.msra.mxu0 %v5043
    %5095 = vmatprep.subr.bf16.mxu0 0
    %5096 = vmatpush1.bf16.msra.mxu0 %v5044
    %5097 = vmatprep.subr.bf16.mxu0 0
    %5098 = vmatpush1.bf16.msra.mxu0 %v5045
    %5099 = vmatprep.subr.bf16.mxu0 0
    %5100 = vmatpush1.bf16.msra.mxu0 %v5046
    %5101 = vmatprep.subr.bf16.mxu0 0
    %5102 = vmatpush1.bf16.msra.mxu0 %v5047
    %5103 = vmatprep.subr.bf16.mxu0 0
    %5104 = vmatpush1.bf16.msra.mxu0 %v5048
    %5105 = vmatprep.subr.bf16.mxu0 0
    %5106 = vmatpush1.bf16.msra.mxu0 %v5049
    %5107 = vmatprep.subr.bf16.mxu0 0
    %5108 = vmatpush1.bf16.msra.mxu0 %v5050
    %5109 = vmatprep.subr.bf16.mxu0 0
    %5110 = vmatpush1.bf16.msra.mxu0 %v5051
    %5111 = vmatprep.subr.bf16.mxu0 0
    %5112 = vmatpush1.bf16.msra.mxu0 %v5052
    %5113 = vmatprep.subr.bf16.mxu0 0
    %5114 = vmatpush1.bf16.msra.mxu0 %v5053
    %5115 = vmatprep.subr.bf16.mxu0 0
    %5116 = vmatpush1.bf16.msra.mxu0 %v5054
    %5117 = vmatprep.subr.bf16.mxu0 0
    %5118 = vmatpush1.bf16.msra.mxu0 %v5055
    %5119 = vmatprep.subr.bf16.mxu0 0
    %5120 = vmatpush1.bf16.msra.mxu0 %v5056
    %5121 = vmatprep.mubr.bf16.mxu0 %v4888
    %5122 = vmatmul.mubr.bf16.gmra.mrb[0].mxu0 %v4887
    %v5123 = vpop.f32.mrb[0].mxu0
    %v5124 = vadd.f32 %v4943, %v5123
    %v5125 = vpop.f32.mrb[0].mxu0
    %v5126 = vpop.f32.mrb[0].mxu0
    %v5127 = vadd.f32 %v4943, %v5126
    %v5128 = vpop.f32.mrb[0].mxu0
    %5129 = vdwg.mxu0
    %5130 = vmatprep.subr.bf16.mxu0 0
    %5131 = vmatpush1.bf16.msra.mxu0 %v5057
    %5132 = vmatprep.subr.bf16.mxu0 0
    %5133 = vmatpush1.bf16.msra.mxu0 %v5058
    %5134 = vmatprep.subr.bf16.mxu0 0
    %5135 = vmatpush1.bf16.msra.mxu0 %v5059
    %5136 = vmatprep.subr.bf16.mxu0 0
    %5137 = vmatpush1.bf16.msra.mxu0 %v5060
    %5138 = vmatprep.subr.bf16.mxu0 0
    %5139 = vmatpush1.bf16.msra.mxu0 %v5061
    %5140 = vmatprep.subr.bf16.mxu0 0
    %5141 = vmatpush1.bf16.msra.mxu0 %v5062
    %5142 = vmatprep.subr.bf16.mxu0 0
    %5143 = vmatpush1.bf16.msra.mxu0 %v5063
    %5144 = vmatprep.subr.bf16.mxu0 0
    %5145 = vmatpush1.bf16.msra.mxu0 %v5064
    %5146 = vmatprep.subr.bf16.mxu0 0
    %5147 = vmatpush1.bf16.msra.mxu0 0
    %5148 = vmatprep.subr.bf16.mxu0 0
    %5149 = vmatpush1.bf16.msra.mxu0 0
    %5150 = vmatprep.subr.bf16.mxu0 0
    %5151 = vmatpush1.bf16.msra.mxu0 0
    %5152 = vmatprep.subr.bf16.mxu0 0
    %5153 = vmatpush1.bf16.msra.mxu0 0
    %5154 = vmatprep.subr.bf16.mxu0 0
    %5155 = vmatpush1.bf16.msra.mxu0 0
    %5156 = vmatprep.subr.bf16.mxu0 0
    %5157 = vmatpush1.bf16.msra.mxu0 0
    %5158 = vmatprep.subr.bf16.mxu0 0
    %5159 = vmatpush1.bf16.msra.mxu0 0
    %5160 = vmatprep.subr.bf16.mxu0 0
    %5161 = vmatpush1.bf16.msra.mxu0 0
    %5162 = vmatprep.mubr.bf16.mxu0 0
    %5163 = vmatmul.mubr.bf16.gmra.mrb[0].mxu0 %v4889
    %v5164 = vpop.f32.mrb[0].mxu0
    %v5165 = vadd.f32 %v5124, %v5164
    %v5166 = vpop.f32.mrb[0].mxu0
    %v5167 = vpop.f32.mrb[0].mxu0
    %v5168 = vadd.f32 %v5127, %v5167
    %v5169 = vpop.f32.mrb[0].mxu0
    %5170 = vdwg.mxu0
    %5171 = vst [vmem:[#allocation14] sm:$0xff] %v5165
    %5172 = vst [vmem:[#allocation14 + $0x8] sm:$0xff] %v5168
    // Predicated region
    $region58: #{tpu_custom_call.1} parent=1 // pred_check
      _
    $region59: #{tpu_custom_call.1} parent=1 // pred_check_branch
      %5174 = sbr.rel (0) target = $region61
    $region60: #{tpu_custom_call.1} parent=1 // pred_region
      %s5176 = ssub.s32 256, 256
      %5177 = vsyncadd [#allocation4], %s5176
      %s5178 = sshll.u32 [#allocation14], 4
      %s5179 = int_to_ptr.vmem [resolvable:$true] %s5178
      %5184 = dma.vmem_to_hbm [thread:$0]  %s5179, 256, %s7, [#allocation4], 128, 128, 8
    $region61: #{tpu_custom_call.1} parent=1 // pred_fallthru
      _
    // Predicated region
    $region62: #{tpu_custom_call.1} parent=1 // pred_check
      _
    $region63: #{tpu_custom_call.1} parent=1 // pred_check_branch
      %5186 = sbr.rel (0) target = $region65
    $region64: #{tpu_custom_call.1} parent=1 // pred_region
      %5187 = dma.done [#allocation4], 256
    $region65: #{tpu_custom_call.1} parent=1 // pred_fallthru
      _
    %5188 = vsyncpa [#allocation3], 1
    %5189 = vsyncpa [#allocation6], 1
    %5190 = vsyncpa [#allocation9], 1
    %5191 = vsyncpa [#allocation12], 1
    %5192 = vsyncpa [#allocation4], 1

</llo_original>
